<compile_context>
chip_gen: v6e
topology: v6e:2x2x1
jax: 0.10.0
libtpu: 0.0.40
codegen_flags: <defaults>
</compile_context>

<pallas_src>
import jax
import jax.numpy as jnp
from jax.experimental import pallas as pl
from jax.experimental.pallas import tpu as pltpu

# Small, self-consistent shapes (module defaults were v=|vocab|, e=300, h=50, c=4, b=128).
V_SIZE = 50      # vocabulary size
E_SIZE = 64      # embedding size
H_SIZE = 32      # LSTM hidden size  (8H = 256 packed gate lanes)
C_SIZE = 4       # number of classes
B_SIZE = 4       # batch size
MAX_LEN = 8      # sequence length

PAD_B = 8        # sublane-pad batch 4 -> 8
PAD_C = 128      # lane-pad classes 4 -> 128 (lane-dense output store)


# ---------------------------------------------------------------------------
# Fused Pallas kernel: embedding gather + 2-layer biLSTM + Linear
# ---------------------------------------------------------------------------
def _fused_lstm_kernel(ids_ref, emb_ref,
                       w0_ih_ref, w1_ih_ref, w0_hh_ref, w1_hh_ref,
                       b0_ref, b1_ref, wout_ref, bout_ref,
                       out_ref,
                       x_sc, gx_sc, y_sc, hfin_sc):
    n_b, t_len = ids_ref.shape                    # real batch, seq length
    bp = out_ref.shape[0] // 4                    # padded batch (sublane tile)
    h8 = gx_sc.shape[1]
    h = h8 // 8
    h2, h4, h6 = 2 * h, 4 * h, 6 * h

    # ---- in-kernel embedding lookup -> time-major, batch-padded x ----------
    x_sc[...] = jnp.zeros_like(x_sc)              # zero the padded batch rows
    for t in range(t_len):
        for b in range(n_b):
            row = t * bp + b
            x_sc[row:row + 1, :] = emb_ref[pl.ds(ids_ref[b, t], 1), :]

    # ---- hoisted lane masks for the packed gate layout ---------------------
    # columns: [i_f i_b | f_f f_b | g_f g_b | o_f o_b], each block H lanes wide.
    lane = jax.lax.broadcasted_iota(jnp.int32, (bp, h8), 1)
    g_cols = (lane >= h4) & (lane < h6)                       # tanh ('g') gate lanes
    fwd_cols = (lane % h2) < h                                # forward-direction lanes
    pre_scale = jnp.where(g_cols, 2.0, 1.0).astype(jnp.float32)   # tanh(x)=2*sig(2x)-1
    post_add = jnp.where(g_cols, -1.0, 0.0).astype(jnp.float32)

    def run_layer(w_hh_ref, layer_idx, store_y):
        """Interleaved fwd+bwd recurrence; gx_sc holds the hoisted input gates."""
        w_hh = w_hh_ref[...]                                  # (2H, 8H) bf16, hoisted
        hh = jnp.zeros((bp, h2), jnp.float32)                 # [h_fwd | h_bwd]
        cc = jnp.zeros((bp, h2), jnp.float32)                 # [c_fwd | c_bwd]
        for s in range(t_len):                                # static unroll (T small)
            row_f = s * bp                                    # fwd chain: time s
            row_b = (t_len - 1 - s) * bp                      # bwd chain: time T-1-s
            rec = jnp.dot(hh.astype(jnp.bfloat16), w_hh,
                          preferred_element_type=jnp.float32)  # (bp, 8H)
            gx = jnp.where(fwd_cols,
                           gx_sc[row_f:row_f + bp, :],
                           gx_sc[row_b:row_b + bp, :])
            g = rec + gx
            a = jax.nn.sigmoid(g * pre_scale)                 # single EUP pass
            act = a * pre_scale + post_add                    # VPU fixup on g lanes
            i_g = act[:, 0:h2]
            f_g = act[:, h2:h4]
            g_g = act[:, h4:h6]
            o_g = act[:, h6:h8]
            cc = f_g * cc + i_g * g_g
            hh = o_g * jnp.tanh(cc)
            if store_y:                                       # layer-0 outputs feed layer 1
                y_sc[row_f:row_f + bp, 0:h] = hh[:, 0:h]      # y_fwd(t=s)
                y_sc[row_b:row_b + bp, h:h2] = hh[:, h:h2]    # y_bwd(t=T-1-s)
        # final hidden states straight into the h_n scratch (PyTorch order).
        hfin_sc[2 * layer_idx * bp:(2 * layer_idx + 1) * bp, :] = hh[:, 0:h]
        hfin_sc[(2 * layer_idx + 1) * bp:(2 * layer_idx + 2) * bp, :] = hh[:, h:h2]

    # ---- layer 0: one hoisted input projection + fused fwd/bwd recurrence --
    gx_sc[...] = jnp.dot(x_sc[...].astype(jnp.bfloat16), w0_ih_ref[...],
                         preferred_element_type=jnp.float32) + b0_ref[...]
    run_layer(w0_hh_ref, 0, True)

    # ---- layer 1 ------------------------------------------------------------
    gx_sc[...] = jnp.dot(y_sc[...].astype(jnp.bfloat16), w1_ih_ref[...],
                         preferred_element_type=jnp.float32) + b1_ref[...]
    run_layer(w1_hh_ref, 1, False)

    # ---- fused output Linear on the 4 final hidden states -------------------
    out_ref[...] = jnp.dot(hfin_sc[...].astype(jnp.bfloat16), wout_ref[...],
                           preferred_element_type=jnp.float32) + bout_ref[...]


# ---------------------------------------------------------------------------
# One-time weight packing (kept OUT of the per-call path)
# ---------------------------------------------------------------------------
def pack_params(emb, lstm_params, w_out, b_out):
    H = H_SIZE

    def interleave_cols(wf, wb):
        # PyTorch gate order [i, f, g, o] -> [i_f i_b f_f f_b g_f g_b o_f o_b]
        cols = []
        for k in range(4):
            cols.append(wf[..., k * H:(k + 1) * H])
            cols.append(wb[..., k * H:(k + 1) * H])
        return jnp.concatenate(cols, axis=-1)

    def block_diag_hh(wf, wb):
        # rows [0,H) = h_fwd -> fwd gate columns; rows [H,2H) = h_bwd -> bwd columns.
        z = jnp.zeros((H, H), jnp.float32)
        top = jnp.concatenate(
            [c for k in range(4) for c in (wf[:, k * H:(k + 1) * H], z)], axis=1)
        bot = jnp.concatenate(
            [c for k in range(4) for c in (z, wb[:, k * H:(k + 1) * H])], axis=1)
        return jnp.concatenate([top, bot], axis=0)            # (2H, 8H)

    (w0f_ih, w0f_hh, b0f), (w0b_ih, w0b_hh, b0b) = lstm_params[0]
    (w1f_ih, w1f_hh, b1f), (w1b_ih, w1b_hh, b1b) = lstm_params[1]

    w0_ih = interleave_cols(w0f_ih, w0b_ih).astype(jnp.bfloat16)   # (E, 8H)
    w1_ih = interleave_cols(w1f_ih, w1b_ih).astype(jnp.bfloat16)   # (2H, 8H)
    w0_hh = block_diag_hh(w0f_hh, w0b_hh).astype(jnp.bfloat16)     # (2H, 8H)
    w1_hh = block_diag_hh(w1f_hh, w1b_hh).astype(jnp.bfloat16)     # (2H, 8H)
    b0 = interleave_cols(b0f, b0b)                                  # (1, 8H) f32
    b1 = interleave_cols(b1f, b1b)                                  # (1, 8H) f32

    w_out_p = jnp.pad(w_out, ((0, 0), (0, PAD_C - w_out.shape[1]))).astype(jnp.bfloat16)
    b_out_p = jnp.pad(b_out, ((0, 0), (0, PAD_C - b_out.shape[1])))

    return (emb.astype(jnp.float32), w0_ih, w1_ih, w0_hh, w1_hh, b0, b1,
            w_out_p, b_out_p)


# ---------------------------------------------------------------------------
# Forward wrapper: single pallas_call, no XLA glue on the input side
# ---------------------------------------------------------------------------
def lstm_classifier_forward(token_ids, packed):
    (emb, w0_ih, w1_ih, w0_hh, w1_hh, b0, b1, w_out_p, b_out_p) = packed
    B, T = token_ids.shape
    E = emb.shape[1]
    H = w0_hh.shape[0] // 2
    Bp, Cp, C = PAD_B, PAD_C, C_SIZE

    def full(shape):
        nd = len(shape)
        return pl.BlockSpec(shape, lambda *_: (0,) * nd)

    grid_spec = pltpu.PrefetchScalarGridSpec(
        num_scalar_prefetch=1,                    # token ids -> SMEM
        grid=(1,),                                # single sequential program
        in_specs=[full(emb.shape),
                  full(w0_ih.shape), full(w1_ih.shape),
                  full(w0_hh.shape), full(w1_hh.shape),
                  full(b0.shape), full(b1.shape),
                  full(w_out_p.shape), full(b_out_p.shape)],
        out_specs=full((4 * Bp, Cp)),
        scratch_shapes=[pltpu.VMEM((T * Bp, E), jnp.float32),       # gathered x
                        pltpu.VMEM((T * Bp, 8 * H), jnp.float32),   # hoisted gates
                        pltpu.VMEM((T * Bp, 2 * H), jnp.float32),   # layer-0 outputs
                        pltpu.VMEM((4 * Bp, H), jnp.float32)])      # final h_n

    out = pl.pallas_call(
        _fused_lstm_kernel,
        out_shape=jax.ShapeDtypeStruct((4 * Bp, Cp), jnp.float32),
        grid_spec=grid_spec,
        compiler_params=pltpu.CompilerParams(
            dimension_semantics=("arbitrary",)),
        # NOTE(v7x): with a real batch >= 2 sublane tiles, make batch a leading
        # "parallel" grid axis to use the second TensorCore; at Bp=8 it is moot.
    )(token_ids.astype(jnp.int32), emb, w0_ih, w1_ih, w0_hh, w1_hh, b0, b1,
      w_out_p, b_out_p)

    # Drop batch/class padding; keep PyTorch h_n.view(-1, h_size) ordering.
    out = out.reshape(4, Bp, Cp)[:, :B, :C]
    return out.reshape(4 * B, C)


# ---------------------------------------------------------------------------
# Pure-JAX reference (f32, lax.scan) for a correctness check
# ---------------------------------------------------------------------------
def _ref_direction(x_tbi, w_ih, w_hh, b, H):
    B = x_tbi.shape[1]

    def step(carry, x_t):
        h, c = carry
        gates = x_t @ w_ih + h @ w_hh + b[0]
        i_g = jax.nn.sigmoid(gates[:, 0:H])
        f_g = jax.nn.sigmoid(gates[:, H:2 * H])
        g_g = jnp.tanh(gates[:, 2 * H:3 * H])
        o_g = jax.nn.sigmoid(gates[:, 3 * H:4 * H])
        c = f_g * c + i_g * g_g
        h = o_g * jnp.tanh(c)
        return (h, c), h

    (hN, _), ys = jax.lax.scan(step, (jnp.zeros((B, H), jnp.float32),
                                      jnp.zeros((B, H), jnp.float32)), x_tbi)
    return ys, hN


def reference_forward(token_ids, emb, lstm_params, w_out, b_out):
    x = jnp.transpose(jnp.take(emb, token_ids, axis=0), (1, 0, 2))
    h_finals = []
    layer_in = x
    for l in range(2):
        dir_outs = []
        for d in range(2):
            w_ih, w_hh, b = lstm_params[l][d]
            xin = layer_in if d == 0 else layer_in[::-1]
            y, h_n = _ref_direction(xin, w_ih, w_hh, b, H_SIZE)
            if d == 1:
                y = y[::-1]
            dir_outs.append(y)
            h_finals.append(h_n)
        layer_in = jnp.concatenate(dir_outs, axis=-1)
    h_n_all = jnp.stack(h_finals, axis=0)
    return h_n_all.reshape(-1, H_SIZE) @ w_out + b_out[0]


# ---------------------------------------------------------------------------
# Deterministic synthetic parameters
# ---------------------------------------------------------------------------
def init_params(key):
    keys = jax.random.split(key, 20)
    ki = iter(keys)
    scale = 1.0 / (H_SIZE ** 0.5)

    emb = 0.1 * jax.random.normal(next(ki), (V_SIZE, E_SIZE), jnp.float32)
    emb = emb.at[0].set(0.0)                      # padding_idx = 0

    lstm_params = []
    for l in range(2):
        in_dim = E_SIZE if l == 0 else 2 * H_SIZE
        dirs = []
        for d in range(2):
            w_ih = jax.random.uniform(next(ki), (in_dim, 4 * H_SIZE), jnp.float32,
                                      -scale, scale)
            w_hh = jax.random.uniform(next(ki), (H_SIZE, 4 * H_SIZE), jnp.float32,
                                      -scale, scale)
            b_ih = jax.random.uniform(next(ki), (4 * H_SIZE,), jnp.float32, -scale, scale)
            b_hh = jax.random.uniform(next(ki), (4 * H_SIZE,), jnp.float32, -scale, scale)
            dirs.append((w_ih, w_hh, (b_ih + b_hh).reshape(1, 4 * H_SIZE)))
        lstm_params.append(dirs)

    w_out = jax.random.uniform(next(ki), (H_SIZE, C_SIZE), jnp.float32, -scale, scale)
    b_out = jax.random.uniform(next(ki), (1, C_SIZE), jnp.float32, -scale, scale)
    return emb, lstm_params, w_out, b_out


if __name__ == "__main__":
    key = jax.random.PRNGKey(0)
    k_param, k_ids = jax.random.split(key)
    emb, lstm_params, w_out, b_out = init_params(k_param)
    token_ids = jax.random.randint(k_ids, (B_SIZE, MAX_LEN), 0, V_SIZE, dtype=jnp.int32)

    packed = pack_params(emb, lstm_params, w_out, b_out)   # one-time weight packing

    forward = jax.jit(lstm_classifier_forward)
    out = jax.block_until_ready(forward(token_ids, packed))
    assert out.shape == (4 * B_SIZE, C_SIZE), out.shape

    ref = jax.block_until_ready(
        reference_forward(token_ids, emb, lstm_params, w_out, b_out))
    max_err = float(jnp.max(jnp.abs(out - ref)))
    # Kernel uses bf16 MXU operands (weights + hidden states), reference is all-f32,
    # so allow a bf16-sized tolerance; structural bugs would be orders larger.
    assert max_err < 5e-2, f"mismatch vs reference: {max_err}"

    print("KERNEL_OK")
</pallas_src>

<mosaic_0001>
module attributes {stable_mosaic.version = 11 : i64} {
  func.func @_fused_lstm_kernel(%arg0: i32, %arg1: memref<4x8xi32, #tpu.memory_space<smem>>, %arg2: memref<50x64xf32, #tpu.memory_space<vmem>>, %arg3: memref<64x256xbf16, #tpu.memory_space<vmem>>, %arg4: memref<64x256xbf16, #tpu.memory_space<vmem>>, %arg5: memref<64x256xbf16, #tpu.memory_space<vmem>>, %arg6: memref<64x256xbf16, #tpu.memory_space<vmem>>, %arg7: memref<1x256xf32, #tpu.memory_space<vmem>>, %arg8: memref<1x256xf32, #tpu.memory_space<vmem>>, %arg9: memref<32x128xbf16, #tpu.memory_space<vmem>>, %arg10: memref<1x128xf32, #tpu.memory_space<vmem>>, %arg11: memref<32x128xf32, #tpu.memory_space<vmem>>, %arg12: memref<64x64xf32, #tpu.memory_space<vmem>>, %arg13: memref<64x256xf32, #tpu.memory_space<vmem>>, %arg14: memref<64x64xf32, #tpu.memory_space<vmem>>, %arg15: memref<32x32xf32, #tpu.memory_space<vmem>>) attributes {dimension_semantics = [#tpu.dimension_semantics<arbitrary>], iteration_bounds = array<i64: 1>, scalar_prefetch = 1 : i64, scratch_operands = 4 : i64, tpu.core_type = #tpu.core_type<tc>, window_params = [{pipeline_mode = #tpu.pipeline_mode<synchronous>, transform_indices = @transform_0, window_bounds = array<i64: 50, 64>}, {pipeline_mode = #tpu.pipeline_mode<synchronous>, transform_indices = @transform_1, window_bounds = array<i64: 64, 256>}, {pipeline_mode = #tpu.pipeline_mode<synchronous>, transform_indices = @transform_2, window_bounds = array<i64: 64, 256>}, {pipeline_mode = #tpu.pipeline_mode<synchronous>, transform_indices = @transform_3, window_bounds = array<i64: 64, 256>}, {pipeline_mode = #tpu.pipeline_mode<synchronous>, transform_indices = @transform_4, window_bounds = array<i64: 64, 256>}, {pipeline_mode = #tpu.pipeline_mode<synchronous>, transform_indices = @transform_5, window_bounds = array<i64: 1, 256>}, {pipeline_mode = #tpu.pipeline_mode<synchronous>, transform_indices = @transform_6, window_bounds = array<i64: 1, 256>}, {pipeline_mode = #tpu.pipeline_mode<synchronous>, transform_indices = @transform_7, window_bounds = array<i64: 32, 128>}, {pipeline_mode = #tpu.pipeline_mode<synchronous>, transform_indices = @transform_8, window_bounds = array<i64: 1, 128>}, {pipeline_mode = #tpu.pipeline_mode<synchronous>, transform_indices = @transform_9, window_bounds = array<i64: 32, 128>}]} {
    %cst = arith.constant 0.000000e+00 : f32
    %0 = vector.broadcast %cst : f32 to vector<64x64xf32>
    %c0 = arith.constant 0 : index
    %c0_0 = arith.constant 0 : index
    %1 = vector.load %arg12[%c0, %c0_0] : memref<64x64xf32, #tpu.memory_space<vmem>>, vector<64x64xf32>
    tpu.vector_store %arg12[%c0, %c0_0], %0 {strides = array<i32>} : memref<64x64xf32, #tpu.memory_space<vmem>>, vector<64x64xf32>,
    %c0_1 = arith.constant 0 : index
    %c0_2 = arith.constant 0 : index
    %2 = memref.load %arg1[%c0_1, %c0_2] : memref<4x8xi32, #tpu.memory_space<smem>>
    %3 = arith.index_cast %2 : i32 to index
    %c0_3 = arith.constant 0 : index
    %4 = vector.load %arg2[%3, %c0_3] : memref<50x64xf32, #tpu.memory_space<vmem>>, vector<1x64xf32>
    %c0_4 = arith.constant 0 : index
    %c0_5 = arith.constant 0 : index
    %5 = vector.load %arg12[%c0_4, %c0_5] : memref<64x64xf32, #tpu.memory_space<vmem>>, vector<1x64xf32>
    tpu.vector_store %arg12[%c0_4, %c0_5], %4 {strides = array<i32>} : memref<64x64xf32, #tpu.memory_space<vmem>>, vector<1x64xf32>,
    %c1 = arith.constant 1 : index
    %c0_6 = arith.constant 0 : index
    %6 = memref.load %arg1[%c1, %c0_6] : memref<4x8xi32, #tpu.memory_space<smem>>
    %7 = arith.index_cast %6 : i32 to index
    %c0_7 = arith.constant 0 : index
    %8 = vector.load %arg2[%7, %c0_7] : memref<50x64xf32, #tpu.memory_space<vmem>>, vector<1x64xf32>
    %c1_8 = arith.constant 1 : index
    %c0_9 = arith.constant 0 : index
    %9 = vector.load %arg12[%c1_8, %c0_9] : memref<64x64xf32, #tpu.memory_space<vmem>>, vector<1x64xf32>
    tpu.vector_store %arg12[%c1_8, %c0_9], %8 {strides = array<i32>} : memref<64x64xf32, #tpu.memory_space<vmem>>, vector<1x64xf32>,
    %c2 = arith.constant 2 : index
    %c0_10 = arith.constant 0 : index
    %10 = memref.load %arg1[%c2, %c0_10] : memref<4x8xi32, #tpu.memory_space<smem>>
    %11 = arith.index_cast %10 : i32 to index
    %c0_11 = arith.constant 0 : index
    %12 = vector.load %arg2[%11, %c0_11] : memref<50x64xf32, #tpu.memory_space<vmem>>, vector<1x64xf32>
    %c2_12 = arith.constant 2 : index
    %c0_13 = arith.constant 0 : index
    %13 = vector.load %arg12[%c2_12, %c0_13] : memref<64x64xf32, #tpu.memory_space<vmem>>, vector<1x64xf32>
    tpu.vector_store %arg12[%c2_12, %c0_13], %12 {strides = array<i32>} : memref<64x64xf32, #tpu.memory_space<vmem>>, vector<1x64xf32>,
    %c3 = arith.constant 3 : index
    %c0_14 = arith.constant 0 : index
    %14 = memref.load %arg1[%c3, %c0_14] : memref<4x8xi32, #tpu.memory_space<smem>>
    %15 = arith.index_cast %14 : i32 to index
    %c0_15 = arith.constant 0 : index
    %16 = vector.load %arg2[%15, %c0_15] : memref<50x64xf32, #tpu.memory_space<vmem>>, vector<1x64xf32>
    %c3_16 = arith.constant 3 : index
    %c0_17 = arith.constant 0 : index
    %17 = vector.load %arg12[%c3_16, %c0_17] : memref<64x64xf32, #tpu.memory_space<vmem>>, vector<1x64xf32>
    tpu.vector_store %arg12[%c3_16, %c0_17], %16 {strides = array<i32>} : memref<64x64xf32, #tpu.memory_space<vmem>>, vector<1x64xf32>,
    %c0_18 = arith.constant 0 : index
    %c1_19 = arith.constant 1 : index
    %18 = memref.load %arg1[%c0_18, %c1_19] : memref<4x8xi32, #tpu.memory_space<smem>>
    %19 = arith.index_cast %18 : i32 to index
    %c0_20 = arith.constant 0 : index
    %20 = vector.load %arg2[%19, %c0_20] : memref<50x64xf32, #tpu.memory_space<vmem>>, vector<1x64xf32>
    %c8 = arith.constant 8 : index
    %c0_21 = arith.constant 0 : index
    %21 = vector.load %arg12[%c8, %c0_21] : memref<64x64xf32, #tpu.memory_space<vmem>>, vector<1x64xf32>
    tpu.vector_store %arg12[%c8, %c0_21], %20 {strides = array<i32>} : memref<64x64xf32, #tpu.memory_space<vmem>>, vector<1x64xf32>,
    %c1_22 = arith.constant 1 : index
    %c1_23 = arith.constant 1 : index
    %22 = memref.load %arg1[%c1_22, %c1_23] : memref<4x8xi32, #tpu.memory_space<smem>>
    %23 = arith.index_cast %22 : i32 to index
    %c0_24 = arith.constant 0 : index
    %24 = vector.load %arg2[%23, %c0_24] : memref<50x64xf32, #tpu.memory_space<vmem>>, vector<1x64xf32>
    %c9 = arith.constant 9 : index
    %c0_25 = arith.constant 0 : index
    %25 = vector.load %arg12[%c9, %c0_25] : memref<64x64xf32, #tpu.memory_space<vmem>>, vector<1x64xf32>
    tpu.vector_store %arg12[%c9, %c0_25], %24 {strides = array<i32>} : memref<64x64xf32, #tpu.memory_space<vmem>>, vector<1x64xf32>,
    %c2_26 = arith.constant 2 : index
    %c1_27 = arith.constant 1 : index
    %26 = memref.load %arg1[%c2_26, %c1_27] : memref<4x8xi32, #tpu.memory_space<smem>>
    %27 = arith.index_cast %26 : i32 to index
    %c0_28 = arith.constant 0 : index
    %28 = vector.load %arg2[%27, %c0_28] : memref<50x64xf32, #tpu.memory_space<vmem>>, vector<1x64xf32>
    %c10 = arith.constant 10 : index
    %c0_29 = arith.constant 0 : index
    %29 = vector.load %arg12[%c10, %c0_29] : memref<64x64xf32, #tpu.memory_space<vmem>>, vector<1x64xf32>
    tpu.vector_store %arg12[%c10, %c0_29], %28 {strides = array<i32>} : memref<64x64xf32, #tpu.memory_space<vmem>>, vector<1x64xf32>,
    %c3_30 = arith.constant 3 : index
    %c1_31 = arith.constant 1 : index
    %30 = memref.load %arg1[%c3_30, %c1_31] : memref<4x8xi32, #tpu.memory_space<smem>>
    %31 = arith.index_cast %30 : i32 to index
    %c0_32 = arith.constant 0 : index
    %32 = vector.load %arg2[%31, %c0_32] : memref<50x64xf32, #tpu.memory_space<vmem>>, vector<1x64xf32>
    %c11 = arith.constant 11 : index
    %c0_33 = arith.constant 0 : index
    %33 = vector.load %arg12[%c11, %c0_33] : memref<64x64xf32, #tpu.memory_space<vmem>>, vector<1x64xf32>
    tpu.vector_store %arg12[%c11, %c0_33], %32 {strides = array<i32>} : memref<64x64xf32, #tpu.memory_space<vmem>>, vector<1x64xf32>,
    %c0_34 = arith.constant 0 : index
    %c2_35 = arith.constant 2 : index
    %34 = memref.load %arg1[%c0_34, %c2_35] : memref<4x8xi32, #tpu.memory_space<smem>>
    %35 = arith.index_cast %34 : i32 to index
    %c0_36 = arith.constant 0 : index
    %36 = vector.load %arg2[%35, %c0_36] : memref<50x64xf32, #tpu.memory_space<vmem>>, vector<1x64xf32>
    %c16 = arith.constant 16 : index
    %c0_37 = arith.constant 0 : index
    %37 = vector.load %arg12[%c16, %c0_37] : memref<64x64xf32, #tpu.memory_space<vmem>>, vector<1x64xf32>
    tpu.vector_store %arg12[%c16, %c0_37], %36 {strides = array<i32>} : memref<64x64xf32, #tpu.memory_space<vmem>>, vector<1x64xf32>,
    %c1_38 = arith.constant 1 : index
    %c2_39 = arith.constant 2 : index
    %38 = memref.load %arg1[%c1_38, %c2_39] : memref<4x8xi32, #tpu.memory_space<smem>>
    %39 = arith.index_cast %38 : i32 to index
    %c0_40 = arith.constant 0 : index
    %40 = vector.load %arg2[%39, %c0_40] : memref<50x64xf32, #tpu.memory_space<vmem>>, vector<1x64xf32>
    %c17 = arith.constant 17 : index
    %c0_41 = arith.constant 0 : index
    %41 = vector.load %arg12[%c17, %c0_41] : memref<64x64xf32, #tpu.memory_space<vmem>>, vector<1x64xf32>
    tpu.vector_store %arg12[%c17, %c0_41], %40 {strides = array<i32>} : memref<64x64xf32, #tpu.memory_space<vmem>>, vector<1x64xf32>,
    %c2_42 = arith.constant 2 : index
    %c2_43 = arith.constant 2 : index
    %42 = memref.load %arg1[%c2_42, %c2_43] : memref<4x8xi32, #tpu.memory_space<smem>>
    %43 = arith.index_cast %42 : i32 to index
    %c0_44 = arith.constant 0 : index
    %44 = vector.load %arg2[%43, %c0_44] : memref<50x64xf32, #tpu.memory_space<vmem>>, vector<1x64xf32>
    %c18 = arith.constant 18 : index
    %c0_45 = arith.constant 0 : index
    %45 = vector.load %arg12[%c18, %c0_45] : memref<64x64xf32, #tpu.memory_space<vmem>>, vector<1x64xf32>
    tpu.vector_store %arg12[%c18, %c0_45], %44 {strides = array<i32>} : memref<64x64xf32, #tpu.memory_space<vmem>>, vector<1x64xf32>,
    %c3_46 = arith.constant 3 : index
    %c2_47 = arith.constant 2 : index
    %46 = memref.load %arg1[%c3_46, %c2_47] : memref<4x8xi32, #tpu.memory_space<smem>>
    %47 = arith.index_cast %46 : i32 to index
    %c0_48 = arith.constant 0 : index
    %48 = vector.load %arg2[%47, %c0_48] : memref<50x64xf32, #tpu.memory_space<vmem>>, vector<1x64xf32>
    %c19 = arith.constant 19 : index
    %c0_49 = arith.constant 0 : index
    %49 = vector.load %arg12[%c19, %c0_49] : memref<64x64xf32, #tpu.memory_space<vmem>>, vector<1x64xf32>
    tpu.vector_store %arg12[%c19, %c0_49], %48 {strides = array<i32>} : memref<64x64xf32, #tpu.memory_space<vmem>>, vector<1x64xf32>,
    %c0_50 = arith.constant 0 : index
    %c3_51 = arith.constant 3 : index
    %50 = memref.load %arg1[%c0_50, %c3_51] : memref<4x8xi32, #tpu.memory_space<smem>>
    %51 = arith.index_cast %50 : i32 to index
    %c0_52 = arith.constant 0 : index
    %52 = vector.load %arg2[%51, %c0_52] : memref<50x64xf32, #tpu.memory_space<vmem>>, vector<1x64xf32>
    %c24 = arith.constant 24 : index
    %c0_53 = arith.constant 0 : index
    %53 = vector.load %arg12[%c24, %c0_53] : memref<64x64xf32, #tpu.memory_space<vmem>>, vector<1x64xf32>
    tpu.vector_store %arg12[%c24, %c0_53], %52 {strides = array<i32>} : memref<64x64xf32, #tpu.memory_space<vmem>>, vector<1x64xf32>,
    %c1_54 = arith.constant 1 : index
    %c3_55 = arith.constant 3 : index
    %54 = memref.load %arg1[%c1_54, %c3_55] : memref<4x8xi32, #tpu.memory_space<smem>>
    %55 = arith.index_cast %54 : i32 to index
    %c0_56 = arith.constant 0 : index
    %56 = vector.load %arg2[%55, %c0_56] : memref<50x64xf32, #tpu.memory_space<vmem>>, vector<1x64xf32>
    %c25 = arith.constant 25 : index
    %c0_57 = arith.constant 0 : index
    %57 = vector.load %arg12[%c25, %c0_57] : memref<64x64xf32, #tpu.memory_space<vmem>>, vector<1x64xf32>
    tpu.vector_store %arg12[%c25, %c0_57], %56 {strides = array<i32>} : memref<64x64xf32, #tpu.memory_space<vmem>>, vector<1x64xf32>,
    %c2_58 = arith.constant 2 : index
    %c3_59 = arith.constant 3 : index
    %58 = memref.load %arg1[%c2_58, %c3_59] : memref<4x8xi32, #tpu.memory_space<smem>>
    %59 = arith.index_cast %58 : i32 to index
    %c0_60 = arith.constant 0 : index
    %60 = vector.load %arg2[%59, %c0_60] : memref<50x64xf32, #tpu.memory_space<vmem>>, vector<1x64xf32>
    %c26 = arith.constant 26 : index
    %c0_61 = arith.constant 0 : index
    %61 = vector.load %arg12[%c26, %c0_61] : memref<64x64xf32, #tpu.memory_space<vmem>>, vector<1x64xf32>
    tpu.vector_store %arg12[%c26, %c0_61], %60 {strides = array<i32>} : memref<64x64xf32, #tpu.memory_space<vmem>>, vector<1x64xf32>,
    %c3_62 = arith.constant 3 : index
    %c3_63 = arith.constant 3 : index
    %62 = memref.load %arg1[%c3_62, %c3_63] : memref<4x8xi32, #tpu.memory_space<smem>>
    %63 = arith.index_cast %62 : i32 to index
    %c0_64 = arith.constant 0 : index
    %64 = vector.load %arg2[%63, %c0_64] : memref<50x64xf32, #tpu.memory_space<vmem>>, vector<1x64xf32>
    %c27 = arith.constant 27 : index
    %c0_65 = arith.constant 0 : index
    %65 = vector.load %arg12[%c27, %c0_65] : memref<64x64xf32, #tpu.memory_space<vmem>>, vector<1x64xf32>
    tpu.vector_store %arg12[%c27, %c0_65], %64 {strides = array<i32>} : memref<64x64xf32, #tpu.memory_space<vmem>>, vector<1x64xf32>,
    %c0_66 = arith.constant 0 : index
    %c4 = arith.constant 4 : index
    %66 = memref.load %arg1[%c0_66, %c4] : memref<4x8xi32, #tpu.memory_space<smem>>
    %67 = arith.index_cast %66 : i32 to index
    %c0_67 = arith.constant 0 : index
    %68 = vector.load %arg2[%67, %c0_67] : memref<50x64xf32, #tpu.memory_space<vmem>>, vector<1x64xf32>
    %c32 = arith.constant 32 : index
    %c0_68 = arith.constant 0 : index
    %69 = vector.load %arg12[%c32, %c0_68] : memref<64x64xf32, #tpu.memory_space<vmem>>, vector<1x64xf32>
    tpu.vector_store %arg12[%c32, %c0_68], %68 {strides = array<i32>} : memref<64x64xf32, #tpu.memory_space<vmem>>, vector<1x64xf32>,
    %c1_69 = arith.constant 1 : index
    %c4_70 = arith.constant 4 : index
    %70 = memref.load %arg1[%c1_69, %c4_70] : memref<4x8xi32, #tpu.memory_space<smem>>
    %71 = arith.index_cast %70 : i32 to index
    %c0_71 = arith.constant 0 : index
    %72 = vector.load %arg2[%71, %c0_71] : memref<50x64xf32, #tpu.memory_space<vmem>>, vector<1x64xf32>
    %c33 = arith.constant 33 : index
    %c0_72 = arith.constant 0 : index
    %73 = vector.load %arg12[%c33, %c0_72] : memref<64x64xf32, #tpu.memory_space<vmem>>, vector<1x64xf32>
    tpu.vector_store %arg12[%c33, %c0_72], %72 {strides = array<i32>} : memref<64x64xf32, #tpu.memory_space<vmem>>, vector<1x64xf32>,
    %c2_73 = arith.constant 2 : index
    %c4_74 = arith.constant 4 : index
    %74 = memref.load %arg1[%c2_73, %c4_74] : memref<4x8xi32, #tpu.memory_space<smem>>
    %75 = arith.index_cast %74 : i32 to index
    %c0_75 = arith.constant 0 : index
    %76 = vector.load %arg2[%75, %c0_75] : memref<50x64xf32, #tpu.memory_space<vmem>>, vector<1x64xf32>
    %c34 = arith.constant 34 : index
    %c0_76 = arith.constant 0 : index
    %77 = vector.load %arg12[%c34, %c0_76] : memref<64x64xf32, #tpu.memory_space<vmem>>, vector<1x64xf32>
    tpu.vector_store %arg12[%c34, %c0_76], %76 {strides = array<i32>} : memref<64x64xf32, #tpu.memory_space<vmem>>, vector<1x64xf32>,
    %c3_77 = arith.constant 3 : index
    %c4_78 = arith.constant 4 : index
    %78 = memref.load %arg1[%c3_77, %c4_78] : memref<4x8xi32, #tpu.memory_space<smem>>
    %79 = arith.index_cast %78 : i32 to index
    %c0_79 = arith.constant 0 : index
    %80 = vector.load %arg2[%79, %c0_79] : memref<50x64xf32, #tpu.memory_space<vmem>>, vector<1x64xf32>
    %c35 = arith.constant 35 : index
    %c0_80 = arith.constant 0 : index
    %81 = vector.load %arg12[%c35, %c0_80] : memref<64x64xf32, #tpu.memory_space<vmem>>, vector<1x64xf32>
    tpu.vector_store %arg12[%c35, %c0_80], %80 {strides = array<i32>} : memref<64x64xf32, #tpu.memory_space<vmem>>, vector<1x64xf32>,
    %c0_81 = arith.constant 0 : index
    %c5 = arith.constant 5 : index
    %82 = memref.load %arg1[%c0_81, %c5] : memref<4x8xi32, #tpu.memory_space<smem>>
    %83 = arith.index_cast %82 : i32 to index
    %c0_82 = arith.constant 0 : index
    %84 = vector.load %arg2[%83, %c0_82] : memref<50x64xf32, #tpu.memory_space<vmem>>, vector<1x64xf32>
    %c40 = arith.constant 40 : index
    %c0_83 = arith.constant 0 : index
    %85 = vector.load %arg12[%c40, %c0_83] : memref<64x64xf32, #tpu.memory_space<vmem>>, vector<1x64xf32>
    tpu.vector_store %arg12[%c40, %c0_83], %84 {strides = array<i32>} : memref<64x64xf32, #tpu.memory_space<vmem>>, vector<1x64xf32>,
    %c1_84 = arith.constant 1 : index
    %c5_85 = arith.constant 5 : index
    %86 = memref.load %arg1[%c1_84, %c5_85] : memref<4x8xi32, #tpu.memory_space<smem>>
    %87 = arith.index_cast %86 : i32 to index
    %c0_86 = arith.constant 0 : index
    %88 = vector.load %arg2[%87, %c0_86] : memref<50x64xf32, #tpu.memory_space<vmem>>, vector<1x64xf32>
    %c41 = arith.constant 41 : index
    %c0_87 = arith.constant 0 : index
    %89 = vector.load %arg12[%c41, %c0_87] : memref<64x64xf32, #tpu.memory_space<vmem>>, vector<1x64xf32>
    tpu.vector_store %arg12[%c41, %c0_87], %88 {strides = array<i32>} : memref<64x64xf32, #tpu.memory_space<vmem>>, vector<1x64xf32>,
    %c2_88 = arith.constant 2 : index
    %c5_89 = arith.constant 5 : index
    %90 = memref.load %arg1[%c2_88, %c5_89] : memref<4x8xi32, #tpu.memory_space<smem>>
    %91 = arith.index_cast %90 : i32 to index
    %c0_90 = arith.constant 0 : index
    %92 = vector.load %arg2[%91, %c0_90] : memref<50x64xf32, #tpu.memory_space<vmem>>, vector<1x64xf32>
    %c42 = arith.constant 42 : index
    %c0_91 = arith.constant 0 : index
    %93 = vector.load %arg12[%c42, %c0_91] : memref<64x64xf32, #tpu.memory_space<vmem>>, vector<1x64xf32>
    tpu.vector_store %arg12[%c42, %c0_91], %92 {strides = array<i32>} : memref<64x64xf32, #tpu.memory_space<vmem>>, vector<1x64xf32>,
    %c3_92 = arith.constant 3 : index
    %c5_93 = arith.constant 5 : index
    %94 = memref.load %arg1[%c3_92, %c5_93] : memref<4x8xi32, #tpu.memory_space<smem>>
    %95 = arith.index_cast %94 : i32 to index
    %c0_94 = arith.constant 0 : index
    %96 = vector.load %arg2[%95, %c0_94] : memref<50x64xf32, #tpu.memory_space<vmem>>, vector<1x64xf32>
    %c43 = arith.constant 43 : index
    %c0_95 = arith.constant 0 : index
    %97 = vector.load %arg12[%c43, %c0_95] : memref<64x64xf32, #tpu.memory_space<vmem>>, vector<1x64xf32>
    tpu.vector_store %arg12[%c43, %c0_95], %96 {strides = array<i32>} : memref<64x64xf32, #tpu.memory_space<vmem>>, vector<1x64xf32>,
    %c0_96 = arith.constant 0 : index
    %c6 = arith.constant 6 : index
    %98 = memref.load %arg1[%c0_96, %c6] : memref<4x8xi32, #tpu.memory_space<smem>>
    %99 = arith.index_cast %98 : i32 to index
    %c0_97 = arith.constant 0 : index
    %100 = vector.load %arg2[%99, %c0_97] : memref<50x64xf32, #tpu.memory_space<vmem>>, vector<1x64xf32>
    %c48 = arith.constant 48 : index
    %c0_98 = arith.constant 0 : index
    %101 = vector.load %arg12[%c48, %c0_98] : memref<64x64xf32, #tpu.memory_space<vmem>>, vector<1x64xf32>
    tpu.vector_store %arg12[%c48, %c0_98], %100 {strides = array<i32>} : memref<64x64xf32, #tpu.memory_space<vmem>>, vector<1x64xf32>,
    %c1_99 = arith.constant 1 : index
    %c6_100 = arith.constant 6 : index
    %102 = memref.load %arg1[%c1_99, %c6_100] : memref<4x8xi32, #tpu.memory_space<smem>>
    %103 = arith.index_cast %102 : i32 to index
    %c0_101 = arith.constant 0 : index
    %104 = vector.load %arg2[%103, %c0_101] : memref<50x64xf32, #tpu.memory_space<vmem>>, vector<1x64xf32>
    %c49 = arith.constant 49 : index
    %c0_102 = arith.constant 0 : index
    %105 = vector.load %arg12[%c49, %c0_102] : memref<64x64xf32, #tpu.memory_space<vmem>>, vector<1x64xf32>
    tpu.vector_store %arg12[%c49, %c0_102], %104 {strides = array<i32>} : memref<64x64xf32, #tpu.memory_space<vmem>>, vector<1x64xf32>,
    %c2_103 = arith.constant 2 : index
    %c6_104 = arith.constant 6 : index
    %106 = memref.load %arg1[%c2_103, %c6_104] : memref<4x8xi32, #tpu.memory_space<smem>>
    %107 = arith.index_cast %106 : i32 to index
    %c0_105 = arith.constant 0 : index
    %108 = vector.load %arg2[%107, %c0_105] : memref<50x64xf32, #tpu.memory_space<vmem>>, vector<1x64xf32>
    %c50 = arith.constant 50 : index
    %c0_106 = arith.constant 0 : index
    %109 = vector.load %arg12[%c50, %c0_106] : memref<64x64xf32, #tpu.memory_space<vmem>>, vector<1x64xf32>
    tpu.vector_store %arg12[%c50, %c0_106], %108 {strides = array<i32>} : memref<64x64xf32, #tpu.memory_space<vmem>>, vector<1x64xf32>,
    %c3_107 = arith.constant 3 : index
    %c6_108 = arith.constant 6 : index
    %110 = memref.load %arg1[%c3_107, %c6_108] : memref<4x8xi32, #tpu.memory_space<smem>>
    %111 = arith.index_cast %110 : i32 to index
    %c0_109 = arith.constant 0 : index
    %112 = vector.load %arg2[%111, %c0_109] : memref<50x64xf32, #tpu.memory_space<vmem>>, vector<1x64xf32>
    %c51 = arith.constant 51 : index
    %c0_110 = arith.constant 0 : index
    %113 = vector.load %arg12[%c51, %c0_110] : memref<64x64xf32, #tpu.memory_space<vmem>>, vector<1x64xf32>
    tpu.vector_store %arg12[%c51, %c0_110], %112 {strides = array<i32>} : memref<64x64xf32, #tpu.memory_space<vmem>>, vector<1x64xf32>,
    %c0_111 = arith.constant 0 : index
    %c7 = arith.constant 7 : index
    %114 = memref.load %arg1[%c0_111, %c7] : memref<4x8xi32, #tpu.memory_space<smem>>
    %115 = arith.index_cast %114 : i32 to index
    %c0_112 = arith.constant 0 : index
    %116 = vector.load %arg2[%115, %c0_112] : memref<50x64xf32, #tpu.memory_space<vmem>>, vector<1x64xf32>
    %c56 = arith.constant 56 : index
    %c0_113 = arith.constant 0 : index
    %117 = vector.load %arg12[%c56, %c0_113] : memref<64x64xf32, #tpu.memory_space<vmem>>, vector<1x64xf32>
    tpu.vector_store %arg12[%c56, %c0_113], %116 {strides = array<i32>} : memref<64x64xf32, #tpu.memory_space<vmem>>, vector<1x64xf32>,
    %c1_114 = arith.constant 1 : index
    %c7_115 = arith.constant 7 : index
    %118 = memref.load %arg1[%c1_114, %c7_115] : memref<4x8xi32, #tpu.memory_space<smem>>
    %119 = arith.index_cast %118 : i32 to index
    %c0_116 = arith.constant 0 : index
    %120 = vector.load %arg2[%119, %c0_116] : memref<50x64xf32, #tpu.memory_space<vmem>>, vector<1x64xf32>
    %c57 = arith.constant 57 : index
    %c0_117 = arith.constant 0 : index
    %121 = vector.load %arg12[%c57, %c0_117] : memref<64x64xf32, #tpu.memory_space<vmem>>, vector<1x64xf32>
    tpu.vector_store %arg12[%c57, %c0_117], %120 {strides = array<i32>} : memref<64x64xf32, #tpu.memory_space<vmem>>, vector<1x64xf32>,
    %c2_118 = arith.constant 2 : index
    %c7_119 = arith.constant 7 : index
    %122 = memref.load %arg1[%c2_118, %c7_119] : memref<4x8xi32, #tpu.memory_space<smem>>
    %123 = arith.index_cast %122 : i32 to index
    %c0_120 = arith.constant 0 : index
    %124 = vector.load %arg2[%123, %c0_120] : memref<50x64xf32, #tpu.memory_space<vmem>>, vector<1x64xf32>
    %c58 = arith.constant 58 : index
    %c0_121 = arith.constant 0 : index
    %125 = vector.load %arg12[%c58, %c0_121] : memref<64x64xf32, #tpu.memory_space<vmem>>, vector<1x64xf32>
    tpu.vector_store %arg12[%c58, %c0_121], %124 {strides = array<i32>} : memref<64x64xf32, #tpu.memory_space<vmem>>, vector<1x64xf32>,
    %c3_122 = arith.constant 3 : index
    %c7_123 = arith.constant 7 : index
    %126 = memref.load %arg1[%c3_122, %c7_123] : memref<4x8xi32, #tpu.memory_space<smem>>
    %127 = arith.index_cast %126 : i32 to index
    %c0_124 = arith.constant 0 : index
    %128 = vector.load %arg2[%127, %c0_124] : memref<50x64xf32, #tpu.memory_space<vmem>>, vector<1x64xf32>
    %c59 = arith.constant 59 : index
    %c0_125 = arith.constant 0 : index
    %129 = vector.load %arg12[%c59, %c0_125] : memref<64x64xf32, #tpu.memory_space<vmem>>, vector<1x64xf32>
    tpu.vector_store %arg12[%c59, %c0_125], %128 {strides = array<i32>} : memref<64x64xf32, #tpu.memory_space<vmem>>, vector<1x64xf32>,
    %130 = tpu.iota {dimensions = array<i32: 1>} : vector<8x256xi32>
    %c128_i32 = arith.constant 128 : i32
    %131 = vector.broadcast %c128_i32 : i32 to vector<8x256xi32>
    %132 = arith.cmpi sge, %130, %131 : vector<8x256xi32>
    %c192_i32 = arith.constant 192 : i32
    %133 = vector.broadcast %c192_i32 : i32 to vector<8x256xi32>
    %134 = arith.cmpi slt, %130, %133 : vector<8x256xi32>
    %135 = arith.andi %132, %134 : vector<8x256xi1>
    %c64_i32 = arith.constant 64 : i32
    %c0_i32 = arith.constant 0 : i32
    %136 = arith.cmpi eq, %c64_i32, %c0_i32 : i32
    %c1_i32 = arith.constant 1 : i32
    %137 = arith.select %136, %c1_i32, %c64_i32 : i32
    %138 = vector.broadcast %137 : i32 to vector<8x256xi32>
    %139 = arith.remsi %130, %138 : vector<8x256xi32>
    %c0_i32_126 = arith.constant 0 : i32
    %140 = vector.broadcast %c0_i32_126 : i32 to vector<8x256xi32>
    %141 = arith.cmpi ne, %139, %140 : vector<8x256xi32>
    %c0_i32_127 = arith.constant 0 : i32
    %142 = vector.broadcast %c0_i32_127 : i32 to vector<8x256xi32>
    %143 = arith.cmpi slt, %139, %142 : vector<8x256xi32>
    %c0_i32_128 = arith.constant 0 : i32
    %144 = arith.cmpi slt, %137, %c0_i32_128 : i32
    %145 = vector.broadcast %144 : i1 to vector<8x256xi1>
    %146 = vector.broadcast %145 : vector<8x256xi1> to vector<8x256xi1>
    %147 = arith.xori %143, %146 : vector<8x256xi1>
    %148 = arith.andi %147, %141 : vector<8x256xi1>
    %149 = vector.broadcast %137 : i32 to vector<8x256xi32>
    %150 = arith.addi %139, %149 : vector<8x256xi32>
    %151 = arith.select %148, %150, %139 : vector<8x256xi1>, vector<8x256xi32>
    %c32_i32 = arith.constant 32 : i32
    %152 = vector.broadcast %c32_i32 : i32 to vector<8x256xi32>
    %153 = arith.cmpi slt, %151, %152 : vector<8x256xi32>
    %cst_129 = arith.constant 2.000000e+00 : f32
    %cst_130 = arith.constant 1.000000e+00 : f32
    %154 = vector.broadcast %cst_129 : f32 to vector<8x256xf32>
    %155 = vector.broadcast %cst_130 : f32 to vector<8x256xf32>
    %156 = arith.select %135, %154, %155 : vector<8x256xi1>, vector<8x256xf32>
    %cst_131 = arith.constant -1.000000e+00 : f32
    %cst_132 = arith.constant 0.000000e+00 : f32
    %157 = vector.broadcast %cst_131 : f32 to vector<8x256xf32>
    %158 = vector.broadcast %cst_132 : f32 to vector<8x256xf32>
    %159 = arith.select %135, %157, %158 : vector<8x256xi1>, vector<8x256xf32>
    %c0_133 = arith.constant 0 : index
    %c0_134 = arith.constant 0 : index
    %160 = vector.load %arg12[%c0_133, %c0_134] : memref<64x64xf32, #tpu.memory_space<vmem>>, vector<64x64xf32>
    %161 = arith.truncf %160 : vector<64x64xf32> to vector<64x64xbf16>
    %c0_135 = arith.constant 0 : index
    %c0_136 = arith.constant 0 : index
    %162 = vector.load %arg3[%c0_135, %c0_136] : memref<64x256xbf16, #tpu.memory_space<vmem>>, vector<64x256xbf16>
    %cst_137 = arith.constant dense<0.000000e+00> : vector<64x256xf32>
    %163 = tpu.matmul %161, %162, %cst_137 {dimension_numbers = #tpu.dot_dimension_numbers<[1], [0], [0], [1], [0, 0, 1, 1], [], []>} : vector<64x64xbf16>, vector<64x256xbf16>, vector<64x256xf32> -> vector<64x256xf32>
    %c0_138 = arith.constant 0 : index
    %c0_139 = arith.constant 0 : index
    %164 = vector.load %arg7[%c0_138, %c0_139] : memref<1x256xf32, #tpu.memory_space<vmem>>, vector<1x256xf32>
    %165 = vector.broadcast %164 : vector<1x256xf32> to vector<64x256xf32>
    %166 = arith.addf %163, %165 : vector<64x256xf32>
    %c0_140 = arith.constant 0 : index
    %c0_141 = arith.constant 0 : index
    %167 = vector.load %arg13[%c0_140, %c0_141] : memref<64x256xf32, #tpu.memory_space<vmem>>, vector<64x256xf32>
    tpu.vector_store %arg13[%c0_140, %c0_141], %166 {strides = array<i32>} : memref<64x256xf32, #tpu.memory_space<vmem>>, vector<64x256xf32>,
    %c0_142 = arith.constant 0 : index
    %c0_143 = arith.constant 0 : index
    %168 = vector.load %arg5[%c0_142, %c0_143] : memref<64x256xbf16, #tpu.memory_space<vmem>>, vector<64x256xbf16>
    %cst_144 = arith.constant 0.000000e+00 : f32
    %169 = vector.broadcast %cst_144 : f32 to vector<8x64xf32>
    %cst_145 = arith.constant 0.000000e+00 : f32
    %170 = vector.broadcast %cst_145 : f32 to vector<8x64xf32>
    %171 = arith.truncf %169 : vector<8x64xf32> to vector<8x64xbf16>
    %cst_146 = arith.constant dense<0.000000e+00> : vector<8x256xf32>
    %172 = tpu.matmul %171, %168, %cst_146 {dimension_numbers = #tpu.dot_dimension_numbers<[1], [0], [0], [1], [0, 0, 1, 1], [], []>} : vector<8x64xbf16>, vector<64x256xbf16>, vector<8x256xf32> -> vector<8x256xf32>
    %c0_147 = arith.constant 0 : index
    %c0_148 = arith.constant 0 : index
    %173 = vector.load %arg13[%c0_147, %c0_148] : memref<64x256xf32, #tpu.memory_space<vmem>>, vector<8x256xf32>
    %c56_149 = arith.constant 56 : index
    %c0_150 = arith.constant 0 : index
    %174 = vector.load %arg13[%c56_149, %c0_150] : memref<64x256xf32, #tpu.memory_space<vmem>>, vector<8x256xf32>
    %175 = arith.select %153, %173, %174 : vector<8x256xi1>, vector<8x256xf32>
    %176 = arith.addf %172, %175 : vector<8x256xf32>
    %177 = arith.mulf %176, %156 : vector<8x256xf32>
    %178 = arith.negf %177 : vector<8x256xf32>
    %179 = math.exp %178 : vector<8x256xf32>
    %cst_151 = arith.constant 1.000000e+00 : f32
    %180 = vector.broadcast %cst_151 : f32 to vector<8x256xf32>
    %181 = arith.addf %180, %179 : vector<8x256xf32>
    %182 = arith.divf %180, %181 : vector<8x256xf32>
    %183 = arith.mulf %182, %156 : vector<8x256xf32>
    %184 = arith.addf %183, %159 : vector<8x256xf32>
    %185 = vector.extract_strided_slice %184 {offsets = [0, 0], sizes = [8, 64], strides = [1, 1]} : vector<8x256xf32> to vector<8x64xf32>
    %186 = vector.extract_strided_slice %184 {offsets = [0, 64], sizes = [8, 64], strides = [1, 1]} : vector<8x256xf32> to vector<8x64xf32>
    %187 = vector.extract_strided_slice %184 {offsets = [0, 128], sizes = [8, 64], strides = [1, 1]} : vector<8x256xf32> to vector<8x64xf32>
    %188 = vector.extract_strided_slice %184 {offsets = [0, 192], sizes = [8, 64], strides = [1, 1]} : vector<8x256xf32> to vector<8x64xf32>
    %189 = arith.mulf %186, %170 : vector<8x64xf32>
    %190 = arith.mulf %185, %187 : vector<8x64xf32>
    %191 = arith.addf %189, %190 : vector<8x64xf32>
    %192 = math.tanh %191 : vector<8x64xf32>
    %193 = arith.mulf %188, %192 : vector<8x64xf32>
    %194 = vector.extract_strided_slice %193 {offsets = [0, 0], sizes = [8, 32], strides = [1, 1]} : vector<8x64xf32> to vector<8x32xf32>
    %c0_152 = arith.constant 0 : index
    %c0_153 = arith.constant 0 : index
    %195 = vector.load %arg14[%c0_152, %c0_153] : memref<64x64xf32, #tpu.memory_space<vmem>>, vector<8x32xf32>
    tpu.vector_store %arg14[%c0_152, %c0_153], %194 {strides = array<i32>} : memref<64x64xf32, #tpu.memory_space<vmem>>, vector<8x32xf32>,
    %196 = vector.extract_strided_slice %193 {offsets = [0, 32], sizes = [8, 32], strides = [1, 1]} : vector<8x64xf32> to vector<8x32xf32>
    %c56_154 = arith.constant 56 : index
    %c32_155 = arith.constant 32 : index
    %197 = vector.load %arg14[%c56_154, %c32_155] : memref<64x64xf32, #tpu.memory_space<vmem>>, vector<8x32xf32>
    tpu.vector_store %arg14[%c56_154, %c32_155], %196 {strides = array<i32>} : memref<64x64xf32, #tpu.memory_space<vmem>>, vector<8x32xf32>,
    %198 = arith.truncf %193 : vector<8x64xf32> to vector<8x64xbf16>
    %cst_156 = arith.constant dense<0.000000e+00> : vector<8x256xf32>
    %199 = tpu.matmul %198, %168, %cst_156 {dimension_numbers = #tpu.dot_dimension_numbers<[1], [0], [0], [1], [0, 0, 1, 1], [], []>} : vector<8x64xbf16>, vector<64x256xbf16>, vector<8x256xf32> -> vector<8x256xf32>
    %c8_157 = arith.constant 8 : index
    %c0_158 = arith.constant 0 : index
    %200 = vector.load %arg13[%c8_157, %c0_158] : memref<64x256xf32, #tpu.memory_space<vmem>>, vector<8x256xf32>
    %c48_159 = arith.constant 48 : index
    %c0_160 = arith.constant 0 : index
    %201 = vector.load %arg13[%c48_159, %c0_160] : memref<64x256xf32, #tpu.memory_space<vmem>>, vector<8x256xf32>
    %202 = arith.select %153, %200, %201 : vector<8x256xi1>, vector<8x256xf32>
    %203 = arith.addf %199, %202 : vector<8x256xf32>
    %204 = arith.mulf %203, %156 : vector<8x256xf32>
    %205 = arith.negf %204 : vector<8x256xf32>
    %206 = math.exp %205 : vector<8x256xf32>
    %cst_161 = arith.constant 1.000000e+00 : f32
    %207 = vector.broadcast %cst_161 : f32 to vector<8x256xf32>
    %208 = arith.addf %207, %206 : vector<8x256xf32>
    %209 = arith.divf %207, %208 : vector<8x256xf32>
    %210 = arith.mulf %209, %156 : vector<8x256xf32>
    %211 = arith.addf %210, %159 : vector<8x256xf32>
    %212 = vector.extract_strided_slice %211 {offsets = [0, 0], sizes = [8, 64], strides = [1, 1]} : vector<8x256xf32> to vector<8x64xf32>
    %213 = vector.extract_strided_slice %211 {offsets = [0, 64], sizes = [8, 64], strides = [1, 1]} : vector<8x256xf32> to vector<8x64xf32>
    %214 = vector.extract_strided_slice %211 {offsets = [0, 128], sizes = [8, 64], strides = [1, 1]} : vector<8x256xf32> to vector<8x64xf32>
    %215 = vector.extract_strided_slice %211 {offsets = [0, 192], sizes = [8, 64], strides = [1, 1]} : vector<8x256xf32> to vector<8x64xf32>
    %216 = arith.mulf %213, %191 : vector<8x64xf32>
    %217 = arith.mulf %212, %214 : vector<8x64xf32>
    %218 = arith.addf %216, %217 : vector<8x64xf32>
    %219 = math.tanh %218 : vector<8x64xf32>
    %220 = arith.mulf %215, %219 : vector<8x64xf32>
    %221 = vector.extract_strided_slice %220 {offsets = [0, 0], sizes = [8, 32], strides = [1, 1]} : vector<8x64xf32> to vector<8x32xf32>
    %c8_162 = arith.constant 8 : index
    %c0_163 = arith.constant 0 : index
    %222 = vector.load %arg14[%c8_162, %c0_163] : memref<64x64xf32, #tpu.memory_space<vmem>>, vector<8x32xf32>
    tpu.vector_store %arg14[%c8_162, %c0_163], %221 {strides = array<i32>} : memref<64x64xf32, #tpu.memory_space<vmem>>, vector<8x32xf32>,
    %223 = vector.extract_strided_slice %220 {offsets = [0, 32], sizes = [8, 32], strides = [1, 1]} : vector<8x64xf32> to vector<8x32xf32>
    %c48_164 = arith.constant 48 : index
    %c32_165 = arith.constant 32 : index
    %224 = vector.load %arg14[%c48_164, %c32_165] : memref<64x64xf32, #tpu.memory_space<vmem>>, vector<8x32xf32>
    tpu.vector_store %arg14[%c48_164, %c32_165], %223 {strides = array<i32>} : memref<64x64xf32, #tpu.memory_space<vmem>>, vector<8x32xf32>,
    %225 = arith.truncf %220 : vector<8x64xf32> to vector<8x64xbf16>
    %cst_166 = arith.constant dense<0.000000e+00> : vector<8x256xf32>
    %226 = tpu.matmul %225, %168, %cst_166 {dimension_numbers = #tpu.dot_dimension_numbers<[1], [0], [0], [1], [0, 0, 1, 1], [], []>} : vector<8x64xbf16>, vector<64x256xbf16>, vector<8x256xf32> -> vector<8x256xf32>
    %c16_167 = arith.constant 16 : index
    %c0_168 = arith.constant 0 : index
    %227 = vector.load %arg13[%c16_167, %c0_168] : memref<64x256xf32, #tpu.memory_space<vmem>>, vector<8x256xf32>
    %c40_169 = arith.constant 40 : index
    %c0_170 = arith.constant 0 : index
    %228 = vector.load %arg13[%c40_169, %c0_170] : memref<64x256xf32, #tpu.memory_space<vmem>>, vector<8x256xf32>
    %229 = arith.select %153, %227, %228 : vector<8x256xi1>, vector<8x256xf32>
    %230 = arith.addf %226, %229 : vector<8x256xf32>
    %231 = arith.mulf %230, %156 : vector<8x256xf32>
    %232 = arith.negf %231 : vector<8x256xf32>
    %233 = math.exp %232 : vector<8x256xf32>
    %cst_171 = arith.constant 1.000000e+00 : f32
    %234 = vector.broadcast %cst_171 : f32 to vector<8x256xf32>
    %235 = arith.addf %234, %233 : vector<8x256xf32>
    %236 = arith.divf %234, %235 : vector<8x256xf32>
    %237 = arith.mulf %236, %156 : vector<8x256xf32>
    %238 = arith.addf %237, %159 : vector<8x256xf32>
    %239 = vector.extract_strided_slice %238 {offsets = [0, 0], sizes = [8, 64], strides = [1, 1]} : vector<8x256xf32> to vector<8x64xf32>
    %240 = vector.extract_strided_slice %238 {offsets = [0, 64], sizes = [8, 64], strides = [1, 1]} : vector<8x256xf32> to vector<8x64xf32>
    %241 = vector.extract_strided_slice %238 {offsets = [0, 128], sizes = [8, 64], strides = [1, 1]} : vector<8x256xf32> to vector<8x64xf32>
    %242 = vector.extract_strided_slice %238 {offsets = [0, 192], sizes = [8, 64], strides = [1, 1]} : vector<8x256xf32> to vector<8x64xf32>
    %243 = arith.mulf %240, %218 : vector<8x64xf32>
    %244 = arith.mulf %239, %241 : vector<8x64xf32>
    %245 = arith.addf %243, %244 : vector<8x64xf32>
    %246 = math.tanh %245 : vector<8x64xf32>
    %247 = arith.mulf %242, %246 : vector<8x64xf32>
    %248 = vector.extract_strided_slice %247 {offsets = [0, 0], sizes = [8, 32], strides = [1, 1]} : vector<8x64xf32> to vector<8x32xf32>
    %c16_172 = arith.constant 16 : index
    %c0_173 = arith.constant 0 : index
    %249 = vector.load %arg14[%c16_172, %c0_173] : memref<64x64xf32, #tpu.memory_space<vmem>>, vector<8x32xf32>
    tpu.vector_store %arg14[%c16_172, %c0_173], %248 {strides = array<i32>} : memref<64x64xf32, #tpu.memory_space<vmem>>, vector<8x32xf32>,
    %250 = vector.extract_strided_slice %247 {offsets = [0, 32], sizes = [8, 32], strides = [1, 1]} : vector<8x64xf32> to vector<8x32xf32>
    %c40_174 = arith.constant 40 : index
    %c32_175 = arith.constant 32 : index
    %251 = vector.load %arg14[%c40_174, %c32_175] : memref<64x64xf32, #tpu.memory_space<vmem>>, vector<8x32xf32>
    tpu.vector_store %arg14[%c40_174, %c32_175], %250 {strides = array<i32>} : memref<64x64xf32, #tpu.memory_space<vmem>>, vector<8x32xf32>,
    %252 = arith.truncf %247 : vector<8x64xf32> to vector<8x64xbf16>
    %cst_176 = arith.constant dense<0.000000e+00> : vector<8x256xf32>
    %253 = tpu.matmul %252, %168, %cst_176 {dimension_numbers = #tpu.dot_dimension_numbers<[1], [0], [0], [1], [0, 0, 1, 1], [], []>} : vector<8x64xbf16>, vector<64x256xbf16>, vector<8x256xf32> -> vector<8x256xf32>
    %c24_177 = arith.constant 24 : index
    %c0_178 = arith.constant 0 : index
    %254 = vector.load %arg13[%c24_177, %c0_178] : memref<64x256xf32, #tpu.memory_space<vmem>>, vector<8x256xf32>
    %c32_179 = arith.constant 32 : index
    %c0_180 = arith.constant 0 : index
    %255 = vector.load %arg13[%c32_179, %c0_180] : memref<64x256xf32, #tpu.memory_space<vmem>>, vector<8x256xf32>
    %256 = arith.select %153, %254, %255 : vector<8x256xi1>, vector<8x256xf32>
    %257 = arith.addf %253, %256 : vector<8x256xf32>
    %258 = arith.mulf %257, %156 : vector<8x256xf32>
    %259 = arith.negf %258 : vector<8x256xf32>
    %260 = math.exp %259 : vector<8x256xf32>
    %cst_181 = arith.constant 1.000000e+00 : f32
    %261 = vector.broadcast %cst_181 : f32 to vector<8x256xf32>
    %262 = arith.addf %261, %260 : vector<8x256xf32>
    %263 = arith.divf %261, %262 : vector<8x256xf32>
    %264 = arith.mulf %263, %156 : vector<8x256xf32>
    %265 = arith.addf %264, %159 : vector<8x256xf32>
    %266 = vector.extract_strided_slice %265 {offsets = [0, 0], sizes = [8, 64], strides = [1, 1]} : vector<8x256xf32> to vector<8x64xf32>
    %267 = vector.extract_strided_slice %265 {offsets = [0, 64], sizes = [8, 64], strides = [1, 1]} : vector<8x256xf32> to vector<8x64xf32>
    %268 = vector.extract_strided_slice %265 {offsets = [0, 128], sizes = [8, 64], strides = [1, 1]} : vector<8x256xf32> to vector<8x64xf32>
    %269 = vector.extract_strided_slice %265 {offsets = [0, 192], sizes = [8, 64], strides = [1, 1]} : vector<8x256xf32> to vector<8x64xf32>
    %270 = arith.mulf %267, %245 : vector<8x64xf32>
    %271 = arith.mulf %266, %268 : vector<8x64xf32>
    %272 = arith.addf %270, %271 : vector<8x64xf32>
    %273 = math.tanh %272 : vector<8x64xf32>
    %274 = arith.mulf %269, %273 : vector<8x64xf32>
    %275 = vector.extract_strided_slice %274 {offsets = [0, 0], sizes = [8, 32], strides = [1, 1]} : vector<8x64xf32> to vector<8x32xf32>
    %c24_182 = arith.constant 24 : index
    %c0_183 = arith.constant 0 : index
    %276 = vector.load %arg14[%c24_182, %c0_183] : memref<64x64xf32, #tpu.memory_space<vmem>>, vector<8x32xf32>
    tpu.vector_store %arg14[%c24_182, %c0_183], %275 {strides = array<i32>} : memref<64x64xf32, #tpu.memory_space<vmem>>, vector<8x32xf32>,
    %277 = vector.extract_strided_slice %274 {offsets = [0, 32], sizes = [8, 32], strides = [1, 1]} : vector<8x64xf32> to vector<8x32xf32>
    %c32_184 = arith.constant 32 : index
    %c32_185 = arith.constant 32 : index
    %278 = vector.load %arg14[%c32_184, %c32_185] : memref<64x64xf32, #tpu.memory_space<vmem>>, vector<8x32xf32>
    tpu.vector_store %arg14[%c32_184, %c32_185], %277 {strides = array<i32>} : memref<64x64xf32, #tpu.memory_space<vmem>>, vector<8x32xf32>,
    %279 = arith.truncf %274 : vector<8x64xf32> to vector<8x64xbf16>
    %cst_186 = arith.constant dense<0.000000e+00> : vector<8x256xf32>
    %280 = tpu.matmul %279, %168, %cst_186 {dimension_numbers = #tpu.dot_dimension_numbers<[1], [0], [0], [1], [0, 0, 1, 1], [], []>} : vector<8x64xbf16>, vector<64x256xbf16>, vector<8x256xf32> -> vector<8x256xf32>
    %c32_187 = arith.constant 32 : index
    %c0_188 = arith.constant 0 : index
    %281 = vector.load %arg13[%c32_187, %c0_188] : memref<64x256xf32, #tpu.memory_space<vmem>>, vector<8x256xf32>
    %c24_189 = arith.constant 24 : index
    %c0_190 = arith.constant 0 : index
    %282 = vector.load %arg13[%c24_189, %c0_190] : memref<64x256xf32, #tpu.memory_space<vmem>>, vector<8x256xf32>
    %283 = arith.select %153, %281, %282 : vector<8x256xi1>, vector<8x256xf32>
    %284 = arith.addf %280, %283 : vector<8x256xf32>
    %285 = arith.mulf %284, %156 : vector<8x256xf32>
    %286 = arith.negf %285 : vector<8x256xf32>
    %287 = math.exp %286 : vector<8x256xf32>
    %cst_191 = arith.constant 1.000000e+00 : f32
    %288 = vector.broadcast %cst_191 : f32 to vector<8x256xf32>
    %289 = arith.addf %288, %287 : vector<8x256xf32>
    %290 = arith.divf %288, %289 : vector<8x256xf32>
    %291 = arith.mulf %290, %156 : vector<8x256xf32>
    %292 = arith.addf %291, %159 : vector<8x256xf32>
    %293 = vector.extract_strided_slice %292 {offsets = [0, 0], sizes = [8, 64], strides = [1, 1]} : vector<8x256xf32> to vector<8x64xf32>
    %294 = vector.extract_strided_slice %292 {offsets = [0, 64], sizes = [8, 64], strides = [1, 1]} : vector<8x256xf32> to vector<8x64xf32>
    %295 = vector.extract_strided_slice %292 {offsets = [0, 128], sizes = [8, 64], strides = [1, 1]} : vector<8x256xf32> to vector<8x64xf32>
    %296 = vector.extract_strided_slice %292 {offsets = [0, 192], sizes = [8, 64], strides = [1, 1]} : vector<8x256xf32> to vector<8x64xf32>
    %297 = arith.mulf %294, %272 : vector<8x64xf32>
    %298 = arith.mulf %293, %295 : vector<8x64xf32>
    %299 = arith.addf %297, %298 : vector<8x64xf32>
    %300 = math.tanh %299 : vector<8x64xf32>
    %301 = arith.mulf %296, %300 : vector<8x64xf32>
    %302 = vector.extract_strided_slice %301 {offsets = [0, 0], sizes = [8, 32], strides = [1, 1]} : vector<8x64xf32> to vector<8x32xf32>
    %c32_192 = arith.constant 32 : index
    %c0_193 = arith.constant 0 : index
    %303 = vector.load %arg14[%c32_192, %c0_193] : memref<64x64xf32, #tpu.memory_space<vmem>>, vector<8x32xf32>
    tpu.vector_store %arg14[%c32_192, %c0_193], %302 {strides = array<i32>} : memref<64x64xf32, #tpu.memory_space<vmem>>, vector<8x32xf32>,
    %304 = vector.extract_strided_slice %301 {offsets = [0, 32], sizes = [8, 32], strides = [1, 1]} : vector<8x64xf32> to vector<8x32xf32>
    %c24_194 = arith.constant 24 : index
    %c32_195 = arith.constant 32 : index
    %305 = vector.load %arg14[%c24_194, %c32_195] : memref<64x64xf32, #tpu.memory_space<vmem>>, vector<8x32xf32>
    tpu.vector_store %arg14[%c24_194, %c32_195], %304 {strides = array<i32>} : memref<64x64xf32, #tpu.memory_space<vmem>>, vector<8x32xf32>,
    %306 = arith.truncf %301 : vector<8x64xf32> to vector<8x64xbf16>
    %cst_196 = arith.constant dense<0.000000e+00> : vector<8x256xf32>
    %307 = tpu.matmul %306, %168, %cst_196 {dimension_numbers = #tpu.dot_dimension_numbers<[1], [0], [0], [1], [0, 0, 1, 1], [], []>} : vector<8x64xbf16>, vector<64x256xbf16>, vector<8x256xf32> -> vector<8x256xf32>
    %c40_197 = arith.constant 40 : index
    %c0_198 = arith.constant 0 : index
    %308 = vector.load %arg13[%c40_197, %c0_198] : memref<64x256xf32, #tpu.memory_space<vmem>>, vector<8x256xf32>
    %c16_199 = arith.constant 16 : index
    %c0_200 = arith.constant 0 : index
    %309 = vector.load %arg13[%c16_199, %c0_200] : memref<64x256xf32, #tpu.memory_space<vmem>>, vector<8x256xf32>
    %310 = arith.select %153, %308, %309 : vector<8x256xi1>, vector<8x256xf32>
    %311 = arith.addf %307, %310 : vector<8x256xf32>
    %312 = arith.mulf %311, %156 : vector<8x256xf32>
    %313 = arith.negf %312 : vector<8x256xf32>
    %314 = math.exp %313 : vector<8x256xf32>
    %cst_201 = arith.constant 1.000000e+00 : f32
    %315 = vector.broadcast %cst_201 : f32 to vector<8x256xf32>
    %316 = arith.addf %315, %314 : vector<8x256xf32>
    %317 = arith.divf %315, %316 : vector<8x256xf32>
    %318 = arith.mulf %317, %156 : vector<8x256xf32>
    %319 = arith.addf %318, %159 : vector<8x256xf32>
    %320 = vector.extract_strided_slice %319 {offsets = [0, 0], sizes = [8, 64], strides = [1, 1]} : vector<8x256xf32> to vector<8x64xf32>
    %321 = vector.extract_strided_slice %319 {offsets = [0, 64], sizes = [8, 64], strides = [1, 1]} : vector<8x256xf32> to vector<8x64xf32>
    %322 = vector.extract_strided_slice %319 {offsets = [0, 128], sizes = [8, 64], strides = [1, 1]} : vector<8x256xf32> to vector<8x64xf32>
    %323 = vector.extract_strided_slice %319 {offsets = [0, 192], sizes = [8, 64], strides = [1, 1]} : vector<8x256xf32> to vector<8x64xf32>
    %324 = arith.mulf %321, %299 : vector<8x64xf32>
    %325 = arith.mulf %320, %322 : vector<8x64xf32>
    %326 = arith.addf %324, %325 : vector<8x64xf32>
    %327 = math.tanh %326 : vector<8x64xf32>
    %328 = arith.mulf %323, %327 : vector<8x64xf32>
    %329 = vector.extract_strided_slice %328 {offsets = [0, 0], sizes = [8, 32], strides = [1, 1]} : vector<8x64xf32> to vector<8x32xf32>
    %c40_202 = arith.constant 40 : index
    %c0_203 = arith.constant 0 : index
    %330 = vector.load %arg14[%c40_202, %c0_203] : memref<64x64xf32, #tpu.memory_space<vmem>>, vector<8x32xf32>
    tpu.vector_store %arg14[%c40_202, %c0_203], %329 {strides = array<i32>} : memref<64x64xf32, #tpu.memory_space<vmem>>, vector<8x32xf32>,
    %331 = vector.extract_strided_slice %328 {offsets = [0, 32], sizes = [8, 32], strides = [1, 1]} : vector<8x64xf32> to vector<8x32xf32>
    %c16_204 = arith.constant 16 : index
    %c32_205 = arith.constant 32 : index
    %332 = vector.load %arg14[%c16_204, %c32_205] : memref<64x64xf32, #tpu.memory_space<vmem>>, vector<8x32xf32>
    tpu.vector_store %arg14[%c16_204, %c32_205], %331 {strides = array<i32>} : memref<64x64xf32, #tpu.memory_space<vmem>>, vector<8x32xf32>,
    %333 = arith.truncf %328 : vector<8x64xf32> to vector<8x64xbf16>
    %cst_206 = arith.constant dense<0.000000e+00> : vector<8x256xf32>
    %334 = tpu.matmul %333, %168, %cst_206 {dimension_numbers = #tpu.dot_dimension_numbers<[1], [0], [0], [1], [0, 0, 1, 1], [], []>} : vector<8x64xbf16>, vector<64x256xbf16>, vector<8x256xf32> -> vector<8x256xf32>
    %c48_207 = arith.constant 48 : index
    %c0_208 = arith.constant 0 : index
    %335 = vector.load %arg13[%c48_207, %c0_208] : memref<64x256xf32, #tpu.memory_space<vmem>>, vector<8x256xf32>
    %c8_209 = arith.constant 8 : index
    %c0_210 = arith.constant 0 : index
    %336 = vector.load %arg13[%c8_209, %c0_210] : memref<64x256xf32, #tpu.memory_space<vmem>>, vector<8x256xf32>
    %337 = arith.select %153, %335, %336 : vector<8x256xi1>, vector<8x256xf32>
    %338 = arith.addf %334, %337 : vector<8x256xf32>
    %339 = arith.mulf %338, %156 : vector<8x256xf32>
    %340 = arith.negf %339 : vector<8x256xf32>
    %341 = math.exp %340 : vector<8x256xf32>
    %cst_211 = arith.constant 1.000000e+00 : f32
    %342 = vector.broadcast %cst_211 : f32 to vector<8x256xf32>
    %343 = arith.addf %342, %341 : vector<8x256xf32>
    %344 = arith.divf %342, %343 : vector<8x256xf32>
    %345 = arith.mulf %344, %156 : vector<8x256xf32>
    %346 = arith.addf %345, %159 : vector<8x256xf32>
    %347 = vector.extract_strided_slice %346 {offsets = [0, 0], sizes = [8, 64], strides = [1, 1]} : vector<8x256xf32> to vector<8x64xf32>
    %348 = vector.extract_strided_slice %346 {offsets = [0, 64], sizes = [8, 64], strides = [1, 1]} : vector<8x256xf32> to vector<8x64xf32>
    %349 = vector.extract_strided_slice %346 {offsets = [0, 128], sizes = [8, 64], strides = [1, 1]} : vector<8x256xf32> to vector<8x64xf32>
    %350 = vector.extract_strided_slice %346 {offsets = [0, 192], sizes = [8, 64], strides = [1, 1]} : vector<8x256xf32> to vector<8x64xf32>
    %351 = arith.mulf %348, %326 : vector<8x64xf32>
    %352 = arith.mulf %347, %349 : vector<8x64xf32>
    %353 = arith.addf %351, %352 : vector<8x64xf32>
    %354 = math.tanh %353 : vector<8x64xf32>
    %355 = arith.mulf %350, %354 : vector<8x64xf32>
    %356 = vector.extract_strided_slice %355 {offsets = [0, 0], sizes = [8, 32], strides = [1, 1]} : vector<8x64xf32> to vector<8x32xf32>
    %c48_212 = arith.constant 48 : index
    %c0_213 = arith.constant 0 : index
    %357 = vector.load %arg14[%c48_212, %c0_213] : memref<64x64xf32, #tpu.memory_space<vmem>>, vector<8x32xf32>
    tpu.vector_store %arg14[%c48_212, %c0_213], %356 {strides = array<i32>} : memref<64x64xf32, #tpu.memory_space<vmem>>, vector<8x32xf32>,
    %358 = vector.extract_strided_slice %355 {offsets = [0, 32], sizes = [8, 32], strides = [1, 1]} : vector<8x64xf32> to vector<8x32xf32>
    %c8_214 = arith.constant 8 : index
    %c32_215 = arith.constant 32 : index
    %359 = vector.load %arg14[%c8_214, %c32_215] : memref<64x64xf32, #tpu.memory_space<vmem>>, vector<8x32xf32>
    tpu.vector_store %arg14[%c8_214, %c32_215], %358 {strides = array<i32>} : memref<64x64xf32, #tpu.memory_space<vmem>>, vector<8x32xf32>,
    %360 = arith.truncf %355 : vector<8x64xf32> to vector<8x64xbf16>
    %cst_216 = arith.constant dense<0.000000e+00> : vector<8x256xf32>
    %361 = tpu.matmul %360, %168, %cst_216 {dimension_numbers = #tpu.dot_dimension_numbers<[1], [0], [0], [1], [0, 0, 1, 1], [], []>} : vector<8x64xbf16>, vector<64x256xbf16>, vector<8x256xf32> -> vector<8x256xf32>
    %c56_217 = arith.constant 56 : index
    %c0_218 = arith.constant 0 : index
    %362 = vector.load %arg13[%c56_217, %c0_218] : memref<64x256xf32, #tpu.memory_space<vmem>>, vector<8x256xf32>
    %c0_219 = arith.constant 0 : index
    %c0_220 = arith.constant 0 : index
    %363 = vector.load %arg13[%c0_219, %c0_220] : memref<64x256xf32, #tpu.memory_space<vmem>>, vector<8x256xf32>
    %364 = arith.select %153, %362, %363 : vector<8x256xi1>, vector<8x256xf32>
    %365 = arith.addf %361, %364 : vector<8x256xf32>
    %366 = arith.mulf %365, %156 : vector<8x256xf32>
    %367 = arith.negf %366 : vector<8x256xf32>
    %368 = math.exp %367 : vector<8x256xf32>
    %cst_221 = arith.constant 1.000000e+00 : f32
    %369 = vector.broadcast %cst_221 : f32 to vector<8x256xf32>
    %370 = arith.addf %369, %368 : vector<8x256xf32>
    %371 = arith.divf %369, %370 : vector<8x256xf32>
    %372 = arith.mulf %371, %156 : vector<8x256xf32>
    %373 = arith.addf %372, %159 : vector<8x256xf32>
    %374 = vector.extract_strided_slice %373 {offsets = [0, 0], sizes = [8, 64], strides = [1, 1]} : vector<8x256xf32> to vector<8x64xf32>
    %375 = vector.extract_strided_slice %373 {offsets = [0, 64], sizes = [8, 64], strides = [1, 1]} : vector<8x256xf32> to vector<8x64xf32>
    %376 = vector.extract_strided_slice %373 {offsets = [0, 128], sizes = [8, 64], strides = [1, 1]} : vector<8x256xf32> to vector<8x64xf32>
    %377 = vector.extract_strided_slice %373 {offsets = [0, 192], sizes = [8, 64], strides = [1, 1]} : vector<8x256xf32> to vector<8x64xf32>
    %378 = arith.mulf %375, %353 : vector<8x64xf32>
    %379 = arith.mulf %374, %376 : vector<8x64xf32>
    %380 = arith.addf %378, %379 : vector<8x64xf32>
    %381 = math.tanh %380 : vector<8x64xf32>
    %382 = arith.mulf %377, %381 : vector<8x64xf32>
    %383 = vector.extract_strided_slice %382 {offsets = [0, 0], sizes = [8, 32], strides = [1, 1]} : vector<8x64xf32> to vector<8x32xf32>
    %c56_222 = arith.constant 56 : index
    %c0_223 = arith.constant 0 : index
    %384 = vector.load %arg14[%c56_222, %c0_223] : memref<64x64xf32, #tpu.memory_space<vmem>>, vector<8x32xf32>
    tpu.vector_store %arg14[%c56_222, %c0_223], %383 {strides = array<i32>} : memref<64x64xf32, #tpu.memory_space<vmem>>, vector<8x32xf32>,
    %385 = vector.extract_strided_slice %382 {offsets = [0, 32], sizes = [8, 32], strides = [1, 1]} : vector<8x64xf32> to vector<8x32xf32>
    %c0_224 = arith.constant 0 : index
    %c32_225 = arith.constant 32 : index
    %386 = vector.load %arg14[%c0_224, %c32_225] : memref<64x64xf32, #tpu.memory_space<vmem>>, vector<8x32xf32>
    tpu.vector_store %arg14[%c0_224, %c32_225], %385 {strides = array<i32>} : memref<64x64xf32, #tpu.memory_space<vmem>>, vector<8x32xf32>,
    %387 = vector.extract_strided_slice %382 {offsets = [0, 0], sizes = [8, 32], strides = [1, 1]} : vector<8x64xf32> to vector<8x32xf32>
    %c0_226 = arith.constant 0 : index
    %c0_227 = arith.constant 0 : index
    %388 = vector.load %arg15[%c0_226, %c0_227] : memref<32x32xf32, #tpu.memory_space<vmem>>, vector<8x32xf32>
    tpu.vector_store %arg15[%c0_226, %c0_227], %387 {strides = array<i32>} : memref<32x32xf32, #tpu.memory_space<vmem>>, vector<8x32xf32>,
    %389 = vector.extract_strided_slice %382 {offsets = [0, 32], sizes = [8, 32], strides = [1, 1]} : vector<8x64xf32> to vector<8x32xf32>
    %c8_228 = arith.constant 8 : index
    %c0_229 = arith.constant 0 : index
    %390 = vector.load %arg15[%c8_228, %c0_229] : memref<32x32xf32, #tpu.memory_space<vmem>>, vector<8x32xf32>
    tpu.vector_store %arg15[%c8_228, %c0_229], %389 {strides = array<i32>} : memref<32x32xf32, #tpu.memory_space<vmem>>, vector<8x32xf32>,
    %c0_230 = arith.constant 0 : index
    %c0_231 = arith.constant 0 : index
    %391 = vector.load %arg14[%c0_230, %c0_231] : memref<64x64xf32, #tpu.memory_space<vmem>>, vector<64x64xf32>
    %392 = arith.truncf %391 : vector<64x64xf32> to vector<64x64xbf16>
    %c0_232 = arith.constant 0 : index
    %c0_233 = arith.constant 0 : index
    %393 = vector.load %arg4[%c0_232, %c0_233] : memref<64x256xbf16, #tpu.memory_space<vmem>>, vector<64x256xbf16>
    %cst_234 = arith.constant dense<0.000000e+00> : vector<64x256xf32>
    %394 = tpu.matmul %392, %393, %cst_234 {dimension_numbers = #tpu.dot_dimension_numbers<[1], [0], [0], [1], [0, 0, 1, 1], [], []>} : vector<64x64xbf16>, vector<64x256xbf16>, vector<64x256xf32> -> vector<64x256xf32>
    %c0_235 = arith.constant 0 : index
    %c0_236 = arith.constant 0 : index
    %395 = vector.load %arg8[%c0_235, %c0_236] : memref<1x256xf32, #tpu.memory_space<vmem>>, vector<1x256xf32>
    %396 = vector.broadcast %395 : vector<1x256xf32> to vector<64x256xf32>
    %397 = arith.addf %394, %396 : vector<64x256xf32>
    %c0_237 = arith.constant 0 : index
    %c0_238 = arith.constant 0 : index
    %398 = vector.load %arg13[%c0_237, %c0_238] : memref<64x256xf32, #tpu.memory_space<vmem>>, vector<64x256xf32>
    tpu.vector_store %arg13[%c0_237, %c0_238], %397 {strides = array<i32>} : memref<64x256xf32, #tpu.memory_space<vmem>>, vector<64x256xf32>,
    %c0_239 = arith.constant 0 : index
    %c0_240 = arith.constant 0 : index
    %399 = vector.load %arg6[%c0_239, %c0_240] : memref<64x256xbf16, #tpu.memory_space<vmem>>, vector<64x256xbf16>
    %cst_241 = arith.constant 0.000000e+00 : f32
    %400 = vector.broadcast %cst_241 : f32 to vector<8x64xf32>
    %cst_242 = arith.constant 0.000000e+00 : f32
    %401 = vector.broadcast %cst_242 : f32 to vector<8x64xf32>
    %402 = arith.truncf %400 : vector<8x64xf32> to vector<8x64xbf16>
    %cst_243 = arith.constant dense<0.000000e+00> : vector<8x256xf32>
    %403 = tpu.matmul %402, %399, %cst_243 {dimension_numbers = #tpu.dot_dimension_numbers<[1], [0], [0], [1], [0, 0, 1, 1], [], []>} : vector<8x64xbf16>, vector<64x256xbf16>, vector<8x256xf32> -> vector<8x256xf32>
    %c0_244 = arith.constant 0 : index
    %c0_245 = arith.constant 0 : index
    %404 = vector.load %arg13[%c0_244, %c0_245] : memref<64x256xf32, #tpu.memory_space<vmem>>, vector<8x256xf32>
    %c56_246 = arith.constant 56 : index
    %c0_247 = arith.constant 0 : index
    %405 = vector.load %arg13[%c56_246, %c0_247] : memref<64x256xf32, #tpu.memory_space<vmem>>, vector<8x256xf32>
    %406 = arith.select %153, %404, %405 : vector<8x256xi1>, vector<8x256xf32>
    %407 = arith.addf %403, %406 : vector<8x256xf32>
    %408 = arith.mulf %407, %156 : vector<8x256xf32>
    %409 = arith.negf %408 : vector<8x256xf32>
    %410 = math.exp %409 : vector<8x256xf32>
    %cst_248 = arith.constant 1.000000e+00 : f32
    %411 = vector.broadcast %cst_248 : f32 to vector<8x256xf32>
    %412 = arith.addf %411, %410 : vector<8x256xf32>
    %413 = arith.divf %411, %412 : vector<8x256xf32>
    %414 = arith.mulf %413, %156 : vector<8x256xf32>
    %415 = arith.addf %414, %159 : vector<8x256xf32>
    %416 = vector.extract_strided_slice %415 {offsets = [0, 0], sizes = [8, 64], strides = [1, 1]} : vector<8x256xf32> to vector<8x64xf32>
    %417 = vector.extract_strided_slice %415 {offsets = [0, 64], sizes = [8, 64], strides = [1, 1]} : vector<8x256xf32> to vector<8x64xf32>
    %418 = vector.extract_strided_slice %415 {offsets = [0, 128], sizes = [8, 64], strides = [1, 1]} : vector<8x256xf32> to vector<8x64xf32>
    %419 = vector.extract_strided_slice %415 {offsets = [0, 192], sizes = [8, 64], strides = [1, 1]} : vector<8x256xf32> to vector<8x64xf32>
    %420 = arith.mulf %417, %401 : vector<8x64xf32>
    %421 = arith.mulf %416, %418 : vector<8x64xf32>
    %422 = arith.addf %420, %421 : vector<8x64xf32>
    %423 = math.tanh %422 : vector<8x64xf32>
    %424 = arith.mulf %419, %423 : vector<8x64xf32>
    %425 = arith.truncf %424 : vector<8x64xf32> to vector<8x64xbf16>
    %cst_249 = arith.constant dense<0.000000e+00> : vector<8x256xf32>
    %426 = tpu.matmul %425, %399, %cst_249 {dimension_numbers = #tpu.dot_dimension_numbers<[1], [0], [0], [1], [0, 0, 1, 1], [], []>} : vector<8x64xbf16>, vector<64x256xbf16>, vector<8x256xf32> -> vector<8x256xf32>
    %c8_250 = arith.constant 8 : index
    %c0_251 = arith.constant 0 : index
    %427 = vector.load %arg13[%c8_250, %c0_251] : memref<64x256xf32, #tpu.memory_space<vmem>>, vector<8x256xf32>
    %c48_252 = arith.constant 48 : index
    %c0_253 = arith.constant 0 : index
    %428 = vector.load %arg13[%c48_252, %c0_253] : memref<64x256xf32, #tpu.memory_space<vmem>>, vector<8x256xf32>
    %429 = arith.select %153, %427, %428 : vector<8x256xi1>, vector<8x256xf32>
    %430 = arith.addf %426, %429 : vector<8x256xf32>
    %431 = arith.mulf %430, %156 : vector<8x256xf32>
    %432 = arith.negf %431 : vector<8x256xf32>
    %433 = math.exp %432 : vector<8x256xf32>
    %cst_254 = arith.constant 1.000000e+00 : f32
    %434 = vector.broadcast %cst_254 : f32 to vector<8x256xf32>
    %435 = arith.addf %434, %433 : vector<8x256xf32>
    %436 = arith.divf %434, %435 : vector<8x256xf32>
    %437 = arith.mulf %436, %156 : vector<8x256xf32>
    %438 = arith.addf %437, %159 : vector<8x256xf32>
    %439 = vector.extract_strided_slice %438 {offsets = [0, 0], sizes = [8, 64], strides = [1, 1]} : vector<8x256xf32> to vector<8x64xf32>
    %440 = vector.extract_strided_slice %438 {offsets = [0, 64], sizes = [8, 64], strides = [1, 1]} : vector<8x256xf32> to vector<8x64xf32>
    %441 = vector.extract_strided_slice %438 {offsets = [0, 128], sizes = [8, 64], strides = [1, 1]} : vector<8x256xf32> to vector<8x64xf32>
    %442 = vector.extract_strided_slice %438 {offsets = [0, 192], sizes = [8, 64], strides = [1, 1]} : vector<8x256xf32> to vector<8x64xf32>
    %443 = arith.mulf %440, %422 : vector<8x64xf32>
    %444 = arith.mulf %439, %441 : vector<8x64xf32>
    %445 = arith.addf %443, %444 : vector<8x64xf32>
    %446 = math.tanh %445 : vector<8x64xf32>
    %447 = arith.mulf %442, %446 : vector<8x64xf32>
    %448 = arith.truncf %447 : vector<8x64xf32> to vector<8x64xbf16>
    %cst_255 = arith.constant dense<0.000000e+00> : vector<8x256xf32>
    %449 = tpu.matmul %448, %399, %cst_255 {dimension_numbers = #tpu.dot_dimension_numbers<[1], [0], [0], [1], [0, 0, 1, 1], [], []>} : vector<8x64xbf16>, vector<64x256xbf16>, vector<8x256xf32> -> vector<8x256xf32>
    %c16_256 = arith.constant 16 : index
    %c0_257 = arith.constant 0 : index
    %450 = vector.load %arg13[%c16_256, %c0_257] : memref<64x256xf32, #tpu.memory_space<vmem>>, vector<8x256xf32>
    %c40_258 = arith.constant 40 : index
    %c0_259 = arith.constant 0 : index
    %451 = vector.load %arg13[%c40_258, %c0_259] : memref<64x256xf32, #tpu.memory_space<vmem>>, vector<8x256xf32>
    %452 = arith.select %153, %450, %451 : vector<8x256xi1>, vector<8x256xf32>
    %453 = arith.addf %449, %452 : vector<8x256xf32>
    %454 = arith.mulf %453, %156 : vector<8x256xf32>
    %455 = arith.negf %454 : vector<8x256xf32>
    %456 = math.exp %455 : vector<8x256xf32>
    %cst_260 = arith.constant 1.000000e+00 : f32
    %457 = vector.broadcast %cst_260 : f32 to vector<8x256xf32>
    %458 = arith.addf %457, %456 : vector<8x256xf32>
    %459 = arith.divf %457, %458 : vector<8x256xf32>
    %460 = arith.mulf %459, %156 : vector<8x256xf32>
    %461 = arith.addf %460, %159 : vector<8x256xf32>
    %462 = vector.extract_strided_slice %461 {offsets = [0, 0], sizes = [8, 64], strides = [1, 1]} : vector<8x256xf32> to vector<8x64xf32>
    %463 = vector.extract_strided_slice %461 {offsets = [0, 64], sizes = [8, 64], strides = [1, 1]} : vector<8x256xf32> to vector<8x64xf32>
    %464 = vector.extract_strided_slice %461 {offsets = [0, 128], sizes = [8, 64], strides = [1, 1]} : vector<8x256xf32> to vector<8x64xf32>
    %465 = vector.extract_strided_slice %461 {offsets = [0, 192], sizes = [8, 64], strides = [1, 1]} : vector<8x256xf32> to vector<8x64xf32>
    %466 = arith.mulf %463, %445 : vector<8x64xf32>
    %467 = arith.mulf %462, %464 : vector<8x64xf32>
    %468 = arith.addf %466, %467 : vector<8x64xf32>
    %469 = math.tanh %468 : vector<8x64xf32>
    %470 = arith.mulf %465, %469 : vector<8x64xf32>
    %471 = arith.truncf %470 : vector<8x64xf32> to vector<8x64xbf16>
    %cst_261 = arith.constant dense<0.000000e+00> : vector<8x256xf32>
    %472 = tpu.matmul %471, %399, %cst_261 {dimension_numbers = #tpu.dot_dimension_numbers<[1], [0], [0], [1], [0, 0, 1, 1], [], []>} : vector<8x64xbf16>, vector<64x256xbf16>, vector<8x256xf32> -> vector<8x256xf32>
    %c24_262 = arith.constant 24 : index
    %c0_263 = arith.constant 0 : index
    %473 = vector.load %arg13[%c24_262, %c0_263] : memref<64x256xf32, #tpu.memory_space<vmem>>, vector<8x256xf32>
    %c32_264 = arith.constant 32 : index
    %c0_265 = arith.constant 0 : index
    %474 = vector.load %arg13[%c32_264, %c0_265] : memref<64x256xf32, #tpu.memory_space<vmem>>, vector<8x256xf32>
    %475 = arith.select %153, %473, %474 : vector<8x256xi1>, vector<8x256xf32>
    %476 = arith.addf %472, %475 : vector<8x256xf32>
    %477 = arith.mulf %476, %156 : vector<8x256xf32>
    %478 = arith.negf %477 : vector<8x256xf32>
    %479 = math.exp %478 : vector<8x256xf32>
    %cst_266 = arith.constant 1.000000e+00 : f32
    %480 = vector.broadcast %cst_266 : f32 to vector<8x256xf32>
    %481 = arith.addf %480, %479 : vector<8x256xf32>
    %482 = arith.divf %480, %481 : vector<8x256xf32>
    %483 = arith.mulf %482, %156 : vector<8x256xf32>
    %484 = arith.addf %483, %159 : vector<8x256xf32>
    %485 = vector.extract_strided_slice %484 {offsets = [0, 0], sizes = [8, 64], strides = [1, 1]} : vector<8x256xf32> to vector<8x64xf32>
    %486 = vector.extract_strided_slice %484 {offsets = [0, 64], sizes = [8, 64], strides = [1, 1]} : vector<8x256xf32> to vector<8x64xf32>
    %487 = vector.extract_strided_slice %484 {offsets = [0, 128], sizes = [8, 64], strides = [1, 1]} : vector<8x256xf32> to vector<8x64xf32>
    %488 = vector.extract_strided_slice %484 {offsets = [0, 192], sizes = [8, 64], strides = [1, 1]} : vector<8x256xf32> to vector<8x64xf32>
    %489 = arith.mulf %486, %468 : vector<8x64xf32>
    %490 = arith.mulf %485, %487 : vector<8x64xf32>
    %491 = arith.addf %489, %490 : vector<8x64xf32>
    %492 = math.tanh %491 : vector<8x64xf32>
    %493 = arith.mulf %488, %492 : vector<8x64xf32>
    %494 = arith.truncf %493 : vector<8x64xf32> to vector<8x64xbf16>
    %cst_267 = arith.constant dense<0.000000e+00> : vector<8x256xf32>
    %495 = tpu.matmul %494, %399, %cst_267 {dimension_numbers = #tpu.dot_dimension_numbers<[1], [0], [0], [1], [0, 0, 1, 1], [], []>} : vector<8x64xbf16>, vector<64x256xbf16>, vector<8x256xf32> -> vector<8x256xf32>
    %c32_268 = arith.constant 32 : index
    %c0_269 = arith.constant 0 : index
    %496 = vector.load %arg13[%c32_268, %c0_269] : memref<64x256xf32, #tpu.memory_space<vmem>>, vector<8x256xf32>
    %c24_270 = arith.constant 24 : index
    %c0_271 = arith.constant 0 : index
    %497 = vector.load %arg13[%c24_270, %c0_271] : memref<64x256xf32, #tpu.memory_space<vmem>>, vector<8x256xf32>
    %498 = arith.select %153, %496, %497 : vector<8x256xi1>, vector<8x256xf32>
    %499 = arith.addf %495, %498 : vector<8x256xf32>
    %500 = arith.mulf %499, %156 : vector<8x256xf32>
    %501 = arith.negf %500 : vector<8x256xf32>
    %502 = math.exp %501 : vector<8x256xf32>
    %cst_272 = arith.constant 1.000000e+00 : f32
    %503 = vector.broadcast %cst_272 : f32 to vector<8x256xf32>
    %504 = arith.addf %503, %502 : vector<8x256xf32>
    %505 = arith.divf %503, %504 : vector<8x256xf32>
    %506 = arith.mulf %505, %156 : vector<8x256xf32>
    %507 = arith.addf %506, %159 : vector<8x256xf32>
    %508 = vector.extract_strided_slice %507 {offsets = [0, 0], sizes = [8, 64], strides = [1, 1]} : vector<8x256xf32> to vector<8x64xf32>
    %509 = vector.extract_strided_slice %507 {offsets = [0, 64], sizes = [8, 64], strides = [1, 1]} : vector<8x256xf32> to vector<8x64xf32>
    %510 = vector.extract_strided_slice %507 {offsets = [0, 128], sizes = [8, 64], strides = [1, 1]} : vector<8x256xf32> to vector<8x64xf32>
    %511 = vector.extract_strided_slice %507 {offsets = [0, 192], sizes = [8, 64], strides = [1, 1]} : vector<8x256xf32> to vector<8x64xf32>
    %512 = arith.mulf %509, %491 : vector<8x64xf32>
    %513 = arith.mulf %508, %510 : vector<8x64xf32>
    %514 = arith.addf %512, %513 : vector<8x64xf32>
    %515 = math.tanh %514 : vector<8x64xf32>
    %516 = arith.mulf %511, %515 : vector<8x64xf32>
    %517 = arith.truncf %516 : vector<8x64xf32> to vector<8x64xbf16>
    %cst_273 = arith.constant dense<0.000000e+00> : vector<8x256xf32>
    %518 = tpu.matmul %517, %399, %cst_273 {dimension_numbers = #tpu.dot_dimension_numbers<[1], [0], [0], [1], [0, 0, 1, 1], [], []>} : vector<8x64xbf16>, vector<64x256xbf16>, vector<8x256xf32> -> vector<8x256xf32>
    %c40_274 = arith.constant 40 : index
    %c0_275 = arith.constant 0 : index
    %519 = vector.load %arg13[%c40_274, %c0_275] : memref<64x256xf32, #tpu.memory_space<vmem>>, vector<8x256xf32>
    %c16_276 = arith.constant 16 : index
    %c0_277 = arith.constant 0 : index
    %520 = vector.load %arg13[%c16_276, %c0_277] : memref<64x256xf32, #tpu.memory_space<vmem>>, vector<8x256xf32>
    %521 = arith.select %153, %519, %520 : vector<8x256xi1>, vector<8x256xf32>
    %522 = arith.addf %518, %521 : vector<8x256xf32>
    %523 = arith.mulf %522, %156 : vector<8x256xf32>
    %524 = arith.negf %523 : vector<8x256xf32>
    %525 = math.exp %524 : vector<8x256xf32>
    %cst_278 = arith.constant 1.000000e+00 : f32
    %526 = vector.broadcast %cst_278 : f32 to vector<8x256xf32>
    %527 = arith.addf %526, %525 : vector<8x256xf32>
    %528 = arith.divf %526, %527 : vector<8x256xf32>
    %529 = arith.mulf %528, %156 : vector<8x256xf32>
    %530 = arith.addf %529, %159 : vector<8x256xf32>
    %531 = vector.extract_strided_slice %530 {offsets = [0, 0], sizes = [8, 64], strides = [1, 1]} : vector<8x256xf32> to vector<8x64xf32>
    %532 = vector.extract_strided_slice %530 {offsets = [0, 64], sizes = [8, 64], strides = [1, 1]} : vector<8x256xf32> to vector<8x64xf32>
    %533 = vector.extract_strided_slice %530 {offsets = [0, 128], sizes = [8, 64], strides = [1, 1]} : vector<8x256xf32> to vector<8x64xf32>
    %534 = vector.extract_strided_slice %530 {offsets = [0, 192], sizes = [8, 64], strides = [1, 1]} : vector<8x256xf32> to vector<8x64xf32>
    %535 = arith.mulf %532, %514 : vector<8x64xf32>
    %536 = arith.mulf %531, %533 : vector<8x64xf32>
    %537 = arith.addf %535, %536 : vector<8x64xf32>
    %538 = math.tanh %537 : vector<8x64xf32>
    %539 = arith.mulf %534, %538 : vector<8x64xf32>
    %540 = arith.truncf %539 : vector<8x64xf32> to vector<8x64xbf16>
    %cst_279 = arith.constant dense<0.000000e+00> : vector<8x256xf32>
    %541 = tpu.matmul %540, %399, %cst_279 {dimension_numbers = #tpu.dot_dimension_numbers<[1], [0], [0], [1], [0, 0, 1, 1], [], []>} : vector<8x64xbf16>, vector<64x256xbf16>, vector<8x256xf32> -> vector<8x256xf32>
    %c48_280 = arith.constant 48 : index
    %c0_281 = arith.constant 0 : index
    %542 = vector.load %arg13[%c48_280, %c0_281] : memref<64x256xf32, #tpu.memory_space<vmem>>, vector<8x256xf32>
    %c8_282 = arith.constant 8 : index
    %c0_283 = arith.constant 0 : index
    %543 = vector.load %arg13[%c8_282, %c0_283] : memref<64x256xf32, #tpu.memory_space<vmem>>, vector<8x256xf32>
    %544 = arith.select %153, %542, %543 : vector<8x256xi1>, vector<8x256xf32>
    %545 = arith.addf %541, %544 : vector<8x256xf32>
    %546 = arith.mulf %545, %156 : vector<8x256xf32>
    %547 = arith.negf %546 : vector<8x256xf32>
    %548 = math.exp %547 : vector<8x256xf32>
    %cst_284 = arith.constant 1.000000e+00 : f32
    %549 = vector.broadcast %cst_284 : f32 to vector<8x256xf32>
    %550 = arith.addf %549, %548 : vector<8x256xf32>
    %551 = arith.divf %549, %550 : vector<8x256xf32>
    %552 = arith.mulf %551, %156 : vector<8x256xf32>
    %553 = arith.addf %552, %159 : vector<8x256xf32>
    %554 = vector.extract_strided_slice %553 {offsets = [0, 0], sizes = [8, 64], strides = [1, 1]} : vector<8x256xf32> to vector<8x64xf32>
    %555 = vector.extract_strided_slice %553 {offsets = [0, 64], sizes = [8, 64], strides = [1, 1]} : vector<8x256xf32> to vector<8x64xf32>
    %556 = vector.extract_strided_slice %553 {offsets = [0, 128], sizes = [8, 64], strides = [1, 1]} : vector<8x256xf32> to vector<8x64xf32>
    %557 = vector.extract_strided_slice %553 {offsets = [0, 192], sizes = [8, 64], strides = [1, 1]} : vector<8x256xf32> to vector<8x64xf32>
    %558 = arith.mulf %555, %537 : vector<8x64xf32>
    %559 = arith.mulf %554, %556 : vector<8x64xf32>
    %560 = arith.addf %558, %559 : vector<8x64xf32>
    %561 = math.tanh %560 : vector<8x64xf32>
    %562 = arith.mulf %557, %561 : vector<8x64xf32>
    %563 = arith.truncf %562 : vector<8x64xf32> to vector<8x64xbf16>
    %cst_285 = arith.constant dense<0.000000e+00> : vector<8x256xf32>
    %564 = tpu.matmul %563, %399, %cst_285 {dimension_numbers = #tpu.dot_dimension_numbers<[1], [0], [0], [1], [0, 0, 1, 1], [], []>} : vector<8x64xbf16>, vector<64x256xbf16>, vector<8x256xf32> -> vector<8x256xf32>
    %c56_286 = arith.constant 56 : index
    %c0_287 = arith.constant 0 : index
    %565 = vector.load %arg13[%c56_286, %c0_287] : memref<64x256xf32, #tpu.memory_space<vmem>>, vector<8x256xf32>
    %c0_288 = arith.constant 0 : index
    %c0_289 = arith.constant 0 : index
    %566 = vector.load %arg13[%c0_288, %c0_289] : memref<64x256xf32, #tpu.memory_space<vmem>>, vector<8x256xf32>
    %567 = arith.select %153, %565, %566 : vector<8x256xi1>, vector<8x256xf32>
    %568 = arith.addf %564, %567 : vector<8x256xf32>
    %569 = arith.mulf %568, %156 : vector<8x256xf32>
    %570 = arith.negf %569 : vector<8x256xf32>
    %571 = math.exp %570 : vector<8x256xf32>
    %cst_290 = arith.constant 1.000000e+00 : f32
    %572 = vector.broadcast %cst_290 : f32 to vector<8x256xf32>
    %573 = arith.addf %572, %571 : vector<8x256xf32>
    %574 = arith.divf %572, %573 : vector<8x256xf32>
    %575 = arith.mulf %574, %156 : vector<8x256xf32>
    %576 = arith.addf %575, %159 : vector<8x256xf32>
    %577 = vector.extract_strided_slice %576 {offsets = [0, 0], sizes = [8, 64], strides = [1, 1]} : vector<8x256xf32> to vector<8x64xf32>
    %578 = vector.extract_strided_slice %576 {offsets = [0, 64], sizes = [8, 64], strides = [1, 1]} : vector<8x256xf32> to vector<8x64xf32>
    %579 = vector.extract_strided_slice %576 {offsets = [0, 128], sizes = [8, 64], strides = [1, 1]} : vector<8x256xf32> to vector<8x64xf32>
    %580 = vector.extract_strided_slice %576 {offsets = [0, 192], sizes = [8, 64], strides = [1, 1]} : vector<8x256xf32> to vector<8x64xf32>
    %581 = arith.mulf %578, %560 : vector<8x64xf32>
    %582 = arith.mulf %577, %579 : vector<8x64xf32>
    %583 = arith.addf %581, %582 : vector<8x64xf32>
    %584 = math.tanh %583 : vector<8x64xf32>
    %585 = arith.mulf %580, %584 : vector<8x64xf32>
    %586 = vector.extract_strided_slice %585 {offsets = [0, 0], sizes = [8, 32], strides = [1, 1]} : vector<8x64xf32> to vector<8x32xf32>
    %c16_291 = arith.constant 16 : index
    %c0_292 = arith.constant 0 : index
    %587 = vector.load %arg15[%c16_291, %c0_292] : memref<32x32xf32, #tpu.memory_space<vmem>>, vector<8x32xf32>
    tpu.vector_store %arg15[%c16_291, %c0_292], %586 {strides = array<i32>} : memref<32x32xf32, #tpu.memory_space<vmem>>, vector<8x32xf32>,
    %588 = vector.extract_strided_slice %585 {offsets = [0, 32], sizes = [8, 32], strides = [1, 1]} : vector<8x64xf32> to vector<8x32xf32>
    %c24_293 = arith.constant 24 : index
    %c0_294 = arith.constant 0 : index
    %589 = vector.load %arg15[%c24_293, %c0_294] : memref<32x32xf32, #tpu.memory_space<vmem>>, vector<8x32xf32>
    tpu.vector_store %arg15[%c24_293, %c0_294], %588 {strides = array<i32>} : memref<32x32xf32, #tpu.memory_space<vmem>>, vector<8x32xf32>,
    %c0_295 = arith.constant 0 : index
    %c0_296 = arith.constant 0 : index
    %590 = vector.load %arg15[%c0_295, %c0_296] : memref<32x32xf32, #tpu.memory_space<vmem>>, vector<32x32xf32>
    %591 = arith.truncf %590 : vector<32x32xf32> to vector<32x32xbf16>
    %c0_297 = arith.constant 0 : index
    %c0_298 = arith.constant 0 : index
    %592 = vector.load %arg9[%c0_297, %c0_298] : memref<32x128xbf16, #tpu.memory_space<vmem>>, vector<32x128xbf16>
    %cst_299 = arith.constant dense<0.000000e+00> : vector<32x128xf32>
    %593 = tpu.matmul %591, %592, %cst_299 {dimension_numbers = #tpu.dot_dimension_numbers<[1], [0], [0], [1], [0, 0, 1, 1], [], []>} : vector<32x32xbf16>, vector<32x128xbf16>, vector<32x128xf32> -> vector<32x128xf32>
    %c0_300 = arith.constant 0 : index
    %c0_301 = arith.constant 0 : index
    %594 = vector.load %arg10[%c0_300, %c0_301] : memref<1x128xf32, #tpu.memory_space<vmem>>, vector<1x128xf32>
    %595 = vector.broadcast %594 : vector<1x128xf32> to vector<32x128xf32>
    %596 = arith.addf %593, %595 : vector<32x128xf32>
    %c0_302 = arith.constant 0 : index
    %c0_303 = arith.constant 0 : index
    %597 = vector.load %arg11[%c0_302, %c0_303] : memref<32x128xf32, #tpu.memory_space<vmem>>, vector<32x128xf32>
    tpu.vector_store %arg11[%c0_302, %c0_303], %596 {strides = array<i32>} : memref<32x128xf32, #tpu.memory_space<vmem>>, vector<32x128xf32>,
    return
  }
  func.func @transform_0(%arg0: i32, %arg1: memref<4x8xi32, #tpu.memory_space<smem>>) -> (i32, i32) {
    %c0_i32 = arith.constant 0 : i32
    %c0_i32_0 = arith.constant 0 : i32
    %c0_i32_1 = arith.constant 0 : i32
    return %c0_i32, %c0_i32_0 : i32, i32
  }
  func.func @transform_1(%arg0: i32, %arg1: memref<4x8xi32, #tpu.memory_space<smem>>) -> (i32, i32) {
    %c0_i32 = arith.constant 0 : i32
    %c0_i32_0 = arith.constant 0 : i32
    %c0_i32_1 = arith.constant 0 : i32
    return %c0_i32, %c0_i32_0 : i32, i32
  }
  func.func @transform_2(%arg0: i32, %arg1: memref<4x8xi32, #tpu.memory_space<smem>>) -> (i32, i32) {
    %c0_i32 = arith.constant 0 : i32
    %c0_i32_0 = arith.constant 0 : i32
    %c0_i32_1 = arith.constant 0 : i32
    return %c0_i32, %c0_i32_0 : i32, i32
  }
  func.func @transform_3(%arg0: i32, %arg1: memref<4x8xi32, #tpu.memory_space<smem>>) -> (i32, i32) {
    %c0_i32 = arith.constant 0 : i32
    %c0_i32_0 = arith.constant 0 : i32
    %c0_i32_1 = arith.constant 0 : i32
    return %c0_i32, %c0_i32_0 : i32, i32
  }
  func.func @transform_4(%arg0: i32, %arg1: memref<4x8xi32, #tpu.memory_space<smem>>) -> (i32, i32) {
    %c0_i32 = arith.constant 0 : i32
    %c0_i32_0 = arith.constant 0 : i32
    %c0_i32_1 = arith.constant 0 : i32
    return %c0_i32, %c0_i32_0 : i32, i32
  }
  func.func @transform_5(%arg0: i32, %arg1: memref<4x8xi32, #tpu.memory_space<smem>>) -> (i32, i32) {
    %c0_i32 = arith.constant 0 : i32
    %c0_i32_0 = arith.constant 0 : i32
    %c0_i32_1 = arith.constant 0 : i32
    return %c0_i32, %c0_i32_0 : i32, i32
  }
  func.func @transform_6(%arg0: i32, %arg1: memref<4x8xi32, #tpu.memory_space<smem>>) -> (i32, i32) {
    %c0_i32 = arith.constant 0 : i32
    %c0_i32_0 = arith.constant 0 : i32
    %c0_i32_1 = arith.constant 0 : i32
    return %c0_i32, %c0_i32_0 : i32, i32
  }
  func.func @transform_7(%arg0: i32, %arg1: memref<4x8xi32, #tpu.memory_space<smem>>) -> (i32, i32) {
    %c0_i32 = arith.constant 0 : i32
    %c0_i32_0 = arith.constant 0 : i32
    %c0_i32_1 = arith.constant 0 : i32
    return %c0_i32, %c0_i32_0 : i32, i32
  }
  func.func @transform_8(%arg0: i32, %arg1: memref<4x8xi32, #tpu.memory_space<smem>>) -> (i32, i32) {
    %c0_i32 = arith.constant 0 : i32
    %c0_i32_0 = arith.constant 0 : i32
    %c0_i32_1 = arith.constant 0 : i32
    return %c0_i32, %c0_i32_0 : i32, i32
  }
  func.func @transform_9(%arg0: i32, %arg1: memref<4x8xi32, #tpu.memory_space<smem>>) -> (i32, i32) {
    %c0_i32 = arith.constant 0 : i32
    %c0_i32_0 = arith.constant 0 : i32
    %c0_i32_1 = arith.constant 0 : i32
    return %c0_i32, %c0_i32_0 : i32, i32
  }
}

</mosaic_0001>

<llo_original>
// kernel: lstm_classifier_forward.1
$region0: #{lstm_classifier_forward.1}
  #allocation0 [shape = 'u32[]', space=smem, size = 0x4, offset = 0x4, fixed_abs, tag = 'smem constant byte address 0x4 - core index']
  #allocation1 [shape = 'u32[144,128]{1,0:T(1,128)}', space=vmem, size = 0x12000, scoped, tag = 'internal scratch']
  #allocation2 [shape = 'f32[64,64]{1,0:T(8,128)}', space=vmem, size = 0x8000, scoped, tag = 'scratch operand']
  #allocation3 [shape = 'f32[64,256]{1,0:T(8,128)}', space=vmem, size = 0x10000, scoped, tag = 'scratch operand']
  #allocation4 [shape = 'f32[64,64]{1,0:T(8,128)}', space=vmem, size = 0x8000, scoped, tag = 'scratch operand']
  #allocation5 [shape = 'f32[32,32]{1,0:T(8,128)}', space=vmem, size = 0x4000, scoped, tag = 'scratch operand']
  #allocation6 [shape = 's32[1]{0}', space=sflag, size = 0x4, scoped, tag = 'scoped memory for lstm_classifier_forward.1']
  #allocation7 [shape = 'u8[2048]{0}', space=smem, size = 0x800, scoped, tag = 'prefetched SMEM operand 0']
  %s0 = inlined_call_operand.hbm [shape: s32[4,8], index: 0, kind: input, shape index: {}]
  %s1 = inlined_call_operand.hbm [shape: f32[50,64], index: 1, kind: input, shape index: {}]
  %s2 = inlined_call_operand.hbm [shape: bf16[64,256], index: 2, kind: input, shape index: {}]
  %s3 = inlined_call_operand.hbm [shape: bf16[64,256], index: 3, kind: input, shape index: {}]
  %s4 = inlined_call_operand.hbm [shape: bf16[64,256], index: 4, kind: input, shape index: {}]
  %s5 = inlined_call_operand.hbm [shape: bf16[64,256], index: 5, kind: input, shape index: {}]
  %s6 = inlined_call_operand.vmem [shape: f32[1,256], index: 6, kind: input, shape index: {}]
  %s7 = inlined_call_operand.vmem [shape: f32[1,256], index: 7, kind: input, shape index: {}]
  %s8 = inlined_call_operand.hbm [shape: bf16[32,128], index: 8, kind: input, shape index: {}]
  %s9 = inlined_call_operand.vmem [shape: f32[1,128], index: 9, kind: input, shape index: {}]
  %s10 = inlined_call_operand.vmem [shape: f32[32,128], index: 10, kind: output, shape index: {}]
  %s11 = sld [smem:[#allocation0]]
  $region70: #{lstm_classifier_forward.1} parent=0
    _
  %s13 = ssub.s32 1, %s11
  %s14 = scalar_select 0, %s13, %s11
  %16 = dma.hbm_to_smem %s0, 64, [#allocation7], [#allocation6]
  %17 = dma.done [#allocation6], 64
  %18 = sfence
  $region1: #{lstm_classifier_forward.1} parent=0
    #allocation8 [shape = 'u8[28672]{0}', space=vmem, size = 0x7000, scoped, tag = 'input window, operand 1, single buffered']
    #allocation9 [shape = 's32[1]{0}', space=sflag, size = 0x4, scoped, tag = 'scoped memory for lstm_classifier_forward.1']
    #allocation10 [shape = 'u8[32768]{0}', space=vmem, size = 0x8000, scoped, tag = 'input window, operand 2, single buffered']
    #allocation11 [shape = 's32[1]{0}', space=sflag, size = 0x4, scoped, tag = 'scoped memory for lstm_classifier_forward.1']
    #allocation12 [shape = 'u8[32768]{0}', space=vmem, size = 0x8000, scoped, tag = 'input window, operand 3, single buffered']
    #allocation13 [shape = 'u8[32768]{0}', space=vmem, size = 0x8000, scoped, tag = 'input window, operand 4, single buffered']
    #allocation14 [shape = 's32[1]{0}', space=sflag, size = 0x4, scoped, tag = 'scoped memory for lstm_classifier_forward.1']
    #allocation15 [shape = 'u8[32768]{0}', space=vmem, size = 0x8000, scoped, tag = 'input window, operand 5, single buffered']
    #allocation16 [shape = 'u8[8192]{0}', space=vmem, size = 0x2000, scoped, tag = 'input window, operand 8, single buffered']
    #allocation17 [shape = 's32[1]{0}', space=sflag, size = 0x4, scoped, tag = 'scoped memory for lstm_classifier_forward.1']
    %19 = vsyncpa [#allocation9], 0
    %20 = vsyncpa [#allocation11], 0
    %21 = vsyncpa [#allocation14], 0
    %22 = vsyncpa [#allocation17], 0
    // Predicated region
    $region2: #{lstm_classifier_forward.1} parent=1 // pred_check
      _
    $region3: #{lstm_classifier_forward.1} parent=1 // pred_check_branch
      %24 = sbr.rel (0) target = $region5
    $region4: #{lstm_classifier_forward.1} parent=1 // pred_region
      %s26 = ssub.s32 896, 896
      %27 = vsyncadd [#allocation9], %s26
      %s28 = sshll.u32 [#allocation8], 4
      %s29 = int_to_ptr.vmem [resolvable:$true] %s28
      %34 = dma.hbm_to_vmem [thread:$0]  %s1, 896, %s29, [#allocation9], 128, 128, 8
    $region5: #{lstm_classifier_forward.1} parent=1 // pred_fallthru
      _
    // Predicated region
    $region6: #{lstm_classifier_forward.1} parent=1 // pred_check
      _
    $region7: #{lstm_classifier_forward.1} parent=1 // pred_check_branch
      %36 = sbr.rel (0) target = $region9
    $region8: #{lstm_classifier_forward.1} parent=1 // pred_region
      %s38 = ssub.s32 1024, 1024
      %39 = vsyncadd [#allocation11], %s38
      %s40 = sshll.u32 [#allocation10], 4
      %s41 = int_to_ptr.vmem [resolvable:$true] %s40
      %46 = dma.hbm_to_vmem [thread:$0]  %s2, 1024, %s41, [#allocation11], 128, 128, 8
    $region9: #{lstm_classifier_forward.1} parent=1 // pred_fallthru
      _
    // Predicated region
    $region10: #{lstm_classifier_forward.1} parent=1 // pred_check
      _
    $region11: #{lstm_classifier_forward.1} parent=1 // pred_check_branch
      %48 = sbr.rel (0) target = $region13
    $region12: #{lstm_classifier_forward.1} parent=1 // pred_region
      %s50 = ssub.s32 1024, 1024
      %51 = vsyncadd [#allocation11], %s50
      %s52 = sshll.u32 [#allocation12], 4
      %s53 = int_to_ptr.vmem [resolvable:$true] %s52
      %58 = dma.hbm_to_vmem [thread:$0]  %s3, 1024, %s53, [#allocation11], 128, 128, 8
    $region13: #{lstm_classifier_forward.1} parent=1 // pred_fallthru
      _
    // Predicated region
    $region14: #{lstm_classifier_forward.1} parent=1 // pred_check
      _
    $region15: #{lstm_classifier_forward.1} parent=1 // pred_check_branch
      %60 = sbr.rel (0) target = $region17
    $region16: #{lstm_classifier_forward.1} parent=1 // pred_region
      %s62 = ssub.s32 1024, 1024
      %63 = vsyncadd [#allocation14], %s62
      %s64 = sshll.u32 [#allocation13], 4
      %s65 = int_to_ptr.vmem [resolvable:$true] %s64
      %70 = dma.hbm_to_vmem [thread:$0]  %s4, 1024, %s65, [#allocation14], 128, 128, 8
    $region17: #{lstm_classifier_forward.1} parent=1 // pred_fallthru
      _
    // Predicated region
    $region18: #{lstm_classifier_forward.1} parent=1 // pred_check
      _
    $region19: #{lstm_classifier_forward.1} parent=1 // pred_check_branch
      %72 = sbr.rel (0) target = $region21
    $region20: #{lstm_classifier_forward.1} parent=1 // pred_region
      %s74 = ssub.s32 1024, 1024
      %75 = vsyncadd [#allocation14], %s74
      %s76 = sshll.u32 [#allocation15], 4
      %s77 = int_to_ptr.vmem [resolvable:$true] %s76
      %82 = dma.hbm_to_vmem [thread:$0]  %s5, 1024, %s77, [#allocation14], 128, 128, 8
    $region21: #{lstm_classifier_forward.1} parent=1 // pred_fallthru
      _
    // Predicated region
    $region22: #{lstm_classifier_forward.1} parent=1 // pred_check
      _
    $region23: #{lstm_classifier_forward.1} parent=1 // pred_check_branch
      %84 = sbr.rel (0) target = $region25
    $region24: #{lstm_classifier_forward.1} parent=1 // pred_region
      _
    $region25: #{lstm_classifier_forward.1} parent=1 // pred_fallthru
      _
    // Predicated region
    $region26: #{lstm_classifier_forward.1} parent=1 // pred_check
      _
    $region27: #{lstm_classifier_forward.1} parent=1 // pred_check_branch
      %86 = sbr.rel (0) target = $region29
    $region28: #{lstm_classifier_forward.1} parent=1 // pred_region
      _
    $region29: #{lstm_classifier_forward.1} parent=1 // pred_fallthru
      _
    // Predicated region
    $region30: #{lstm_classifier_forward.1} parent=1 // pred_check
      _
    $region31: #{lstm_classifier_forward.1} parent=1 // pred_check_branch
      %88 = sbr.rel (0) target = $region33
    $region32: #{lstm_classifier_forward.1} parent=1 // pred_region
      %s90 = ssub.s32 256, 256
      %91 = vsyncadd [#allocation17], %s90
      %s92 = sshll.u32 [#allocation16], 4
      %s93 = int_to_ptr.vmem [resolvable:$true] %s92
      %98 = dma.hbm_to_vmem [thread:$0]  %s8, 256, %s93, [#allocation17], 64, 64, 4
    $region33: #{lstm_classifier_forward.1} parent=1 // pred_fallthru
      _
    // Predicated region
    $region34: #{lstm_classifier_forward.1} parent=1 // pred_check
      _
    $region35: #{lstm_classifier_forward.1} parent=1 // pred_check_branch
      %100 = sbr.rel (0) target = $region37
    $region36: #{lstm_classifier_forward.1} parent=1 // pred_region
      _
    $region37: #{lstm_classifier_forward.1} parent=1 // pred_fallthru
      _
    // Predicated region
    $region38: #{lstm_classifier_forward.1} parent=1 // pred_check
      _
    $region39: #{lstm_classifier_forward.1} parent=1 // pred_check_branch
      %102 = sbr.rel (0) target = $region41
    $region40: #{lstm_classifier_forward.1} parent=1 // pred_region
      %103 = dma.done [#allocation9], 896
    $region41: #{lstm_classifier_forward.1} parent=1 // pred_fallthru
      _
    // Predicated region
    $region42: #{lstm_classifier_forward.1} parent=1 // pred_check
      _
    $region43: #{lstm_classifier_forward.1} parent=1 // pred_check_branch
      %105 = sbr.rel (0) target = $region45
    $region44: #{lstm_classifier_forward.1} parent=1 // pred_region
      %106 = dma.done [#allocation11], 1024
    $region45: #{lstm_classifier_forward.1} parent=1 // pred_fallthru
      _
    // Predicated region
    $region46: #{lstm_classifier_forward.1} parent=1 // pred_check
      _
    $region47: #{lstm_classifier_forward.1} parent=1 // pred_check_branch
      %108 = sbr.rel (0) target = $region49
    $region48: #{lstm_classifier_forward.1} parent=1 // pred_region
      %109 = dma.done [#allocation11], 1024
    $region49: #{lstm_classifier_forward.1} parent=1 // pred_fallthru
      _
    // Predicated region
    $region50: #{lstm_classifier_forward.1} parent=1 // pred_check
      _
    $region51: #{lstm_classifier_forward.1} parent=1 // pred_check_branch
      %111 = sbr.rel (0) target = $region53
    $region52: #{lstm_classifier_forward.1} parent=1 // pred_region
      %112 = dma.done [#allocation14], 1024
    $region53: #{lstm_classifier_forward.1} parent=1 // pred_fallthru
      _
    // Predicated region
    $region54: #{lstm_classifier_forward.1} parent=1 // pred_check
      _
    $region55: #{lstm_classifier_forward.1} parent=1 // pred_check_branch
      %114 = sbr.rel (0) target = $region57
    $region56: #{lstm_classifier_forward.1} parent=1 // pred_region
      %115 = dma.done [#allocation14], 1024
    $region57: #{lstm_classifier_forward.1} parent=1 // pred_fallthru
      _
    // Predicated region
    $region58: #{lstm_classifier_forward.1} parent=1 // pred_check
      _
    $region59: #{lstm_classifier_forward.1} parent=1 // pred_check_branch
      %117 = sbr.rel (0) target = $region61
    $region60: #{lstm_classifier_forward.1} parent=1 // pred_region
      %118 = dma.done [#allocation17], 256
    $region61: #{lstm_classifier_forward.1} parent=1 // pred_fallthru
      _
    %vm120 = vcmask 523264
    %121 = vst.msk [vmem:[#allocation2] sm:$0xff] %vm120, 0.0
    %122 = vst.msk [vmem:[#allocation2 + $0x8] sm:$0xff] %vm120, 0.0
    %123 = vst.msk [vmem:[#allocation2 + $0x10] sm:$0xff] %vm120, 0.0
    %124 = vst.msk [vmem:[#allocation2 + $0x18] sm:$0xff] %vm120, 0.0
    %125 = vst.msk [vmem:[#allocation2 + $0x20] sm:$0xff] %vm120, 0.0
    %126 = vst.msk [vmem:[#allocation2 + $0x28] sm:$0xff] %vm120, 0.0
    %127 = vst.msk [vmem:[#allocation2 + $0x30] sm:$0xff] %vm120, 0.0
    %128 = vst.msk [vmem:[#allocation2 + $0x38] sm:$0xff] %vm120, 0.0
    %s129 = sld [smem:[#allocation7]]
    %s130 = scalar_lea.vmem [#allocation8], %s129
    %v131 = vld [vmem:[%s130] sm:$0x1]
    %vm132 = vcmask 516096
    %133 = vst.msk [vmem:[#allocation2] sm:$0x1] %vm132, %v131
    %s134 = sld [smem:[#allocation7 + $0x80]]
    %s135 = scalar_lea.vmem [#allocation8], %s134
    %v136 = vld [vmem:[%s135] sm:$0x1]
    %137 = vst.msk [vmem:[#allocation2 + $0x1] sm:$0x1] %vm132, %v136
    %s138 = sld [smem:[#allocation7 + $0x100]]
    %s139 = scalar_lea.vmem [#allocation8], %s138
    %v140 = vld [vmem:[%s139] sm:$0x1]
    %141 = vst.msk [vmem:[#allocation2 + $0x2] sm:$0x1] %vm132, %v140
    %s142 = sld [smem:[#allocation7 + $0x180]]
    %s143 = scalar_lea.vmem [#allocation8], %s142
    %v144 = vld [vmem:[%s143] sm:$0x1]
    %145 = vst.msk [vmem:[#allocation2 + $0x3] sm:$0x1] %vm132, %v144
    %s146 = sld [smem:[#allocation7 + $0x1]]
    %s147 = scalar_lea.vmem [#allocation8], %s146
    %v148 = vld [vmem:[%s147] sm:$0x1]
    %149 = vst.msk [vmem:[#allocation2 + $0x8] sm:$0x1] %vm132, %v148
    %s150 = sld [smem:[#allocation7 + $0x81]]
    %s151 = scalar_lea.vmem [#allocation8], %s150
    %v152 = vld [vmem:[%s151] sm:$0x1]
    %153 = vst.msk [vmem:[#allocation2 + $0x9] sm:$0x1] %vm132, %v152
    %s154 = sld [smem:[#allocation7 + $0x101]]
    %s155 = scalar_lea.vmem [#allocation8], %s154
    %v156 = vld [vmem:[%s155] sm:$0x1]
    %157 = vst.msk [vmem:[#allocation2 + $0xa] sm:$0x1] %vm132, %v156
    %s158 = sld [smem:[#allocation7 + $0x181]]
    %s159 = scalar_lea.vmem [#allocation8], %s158
    %v160 = vld [vmem:[%s159] sm:$0x1]
    %161 = vst.msk [vmem:[#allocation2 + $0xb] sm:$0x1] %vm132, %v160
    %s162 = sld [smem:[#allocation7 + $0x2]]
    %s163 = scalar_lea.vmem [#allocation8], %s162
    %v164 = vld [vmem:[%s163] sm:$0x1]
    %165 = vst.msk [vmem:[#allocation2 + $0x10] sm:$0x1] %vm132, %v164
    %s166 = sld [smem:[#allocation7 + $0x82]]
    %s167 = scalar_lea.vmem [#allocation8], %s166
    %v168 = vld [vmem:[%s167] sm:$0x1]
    %169 = vst.msk [vmem:[#allocation2 + $0x11] sm:$0x1] %vm132, %v168
    %s170 = sld [smem:[#allocation7 + $0x102]]
    %s171 = scalar_lea.vmem [#allocation8], %s170
    %v172 = vld [vmem:[%s171] sm:$0x1]
    %173 = vst.msk [vmem:[#allocation2 + $0x12] sm:$0x1] %vm132, %v172
    %s174 = sld [smem:[#allocation7 + $0x182]]
    %s175 = scalar_lea.vmem [#allocation8], %s174
    %v176 = vld [vmem:[%s175] sm:$0x1]
    %177 = vst.msk [vmem:[#allocation2 + $0x13] sm:$0x1] %vm132, %v176
    %s178 = sld [smem:[#allocation7 + $0x3]]
    %s179 = scalar_lea.vmem [#allocation8], %s178
    %v180 = vld [vmem:[%s179] sm:$0x1]
    %181 = vst.msk [vmem:[#allocation2 + $0x18] sm:$0x1] %vm132, %v180
    %s182 = sld [smem:[#allocation7 + $0x83]]
    %s183 = scalar_lea.vmem [#allocation8], %s182
    %v184 = vld [vmem:[%s183] sm:$0x1]
    %185 = vst.msk [vmem:[#allocation2 + $0x19] sm:$0x1] %vm132, %v184
    %s186 = sld [smem:[#allocation7 + $0x103]]
    %s187 = scalar_lea.vmem [#allocation8], %s186
    %v188 = vld [vmem:[%s187] sm:$0x1]
    %189 = vst.msk [vmem:[#allocation2 + $0x1a] sm:$0x1] %vm132, %v188
    %s190 = sld [smem:[#allocation7 + $0x183]]
    %s191 = scalar_lea.vmem [#allocation8], %s190
    %v192 = vld [vmem:[%s191] sm:$0x1]
    %193 = vst.msk [vmem:[#allocation2 + $0x1b] sm:$0x1] %vm132, %v192
    %s194 = sld [smem:[#allocation7 + $0x4]]
    %s195 = scalar_lea.vmem [#allocation8], %s194
    %v196 = vld [vmem:[%s195] sm:$0x1]
    %197 = vst.msk [vmem:[#allocation2 + $0x20] sm:$0x1] %vm132, %v196
    %s198 = sld [smem:[#allocation7 + $0x84]]
    %s199 = scalar_lea.vmem [#allocation8], %s198
    %v200 = vld [vmem:[%s199] sm:$0x1]
    %201 = vst.msk [vmem:[#allocation2 + $0x21] sm:$0x1] %vm132, %v200
    %s202 = sld [smem:[#allocation7 + $0x104]]
    %s203 = scalar_lea.vmem [#allocation8], %s202
    %v204 = vld [vmem:[%s203] sm:$0x1]
    %205 = vst.msk [vmem:[#allocation2 + $0x22] sm:$0x1] %vm132, %v204
    %s206 = sld [smem:[#allocation7 + $0x184]]
    %s207 = scalar_lea.vmem [#allocation8], %s206
    %v208 = vld [vmem:[%s207] sm:$0x1]
    %209 = vst.msk [vmem:[#allocation2 + $0x23] sm:$0x1] %vm132, %v208
    %s210 = sld [smem:[#allocation7 + $0x5]]
    %s211 = scalar_lea.vmem [#allocation8], %s210
    %v212 = vld [vmem:[%s211] sm:$0x1]
    %213 = vst.msk [vmem:[#allocation2 + $0x28] sm:$0x1] %vm132, %v212
    %s214 = sld [smem:[#allocation7 + $0x85]]
    %s215 = scalar_lea.vmem [#allocation8], %s214
    %v216 = vld [vmem:[%s215] sm:$0x1]
    %217 = vst.msk [vmem:[#allocation2 + $0x29] sm:$0x1] %vm132, %v216
    %s218 = sld [smem:[#allocation7 + $0x105]]
    %s219 = scalar_lea.vmem [#allocation8], %s218
    %v220 = vld [vmem:[%s219] sm:$0x1]
    %221 = vst.msk [vmem:[#allocation2 + $0x2a] sm:$0x1] %vm132, %v220
    %s222 = sld [smem:[#allocation7 + $0x185]]
    %s223 = scalar_lea.vmem [#allocation8], %s222
    %v224 = vld [vmem:[%s223] sm:$0x1]
    %225 = vst.msk [vmem:[#allocation2 + $0x2b] sm:$0x1] %vm132, %v224
    %s226 = sld [smem:[#allocation7 + $0x6]]
    %s227 = scalar_lea.vmem [#allocation8], %s226
    %v228 = vld [vmem:[%s227] sm:$0x1]
    %229 = vst.msk [vmem:[#allocation2 + $0x30] sm:$0x1] %vm132, %v228
    %s230 = sld [smem:[#allocation7 + $0x86]]
    %s231 = scalar_lea.vmem [#allocation8], %s230
    %v232 = vld [vmem:[%s231] sm:$0x1]
    %233 = vst.msk [vmem:[#allocation2 + $0x31] sm:$0x1] %vm132, %v232
    %s234 = sld [smem:[#allocation7 + $0x106]]
    %s235 = scalar_lea.vmem [#allocation8], %s234
    %v236 = vld [vmem:[%s235] sm:$0x1]
    %237 = vst.msk [vmem:[#allocation2 + $0x32] sm:$0x1] %vm132, %v236
    %s238 = sld [smem:[#allocation7 + $0x186]]
    %s239 = scalar_lea.vmem [#allocation8], %s238
    %v240 = vld [vmem:[%s239] sm:$0x1]
    %241 = vst.msk [vmem:[#allocation2 + $0x33] sm:$0x1] %vm132, %v240
    %s242 = sld [smem:[#allocation7 + $0x7]]
    %s243 = scalar_lea.vmem [#allocation8], %s242
    %v244 = vld [vmem:[%s243] sm:$0x1]
    %245 = vst.msk [vmem:[#allocation2 + $0x38] sm:$0x1] %vm132, %v244
    %s246 = sld [smem:[#allocation7 + $0x87]]
    %s247 = scalar_lea.vmem [#allocation8], %s246
    %v248 = vld [vmem:[%s247] sm:$0x1]
    %249 = vst.msk [vmem:[#allocation2 + $0x39] sm:$0x1] %vm132, %v248
    %s250 = sld [smem:[#allocation7 + $0x107]]
    %s251 = scalar_lea.vmem [#allocation8], %s250
    %v252 = vld [vmem:[%s251] sm:$0x1]
    %253 = vst.msk [vmem:[#allocation2 + $0x3a] sm:$0x1] %vm132, %v252
    %s254 = sld [smem:[#allocation7 + $0x187]]
    %s255 = scalar_lea.vmem [#allocation8], %s254
    %v256 = vld [vmem:[%s255] sm:$0x1]
    %257 = vst.msk [vmem:[#allocation2 + $0x3b] sm:$0x1] %vm132, %v256
    %v258 = vlaneseq
    %v259 = vand.u32 %v258, 127
    %v260 = vadd.s32 %v259, 128
    %vm261 = vcmp.ge.s32.totalorder %v259, 128
    %vm262 = vcmp.ge.s32.totalorder %v260, 128
    %vm263 = vcmp.lt.s32.totalorder %v259, 192
    %vm264 = vcmp.lt.s32.totalorder %v260, 192
    %vm265 = vmand %vm261, %vm263
    %vm266 = vmand %vm262, %vm264
    %vm267 = vcmp.lt.s32.totalorder %v259, 0
    %v268 = vsub.s32 0, %v259
    %v269 = vsel %vm267, %v268, %v259
    %v270 = vshrl.u32 %v269, 6
    %v271 = vand.u32 %v269, 63
    %v272 = vsub.s32 0, %v271
    %v273 = vsel %vm267, %v272, %v271
    %vm274 = vcmp.lt.s32.totalorder %v260, 0
    %v275 = vsub.s32 0, %v260
    %v276 = vsel %vm274, %v275, %v260
    %v277 = vshrl.u32 %v276, 6
    %v278 = vand.u32 %v276, 63
    %v279 = vsub.s32 0, %v278
    %v280 = vsel %vm274, %v279, %v278
    %vm281 = vcmp.ne.s32.totalorder %v273, 0
    %vm282 = vcmp.ne.s32.totalorder %v280, 0
    %vm283 = vcmp.lt.s32.totalorder %v273, 0
    %vm284 = vcmp.lt.s32.totalorder %v280, 0
    %vm285 = vmand %vm283, %vm281
    %vm286 = vmand %vm284, %vm282
    %v287 = vadd.s32 %v273, 64
    %v288 = vadd.s32 %v280, 64
    %v289 = vsel %vm285, %v287, %v273
    %v290 = vsel %vm286, %v288, %v280
    %vm291 = vcmp.lt.s32.totalorder %v289, 32
    %vm292 = vcmp.lt.s32.totalorder %v290, 32
    %v293 = vsel %vm265, 2.0, 1.0
    %v294 = vsel %vm266, 2.0, 1.0
    %v295 = vsel %vm265, -1.0, 0.0
    %v296 = vsel %vm266, -1.0, 0.0
    %v297 = vld [vmem:[#allocation2] sm:$0xff]
    %v298 = vld [vmem:[#allocation2 + $0x8] sm:$0xff]
    %v299 = vld [vmem:[#allocation2 + $0x10] sm:$0xff]
    %v300 = vld [vmem:[#allocation2 + $0x18] sm:$0xff]
    %v301 = vld [vmem:[#allocation2 + $0x20] sm:$0xff]
    %v302 = vld [vmem:[#allocation2 + $0x28] sm:$0xff]
    %v303 = vld [vmem:[#allocation2 + $0x30] sm:$0xff]
    %v304 = vld [vmem:[#allocation2 + $0x38] sm:$0xff]
    %v305 = vpack.c.bf16 %v298, %v297
    %v306 = vpack.c.bf16 %v300, %v299
    %v307 = vpack.c.bf16 %v302, %v301
    %v308 = vpack.c.bf16 %v304, %v303
    %v309 = vld [vmem:[#allocation10] sm:$0xff]
    %v310 = vld [vmem:[#allocation10 + $0x8] sm:$0xff]
    %v311 = vld [vmem:[#allocation10 + $0x10] sm:$0xff]
    %v312 = vld [vmem:[#allocation10 + $0x18] sm:$0xff]
    %v313 = vld [vmem:[#allocation10 + $0x20] sm:$0xff]
    %v314 = vld [vmem:[#allocation10 + $0x28] sm:$0xff]
    %v315 = vld [vmem:[#allocation10 + $0x30] sm:$0xff]
    %v316 = vld [vmem:[#allocation10 + $0x38] sm:$0xff]
    %v317 = vld [vmem:[%s6] sm:$0x3]
    %v319 = vlaneseq
    %v320 = vshrl.u32 %v319, 7
    %v321 = vsub.s32 0, %v320
    %v322 = vrot.slane %v317, %v321
    %v323 = vlaneseq
    %v324 = vshrl.u32 %v323, 7
    %v325 = vsub.s32 1, %v324
    %v326 = vrot.slane %v317, %v325
    %v337 = vunpack.c.l.b16 %v309
    %v338 = vunpack.c.h.b16 %v309
    %v339 = vunpack.c.l.b16 %v310
    %v340 = vunpack.c.h.b16 %v310
    %v341 = vunpack.c.l.b16 %v311
    %v342 = vunpack.c.h.b16 %v311
    %v343 = vunpack.c.l.b16 %v312
    %v344 = vunpack.c.h.b16 %v312
    %v345 = vunpack.c.l.b16 %v313
    %v346 = vunpack.c.h.b16 %v313
    %v347 = vunpack.c.l.b16 %v314
    %v348 = vunpack.c.h.b16 %v314
    %v349 = vunpack.c.l.b16 %v315
    %v350 = vunpack.c.h.b16 %v315
    %v351 = vunpack.c.l.b16 %v316
    %v352 = vunpack.c.h.b16 %v316
    %v353 = vpack.c.b16 %v339, %v337
    %v354 = vpack.c.b16 %v340, %v338
    %v355 = vpack.c.b16 %v343, %v341
    %v356 = vpack.c.b16 %v344, %v342
    %v357 = vpack.c.b16 %v347, %v345
    %v358 = vpack.c.b16 %v348, %v346
    %v359 = vpack.c.b16 %v351, %v349
    %v360 = vpack.c.b16 %v352, %v350
    %v370 = vsel %vm120, %v305, 0
    %v373 = vsel %vm120, %v306, 0
    %v376 = vsel %vm120, %v307, 0
    %v379 = vsel %vm120, %v308, 0
    %381 = vmatprep.subr.bf16.mxu0 0
    %382 = vmatpush1.bf16.msra.mxu0 0
    %383 = vmatprep.subr.bf16.mxu0 0
    %384 = vmatpush1.bf16.msra.mxu0 0
    %385 = vmatprep.subr.bf16.mxu0 0
    %386 = vmatpush1.bf16.msra.mxu0 0
    %387 = vmatprep.subr.bf16.mxu0 0
    %388 = vmatpush1.bf16.msra.mxu0 0
    %389 = vmatprep.subr.bf16.mxu0 %v360
    %390 = vmatpush1.bf16.msra.mxu0 %v359
    %391 = vmatprep.subr.bf16.mxu0 %v358
    %392 = vmatpush1.bf16.msra.mxu0 %v357
    %393 = vmatprep.subr.bf16.mxu0 %v356
    %394 = vmatpush1.bf16.msra.mxu0 %v355
    %395 = vmatprep.subr.bf16.mxu0 %v354
    %396 = vmatpush1.bf16.msra.mxu0 %v353
    %397 = vmatprep.subr.bf16.mxu0 0
    %398 = vmatpush2.bf16.msra.mxu0 0
    %399 = vmatprep.subr.bf16.mxu0 0
    %400 = vmatpush2.bf16.msra.mxu0 0
    %401 = vmatprep.subr.bf16.mxu0 0
    %402 = vmatpush2.bf16.msra.mxu0 0
    %403 = vmatprep.subr.bf16.mxu0 0
    %404 = vmatpush2.bf16.msra.mxu0 0
    %405 = vmatprep.subr.bf16.mxu0 0
    %406 = vmatpush2.bf16.msra.mxu0 0
    %407 = vmatprep.subr.bf16.mxu0 0
    %408 = vmatpush2.bf16.msra.mxu0 0
    %409 = vmatprep.subr.bf16.mxu0 0
    %410 = vmatpush2.bf16.msra.mxu0 0
    %411 = vmatprep.subr.bf16.mxu0 0
    %412 = vmatpush2.bf16.msra.mxu0 0
    %413 = vmatprep.mubr.bf16.mxu0 0
    %414 = vmatmul.mubr.bf16.gmra.mxu0 %v370
    %v415 = vpop.f32.mrf.mxu0
    %v416 = vadd.f32 %v322, %v415
    %v417 = vpop.f32.mrf.mxu0
    %v418 = vadd.f32 %v326, %v417
    %v419 = vpop.f32.mrf.mxu0
    %v420 = vadd.f32 %v322, %v419
    %v421 = vpop.f32.mrf.mxu0
    %v422 = vadd.f32 %v326, %v421
    %423 = vmatprep.mubr.bf16.mxu0 0
    %424 = vmatmul.mubr.bf16.gmra.mxu0 %v373
    %v425 = vpop.f32.mrf.mxu0
    %v426 = vadd.f32 %v322, %v425
    %v427 = vpop.f32.mrf.mxu0
    %v428 = vadd.f32 %v326, %v427
    %v429 = vpop.f32.mrf.mxu0
    %v430 = vadd.f32 %v322, %v429
    %v431 = vpop.f32.mrf.mxu0
    %v432 = vadd.f32 %v326, %v431
    %433 = vmatprep.mubr.bf16.mxu0 0
    %434 = vmatmul.mubr.bf16.gmra.mxu0 %v376
    %v435 = vpop.f32.mrf.mxu0
    %v436 = vadd.f32 %v322, %v435
    %v437 = vpop.f32.mrf.mxu0
    %v438 = vadd.f32 %v326, %v437
    %v439 = vpop.f32.mrf.mxu0
    %v440 = vadd.f32 %v322, %v439
    %v441 = vpop.f32.mrf.mxu0
    %v442 = vadd.f32 %v326, %v441
    %443 = vmatprep.mubr.bf16.mxu0 0
    %444 = vmatmul.mubr.bf16.gmra.mxu0 %v379
    %v445 = vpop.f32.mrf.mxu0
    %v446 = vadd.f32 %v322, %v445
    %v447 = vpop.f32.mrf.mxu0
    %v448 = vadd.f32 %v326, %v447
    %v449 = vpop.f32.mrf.mxu0
    %v450 = vadd.f32 %v322, %v449
    %v451 = vpop.f32.mrf.mxu0
    %v452 = vadd.f32 %v326, %v451
    %453 = vdwg.mxu0
    %454 = vst [vmem:[#allocation3] sm:$0xff] %v416
    %455 = vst [vmem:[#allocation3 + $0x8] sm:$0xff] %v418
    %456 = vst [vmem:[#allocation3 + $0x10] sm:$0xff] %v420
    %457 = vst [vmem:[#allocation3 + $0x18] sm:$0xff] %v422
    %458 = vst [vmem:[#allocation3 + $0x20] sm:$0xff] %v426
    %459 = vst [vmem:[#allocation3 + $0x28] sm:$0xff] %v428
    %460 = vst [vmem:[#allocation3 + $0x30] sm:$0xff] %v430
    %461 = vst [vmem:[#allocation3 + $0x38] sm:$0xff] %v432
    %462 = vst [vmem:[#allocation3 + $0x40] sm:$0xff] %v436
    %463 = vst [vmem:[#allocation3 + $0x48] sm:$0xff] %v438
    %464 = vst [vmem:[#allocation3 + $0x50] sm:$0xff] %v440
    %465 = vst [vmem:[#allocation3 + $0x58] sm:$0xff] %v442
    %466 = vst [vmem:[#allocation3 + $0x60] sm:$0xff] %v446
    %467 = vst [vmem:[#allocation3 + $0x68] sm:$0xff] %v448
    %468 = vst [vmem:[#allocation3 + $0x70] sm:$0xff] %v450
    %469 = vst [vmem:[#allocation3 + $0x78] sm:$0xff] %v452
    %v470 = vld [vmem:[#allocation13] sm:$0xff]
    %v471 = vld [vmem:[#allocation13 + $0x8] sm:$0xff]
    %v472 = vld [vmem:[#allocation13 + $0x10] sm:$0xff]
    %v473 = vld [vmem:[#allocation13 + $0x18] sm:$0xff]
    %v474 = vld [vmem:[#allocation13 + $0x20] sm:$0xff]
    %v475 = vld [vmem:[#allocation13 + $0x28] sm:$0xff]
    %v476 = vld [vmem:[#allocation13 + $0x30] sm:$0xff]
    %v477 = vld [vmem:[#allocation13 + $0x38] sm:$0xff]
    %v478 = vld [vmem:[#allocation3] sm:$0xff]
    %v479 = vld [vmem:[#allocation3 + $0x8] sm:$0xff]
    %v480 = vld [vmem:[#allocation3 + $0x70] sm:$0xff]
    %v481 = vld [vmem:[#allocation3 + $0x78] sm:$0xff]
    %v482 = vsel %vm291, %v478, %v480
    %v483 = vsel %vm292, %v479, %v481
    %v492 = vunpack.c.l.b16 %v470
    %v493 = vunpack.c.h.b16 %v470
    %v494 = vunpack.c.l.b16 %v471
    %v495 = vunpack.c.h.b16 %v471
    %v496 = vunpack.c.l.b16 %v472
    %v497 = vunpack.c.h.b16 %v472
    %v498 = vunpack.c.l.b16 %v473
    %v499 = vunpack.c.h.b16 %v473
    %v500 = vunpack.c.l.b16 %v474
    %v501 = vunpack.c.h.b16 %v474
    %v502 = vunpack.c.l.b16 %v475
    %v503 = vunpack.c.h.b16 %v475
    %v504 = vunpack.c.l.b16 %v476
    %v505 = vunpack.c.h.b16 %v476
    %v506 = vunpack.c.l.b16 %v477
    %v507 = vunpack.c.h.b16 %v477
    %v508 = vpack.c.b16 %v494, %v492
    %v509 = vpack.c.b16 %v495, %v493
    %v510 = vpack.c.b16 %v498, %v496
    %v511 = vpack.c.b16 %v499, %v497
    %v512 = vpack.c.b16 %v502, %v500
    %v513 = vpack.c.b16 %v503, %v501
    %v514 = vpack.c.b16 %v506, %v504
    %v515 = vpack.c.b16 %v507, %v505
    %v525 = vsel %vm120, 0, 0
    %527 = vmatprep.subr.bf16.mxu0 0
    %528 = vmatpush1.bf16.msra.mxu0 0
    %529 = vmatprep.subr.bf16.mxu0 0
    %530 = vmatpush1.bf16.msra.mxu0 0
    %531 = vmatprep.subr.bf16.mxu0 0
    %532 = vmatpush1.bf16.msra.mxu0 0
    %533 = vmatprep.subr.bf16.mxu0 0
    %534 = vmatpush1.bf16.msra.mxu0 0
    %535 = vmatprep.subr.bf16.mxu0 %v515
    %536 = vmatpush1.bf16.msra.mxu0 %v514
    %537 = vmatprep.subr.bf16.mxu0 %v513
    %538 = vmatpush1.bf16.msra.mxu0 %v512
    %539 = vmatprep.subr.bf16.mxu0 %v511
    %540 = vmatpush1.bf16.msra.mxu0 %v510
    %541 = vmatprep.subr.bf16.mxu0 %v509
    %542 = vmatpush1.bf16.msra.mxu0 %v508
    %543 = vmatprep.subr.bf16.mxu0 0
    %544 = vmatpush2.bf16.msra.mxu0 0
    %545 = vmatprep.subr.bf16.mxu0 0
    %546 = vmatpush2.bf16.msra.mxu0 0
    %547 = vmatprep.subr.bf16.mxu0 0
    %548 = vmatpush2.bf16.msra.mxu0 0
    %549 = vmatprep.subr.bf16.mxu0 0
    %550 = vmatpush2.bf16.msra.mxu0 0
    %551 = vmatprep.subr.bf16.mxu0 0
    %552 = vmatpush2.bf16.msra.mxu0 0
    %553 = vmatprep.subr.bf16.mxu0 0
    %554 = vmatpush2.bf16.msra.mxu0 0
    %555 = vmatprep.subr.bf16.mxu0 0
    %556 = vmatpush2.bf16.msra.mxu0 0
    %557 = vmatprep.subr.bf16.mxu0 0
    %558 = vmatpush2.bf16.msra.mxu0 0
    %559 = vmatprep.mubr.bf16.mxu0 0
    %560 = vmatmul.mubr.bf16.gmra.mxu0 %v525
    %v561 = vpop.f32.mrf.mxu0
    %v562 = vadd.f32 %v482, %v561
    %v563 = vpop.f32.mrf.mxu0
    %v564 = vadd.f32 %v483, %v563
    %v565 = vpop.f32.mrf.mxu0
    %v566 = vpop.f32.mrf.mxu0
    %567 = vdwg.mxu0
    %v568 = vmul.f32 %v562, %v293
    %v569 = vmul.f32 %v564, %v294
    %v570 = vxor.u32 %v568, 2147483648
    %v571 = vxor.u32 %v569, 2147483648
    %v572 = vmul.f32 %v570, 1.442695
    %v573 = vpow.pop %v572
    %v574 = vmul.f32 %v571, 1.442695
    %v575 = vpow.pop %v574
    %v576 = vadd.f32 %v573, 1.0
    %v577 = vadd.f32 %v575, 1.0
    %v578 = vrcp.pop %v576
    %v579 = vmul.f32 1.0, %v578
    %v580 = vrcp.pop %v577
    %v581 = vmul.f32 1.0, %v580
    %v582 = vmul.f32 %v579, %v293
    %v583 = vmul.f32 %v581, %v294
    %v584 = vadd.f32 %v582, %v295
    %v585 = vadd.f32 %v583, %v296
    %v586 = vmul.f32 %v584, 0.0
    %v587 = vmul.f32 %v584, %v585
    %589 = vrot.lane.b32.xlu0 %v587, 64
    %v590 = vpop.permute.xlu0 %589
    %v592 = vadd.f32 %v586, %v590
    %v593 = vtanh.pop %v592
    %v594 = vmul.f32 %v585, %v593
    %596 = vrot.lane.b32.xlu0 %v594, 64
    %v597 = vpop.permute.xlu0 %596
    %vm599 = vcmask 261120
    %600 = vst.msk [vmem:[#allocation4] sm:$0xff] %vm599, %v597
    %vm601 = vcmask 523520
    %602 = vst.msk [vmem:[#allocation4 + $0x38] sm:$0xff] %vm601, %v597
    %v603 = vpack.c.bf16 %v594, %v594
    %v604 = vld [vmem:[#allocation3 + $0x10] sm:$0xff]
    %v605 = vld [vmem:[#allocation3 + $0x18] sm:$0xff]
    %v606 = vld [vmem:[#allocation3 + $0x60] sm:$0xff]
    %v607 = vld [vmem:[#allocation3 + $0x68] sm:$0xff]
    %v608 = vsel %vm291, %v604, %v606
    %v609 = vsel %vm292, %v605, %v607
    %611 = vrot.lane.b32.xlu0 %v603, 64
    %v612 = vpop.permute.xlu0 %611
    %v614 = vsel %vm120, %v612, 0
    %616 = vmatprep.subr.bf16.mxu0 0
    %617 = vmatpush1.bf16.msra.mxu0 0
    %618 = vmatprep.subr.bf16.mxu0 0
    %619 = vmatpush1.bf16.msra.mxu0 0
    %620 = vmatprep.subr.bf16.mxu0 0
    %621 = vmatpush1.bf16.msra.mxu0 0
    %622 = vmatprep.subr.bf16.mxu0 0
    %623 = vmatpush1.bf16.msra.mxu0 0
    %624 = vmatprep.subr.bf16.mxu0 %v515
    %625 = vmatpush1.bf16.msra.mxu0 %v514
    %626 = vmatprep.subr.bf16.mxu0 %v513
    %627 = vmatpush1.bf16.msra.mxu0 %v512
    %628 = vmatprep.subr.bf16.mxu0 %v511
    %629 = vmatpush1.bf16.msra.mxu0 %v510
    %630 = vmatprep.subr.bf16.mxu0 %v509
    %631 = vmatpush1.bf16.msra.mxu0 %v508
    %632 = vmatprep.subr.bf16.mxu0 0
    %633 = vmatpush2.bf16.msra.mxu0 0
    %634 = vmatprep.subr.bf16.mxu0 0
    %635 = vmatpush2.bf16.msra.mxu0 0
    %636 = vmatprep.subr.bf16.mxu0 0
    %637 = vmatpush2.bf16.msra.mxu0 0
    %638 = vmatprep.subr.bf16.mxu0 0
    %639 = vmatpush2.bf16.msra.mxu0 0
    %640 = vmatprep.subr.bf16.mxu0 0
    %641 = vmatpush2.bf16.msra.mxu0 0
    %642 = vmatprep.subr.bf16.mxu0 0
    %643 = vmatpush2.bf16.msra.mxu0 0
    %644 = vmatprep.subr.bf16.mxu0 0
    %645 = vmatpush2.bf16.msra.mxu0 0
    %646 = vmatprep.subr.bf16.mxu0 0
    %647 = vmatpush2.bf16.msra.mxu0 0
    %648 = vmatprep.mubr.bf16.mxu0 0
    %649 = vmatmul.mubr.bf16.gmra.mxu0 %v614
    %v650 = vpop.f32.mrf.mxu0
    %v651 = vadd.f32 %v608, %v650
    %v652 = vpop.f32.mrf.mxu0
    %v653 = vadd.f32 %v609, %v652
    %v654 = vpop.f32.mrf.mxu0
    %v655 = vpop.f32.mrf.mxu0
    %656 = vdwg.mxu0
    %v657 = vmul.f32 %v651, %v293
    %v658 = vmul.f32 %v653, %v294
    %v659 = vxor.u32 %v657, 2147483648
    %v660 = vxor.u32 %v658, 2147483648
    %v661 = vmul.f32 %v659, 1.442695
    %v662 = vpow.pop %v661
    %v663 = vmul.f32 %v660, 1.442695
    %v664 = vpow.pop %v663
    %v665 = vadd.f32 %v662, 1.0
    %v666 = vadd.f32 %v664, 1.0
    %v667 = vrcp.pop %v665
    %v668 = vmul.f32 1.0, %v667
    %v669 = vrcp.pop %v666
    %v670 = vmul.f32 1.0, %v669
    %v671 = vmul.f32 %v668, %v293
    %v672 = vmul.f32 %v670, %v294
    %v673 = vadd.f32 %v671, %v295
    %v674 = vadd.f32 %v672, %v296
    %v675 = vmul.f32 %v673, %v592
    %v676 = vmul.f32 %v673, %v674
    %678 = vrot.lane.b32.xlu0 %v676, 64
    %v679 = vpop.permute.xlu0 %678
    %v681 = vadd.f32 %v675, %v679
    %v682 = vtanh.pop %v681
    %v683 = vmul.f32 %v674, %v682
    %685 = vrot.lane.b32.xlu0 %v683, 64
    %v686 = vpop.permute.xlu0 %685
    %688 = vst.msk [vmem:[#allocation4 + $0x8] sm:$0xff] %vm599, %v686
    %689 = vst.msk [vmem:[#allocation4 + $0x30] sm:$0xff] %vm601, %v686
    %v690 = vpack.c.bf16 %v683, %v683
    %v691 = vld [vmem:[#allocation3 + $0x20] sm:$0xff]
    %v692 = vld [vmem:[#allocation3 + $0x28] sm:$0xff]
    %v693 = vld [vmem:[#allocation3 + $0x50] sm:$0xff]
    %v694 = vld [vmem:[#allocation3 + $0x58] sm:$0xff]
    %v695 = vsel %vm291, %v691, %v693
    %v696 = vsel %vm292, %v692, %v694
    %698 = vrot.lane.b32.xlu0 %v690, 64
    %v699 = vpop.permute.xlu0 %698
    %v701 = vsel %vm120, %v699, 0
    %703 = vmatprep.subr.bf16.mxu0 0
    %704 = vmatpush1.bf16.msra.mxu0 0
    %705 = vmatprep.subr.bf16.mxu0 0
    %706 = vmatpush1.bf16.msra.mxu0 0
    %707 = vmatprep.subr.bf16.mxu0 0
    %708 = vmatpush1.bf16.msra.mxu0 0
    %709 = vmatprep.subr.bf16.mxu0 0
    %710 = vmatpush1.bf16.msra.mxu0 0
    %711 = vmatprep.subr.bf16.mxu0 %v515
    %712 = vmatpush1.bf16.msra.mxu0 %v514
    %713 = vmatprep.subr.bf16.mxu0 %v513
    %714 = vmatpush1.bf16.msra.mxu0 %v512
    %715 = vmatprep.subr.bf16.mxu0 %v511
    %716 = vmatpush1.bf16.msra.mxu0 %v510
    %717 = vmatprep.subr.bf16.mxu0 %v509
    %718 = vmatpush1.bf16.msra.mxu0 %v508
    %719 = vmatprep.subr.bf16.mxu0 0
    %720 = vmatpush2.bf16.msra.mxu0 0
    %721 = vmatprep.subr.bf16.mxu0 0
    %722 = vmatpush2.bf16.msra.mxu0 0
    %723 = vmatprep.subr.bf16.mxu0 0
    %724 = vmatpush2.bf16.msra.mxu0 0
    %725 = vmatprep.subr.bf16.mxu0 0
    %726 = vmatpush2.bf16.msra.mxu0 0
    %727 = vmatprep.subr.bf16.mxu0 0
    %728 = vmatpush2.bf16.msra.mxu0 0
    %729 = vmatprep.subr.bf16.mxu0 0
    %730 = vmatpush2.bf16.msra.mxu0 0
    %731 = vmatprep.subr.bf16.mxu0 0
    %732 = vmatpush2.bf16.msra.mxu0 0
    %733 = vmatprep.subr.bf16.mxu0 0
    %734 = vmatpush2.bf16.msra.mxu0 0
    %735 = vmatprep.mubr.bf16.mxu0 0
    %736 = vmatmul.mubr.bf16.gmra.mxu0 %v701
    %v737 = vpop.f32.mrf.mxu0
    %v738 = vadd.f32 %v695, %v737
    %v739 = vpop.f32.mrf.mxu0
    %v740 = vadd.f32 %v696, %v739
    %v741 = vpop.f32.mrf.mxu0
    %v742 = vpop.f32.mrf.mxu0
    %743 = vdwg.mxu0
    %v744 = vmul.f32 %v738, %v293
    %v745 = vmul.f32 %v740, %v294
    %v746 = vxor.u32 %v744, 2147483648
    %v747 = vxor.u32 %v745, 2147483648
    %v748 = vmul.f32 %v746, 1.442695
    %v749 = vpow.pop %v748
    %v750 = vmul.f32 %v747, 1.442695
    %v751 = vpow.pop %v750
    %v752 = vadd.f32 %v749, 1.0
    %v753 = vadd.f32 %v751, 1.0
    %v754 = vrcp.pop %v752
    %v755 = vmul.f32 1.0, %v754
    %v756 = vrcp.pop %v753
    %v757 = vmul.f32 1.0, %v756
    %v758 = vmul.f32 %v755, %v293
    %v759 = vmul.f32 %v757, %v294
    %v760 = vadd.f32 %v758, %v295
    %v761 = vadd.f32 %v759, %v296
    %v762 = vmul.f32 %v760, %v681
    %v763 = vmul.f32 %v760, %v761
    %765 = vrot.lane.b32.xlu0 %v763, 64
    %v766 = vpop.permute.xlu0 %765
    %v768 = vadd.f32 %v762, %v766
    %v769 = vtanh.pop %v768
    %v770 = vmul.f32 %v761, %v769
    %772 = vrot.lane.b32.xlu0 %v770, 64
    %v773 = vpop.permute.xlu0 %772
    %775 = vst.msk [vmem:[#allocation4 + $0x10] sm:$0xff] %vm599, %v773
    %776 = vst.msk [vmem:[#allocation4 + $0x28] sm:$0xff] %vm601, %v773
    %v777 = vpack.c.bf16 %v770, %v770
    %v778 = vld [vmem:[#allocation3 + $0x30] sm:$0xff]
    %v779 = vld [vmem:[#allocation3 + $0x38] sm:$0xff]
    %v780 = vld [vmem:[#allocation3 + $0x40] sm:$0xff]
    %v781 = vld [vmem:[#allocation3 + $0x48] sm:$0xff]
    %v782 = vsel %vm291, %v778, %v780
    %v783 = vsel %vm292, %v779, %v781
    %785 = vrot.lane.b32.xlu0 %v777, 64
    %v786 = vpop.permute.xlu0 %785
    %v788 = vsel %vm120, %v786, 0
    %790 = vmatprep.subr.bf16.mxu0 0
    %791 = vmatpush1.bf16.msra.mxu0 0
    %792 = vmatprep.subr.bf16.mxu0 0
    %793 = vmatpush1.bf16.msra.mxu0 0
    %794 = vmatprep.subr.bf16.mxu0 0
    %795 = vmatpush1.bf16.msra.mxu0 0
    %796 = vmatprep.subr.bf16.mxu0 0
    %797 = vmatpush1.bf16.msra.mxu0 0
    %798 = vmatprep.subr.bf16.mxu0 %v515
    %799 = vmatpush1.bf16.msra.mxu0 %v514
    %800 = vmatprep.subr.bf16.mxu0 %v513
    %801 = vmatpush1.bf16.msra.mxu0 %v512
    %802 = vmatprep.subr.bf16.mxu0 %v511
    %803 = vmatpush1.bf16.msra.mxu0 %v510
    %804 = vmatprep.subr.bf16.mxu0 %v509
    %805 = vmatpush1.bf16.msra.mxu0 %v508
    %806 = vmatprep.subr.bf16.mxu0 0
    %807 = vmatpush2.bf16.msra.mxu0 0
    %808 = vmatprep.subr.bf16.mxu0 0
    %809 = vmatpush2.bf16.msra.mxu0 0
    %810 = vmatprep.subr.bf16.mxu0 0
    %811 = vmatpush2.bf16.msra.mxu0 0
    %812 = vmatprep.subr.bf16.mxu0 0
    %813 = vmatpush2.bf16.msra.mxu0 0
    %814 = vmatprep.subr.bf16.mxu0 0
    %815 = vmatpush2.bf16.msra.mxu0 0
    %816 = vmatprep.subr.bf16.mxu0 0
    %817 = vmatpush2.bf16.msra.mxu0 0
    %818 = vmatprep.subr.bf16.mxu0 0
    %819 = vmatpush2.bf16.msra.mxu0 0
    %820 = vmatprep.subr.bf16.mxu0 0
    %821 = vmatpush2.bf16.msra.mxu0 0
    %822 = vmatprep.mubr.bf16.mxu0 0
    %823 = vmatmul.mubr.bf16.gmra.mxu0 %v788
    %v824 = vpop.f32.mrf.mxu0
    %v825 = vadd.f32 %v782, %v824
    %v826 = vpop.f32.mrf.mxu0
    %v827 = vadd.f32 %v783, %v826
    %v828 = vpop.f32.mrf.mxu0
    %v829 = vpop.f32.mrf.mxu0
    %830 = vdwg.mxu0
    %v831 = vmul.f32 %v825, %v293
    %v832 = vmul.f32 %v827, %v294
    %v833 = vxor.u32 %v831, 2147483648
    %v834 = vxor.u32 %v832, 2147483648
    %v835 = vmul.f32 %v833, 1.442695
    %v836 = vpow.pop %v835
    %v837 = vmul.f32 %v834, 1.442695
    %v838 = vpow.pop %v837
    %v839 = vadd.f32 %v836, 1.0
    %v840 = vadd.f32 %v838, 1.0
    %v841 = vrcp.pop %v839
    %v842 = vmul.f32 1.0, %v841
    %v843 = vrcp.pop %v840
    %v844 = vmul.f32 1.0, %v843
    %v845 = vmul.f32 %v842, %v293
    %v846 = vmul.f32 %v844, %v294
    %v847 = vadd.f32 %v845, %v295
    %v848 = vadd.f32 %v846, %v296
    %v849 = vmul.f32 %v847, %v768
    %v850 = vmul.f32 %v847, %v848
    %852 = vrot.lane.b32.xlu0 %v850, 64
    %v853 = vpop.permute.xlu0 %852
    %v855 = vadd.f32 %v849, %v853
    %v856 = vtanh.pop %v855
    %v857 = vmul.f32 %v848, %v856
    %859 = vrot.lane.b32.xlu0 %v857, 64
    %v860 = vpop.permute.xlu0 %859
    %862 = vst.msk [vmem:[#allocation4 + $0x18] sm:$0xff] %vm599, %v860
    %863 = vst.msk [vmem:[#allocation4 + $0x20] sm:$0xff] %vm601, %v860
    %v864 = vpack.c.bf16 %v857, %v857
    %v865 = vld [vmem:[#allocation3 + $0x40] sm:$0xff]
    %v866 = vld [vmem:[#allocation3 + $0x48] sm:$0xff]
    %v867 = vld [vmem:[#allocation3 + $0x30] sm:$0xff]
    %v868 = vld [vmem:[#allocation3 + $0x38] sm:$0xff]
    %v869 = vsel %vm291, %v865, %v867
    %v870 = vsel %vm292, %v866, %v868
    %872 = vrot.lane.b32.xlu0 %v864, 64
    %v873 = vpop.permute.xlu0 %872
    %v875 = vsel %vm120, %v873, 0
    %877 = vmatprep.subr.bf16.mxu0 0
    %878 = vmatpush1.bf16.msra.mxu0 0
    %879 = vmatprep.subr.bf16.mxu0 0
    %880 = vmatpush1.bf16.msra.mxu0 0
    %881 = vmatprep.subr.bf16.mxu0 0
    %882 = vmatpush1.bf16.msra.mxu0 0
    %883 = vmatprep.subr.bf16.mxu0 0
    %884 = vmatpush1.bf16.msra.mxu0 0
    %885 = vmatprep.subr.bf16.mxu0 %v515
    %886 = vmatpush1.bf16.msra.mxu0 %v514
    %887 = vmatprep.subr.bf16.mxu0 %v513
    %888 = vmatpush1.bf16.msra.mxu0 %v512
    %889 = vmatprep.subr.bf16.mxu0 %v511
    %890 = vmatpush1.bf16.msra.mxu0 %v510
    %891 = vmatprep.subr.bf16.mxu0 %v509
    %892 = vmatpush1.bf16.msra.mxu0 %v508
    %893 = vmatprep.subr.bf16.mxu0 0
    %894 = vmatpush2.bf16.msra.mxu0 0
    %895 = vmatprep.subr.bf16.mxu0 0
    %896 = vmatpush2.bf16.msra.mxu0 0
    %897 = vmatprep.subr.bf16.mxu0 0
    %898 = vmatpush2.bf16.msra.mxu0 0
    %899 = vmatprep.subr.bf16.mxu0 0
    %900 = vmatpush2.bf16.msra.mxu0 0
    %901 = vmatprep.subr.bf16.mxu0 0
    %902 = vmatpush2.bf16.msra.mxu0 0
    %903 = vmatprep.subr.bf16.mxu0 0
    %904 = vmatpush2.bf16.msra.mxu0 0
    %905 = vmatprep.subr.bf16.mxu0 0
    %906 = vmatpush2.bf16.msra.mxu0 0
    %907 = vmatprep.subr.bf16.mxu0 0
    %908 = vmatpush2.bf16.msra.mxu0 0
    %909 = vmatprep.mubr.bf16.mxu0 0
    %910 = vmatmul.mubr.bf16.gmra.mxu0 %v875
    %v911 = vpop.f32.mrf.mxu0
    %v912 = vadd.f32 %v869, %v911
    %v913 = vpop.f32.mrf.mxu0
    %v914 = vadd.f32 %v870, %v913
    %v915 = vpop.f32.mrf.mxu0
    %v916 = vpop.f32.mrf.mxu0
    %917 = vdwg.mxu0
    %v918 = vmul.f32 %v912, %v293
    %v919 = vmul.f32 %v914, %v294
    %v920 = vxor.u32 %v918, 2147483648
    %v921 = vxor.u32 %v919, 2147483648
    %v922 = vmul.f32 %v920, 1.442695
    %v923 = vpow.pop %v922
    %v924 = vmul.f32 %v921, 1.442695
    %v925 = vpow.pop %v924
    %v926 = vadd.f32 %v923, 1.0
    %v927 = vadd.f32 %v925, 1.0
    %v928 = vrcp.pop %v926
    %v929 = vmul.f32 1.0, %v928
    %v930 = vrcp.pop %v927
    %v931 = vmul.f32 1.0, %v930
    %v932 = vmul.f32 %v929, %v293
    %v933 = vmul.f32 %v931, %v294
    %v934 = vadd.f32 %v932, %v295
    %v935 = vadd.f32 %v933, %v296
    %v936 = vmul.f32 %v934, %v855
    %v937 = vmul.f32 %v934, %v935
    %939 = vrot.lane.b32.xlu0 %v937, 64
    %v940 = vpop.permute.xlu0 %939
    %v942 = vadd.f32 %v936, %v940
    %v943 = vtanh.pop %v942
    %v944 = vmul.f32 %v935, %v943
    %946 = vrot.lane.b32.xlu0 %v944, 64
    %v947 = vpop.permute.xlu0 %946
    %949 = vst.msk [vmem:[#allocation4 + $0x20] sm:$0xff] %vm599, %v947
    %950 = vst.msk [vmem:[#allocation4 + $0x18] sm:$0xff] %vm601, %v947
    %v951 = vpack.c.bf16 %v944, %v944
    %v952 = vld [vmem:[#allocation3 + $0x50] sm:$0xff]
    %v953 = vld [vmem:[#allocation3 + $0x58] sm:$0xff]
    %v954 = vld [vmem:[#allocation3 + $0x20] sm:$0xff]
    %v955 = vld [vmem:[#allocation3 + $0x28] sm:$0xff]
    %v956 = vsel %vm291, %v952, %v954
    %v957 = vsel %vm292, %v953, %v955
    %959 = vrot.lane.b32.xlu0 %v951, 64
    %v960 = vpop.permute.xlu0 %959
    %v962 = vsel %vm120, %v960, 0
    %964 = vmatprep.subr.bf16.mxu0 0
    %965 = vmatpush1.bf16.msra.mxu0 0
    %966 = vmatprep.subr.bf16.mxu0 0
    %967 = vmatpush1.bf16.msra.mxu0 0
    %968 = vmatprep.subr.bf16.mxu0 0
    %969 = vmatpush1.bf16.msra.mxu0 0
    %970 = vmatprep.subr.bf16.mxu0 0
    %971 = vmatpush1.bf16.msra.mxu0 0
    %972 = vmatprep.subr.bf16.mxu0 %v515
    %973 = vmatpush1.bf16.msra.mxu0 %v514
    %974 = vmatprep.subr.bf16.mxu0 %v513
    %975 = vmatpush1.bf16.msra.mxu0 %v512
    %976 = vmatprep.subr.bf16.mxu0 %v511
    %977 = vmatpush1.bf16.msra.mxu0 %v510
    %978 = vmatprep.subr.bf16.mxu0 %v509
    %979 = vmatpush1.bf16.msra.mxu0 %v508
    %980 = vmatprep.subr.bf16.mxu0 0
    %981 = vmatpush2.bf16.msra.mxu0 0
    %982 = vmatprep.subr.bf16.mxu0 0
    %983 = vmatpush2.bf16.msra.mxu0 0
    %984 = vmatprep.subr.bf16.mxu0 0
    %985 = vmatpush2.bf16.msra.mxu0 0
    %986 = vmatprep.subr.bf16.mxu0 0
    %987 = vmatpush2.bf16.msra.mxu0 0
    %988 = vmatprep.subr.bf16.mxu0 0
    %989 = vmatpush2.bf16.msra.mxu0 0
    %990 = vmatprep.subr.bf16.mxu0 0
    %991 = vmatpush2.bf16.msra.mxu0 0
    %992 = vmatprep.subr.bf16.mxu0 0
    %993 = vmatpush2.bf16.msra.mxu0 0
    %994 = vmatprep.subr.bf16.mxu0 0
    %995 = vmatpush2.bf16.msra.mxu0 0
    %996 = vmatprep.mubr.bf16.mxu0 0
    %997 = vmatmul.mubr.bf16.gmra.mxu0 %v962
    %v998 = vpop.f32.mrf.mxu0
    %v999 = vadd.f32 %v956, %v998
    %v1000 = vpop.f32.mrf.mxu0
    %v1001 = vadd.f32 %v957, %v1000
    %v1002 = vpop.f32.mrf.mxu0
    %v1003 = vpop.f32.mrf.mxu0
    %1004 = vdwg.mxu0
    %v1005 = vmul.f32 %v999, %v293
    %v1006 = vmul.f32 %v1001, %v294
    %v1007 = vxor.u32 %v1005, 2147483648
    %v1008 = vxor.u32 %v1006, 2147483648
    %v1009 = vmul.f32 %v1007, 1.442695
    %v1010 = vpow.pop %v1009
    %v1011 = vmul.f32 %v1008, 1.442695
    %v1012 = vpow.pop %v1011
    %v1013 = vadd.f32 %v1010, 1.0
    %v1014 = vadd.f32 %v1012, 1.0
    %v1015 = vrcp.pop %v1013
    %v1016 = vmul.f32 1.0, %v1015
    %v1017 = vrcp.pop %v1014
    %v1018 = vmul.f32 1.0, %v1017
    %v1019 = vmul.f32 %v1016, %v293
    %v1020 = vmul.f32 %v1018, %v294
    %v1021 = vadd.f32 %v1019, %v295
    %v1022 = vadd.f32 %v1020, %v296
    %v1023 = vmul.f32 %v1021, %v942
    %v1024 = vmul.f32 %v1021, %v1022
    %1026 = vrot.lane.b32.xlu0 %v1024, 64
    %v1027 = vpop.permute.xlu0 %1026
    %v1029 = vadd.f32 %v1023, %v1027
    %v1030 = vtanh.pop %v1029
    %v1031 = vmul.f32 %v1022, %v1030
    %1033 = vrot.lane.b32.xlu0 %v1031, 64
    %v1034 = vpop.permute.xlu0 %1033
    %1036 = vst.msk [vmem:[#allocation4 + $0x28] sm:$0xff] %vm599, %v1034
    %1037 = vst.msk [vmem:[#allocation4 + $0x10] sm:$0xff] %vm601, %v1034
    %v1038 = vpack.c.bf16 %v1031, %v1031
    %v1039 = vld [vmem:[#allocation3 + $0x60] sm:$0xff]
    %v1040 = vld [vmem:[#allocation3 + $0x68] sm:$0xff]
    %v1041 = vld [vmem:[#allocation3 + $0x10] sm:$0xff]
    %v1042 = vld [vmem:[#allocation3 + $0x18] sm:$0xff]
    %v1043 = vsel %vm291, %v1039, %v1041
    %v1044 = vsel %vm292, %v1040, %v1042
    %1046 = vrot.lane.b32.xlu0 %v1038, 64
    %v1047 = vpop.permute.xlu0 %1046
    %v1049 = vsel %vm120, %v1047, 0
    %1051 = vmatprep.subr.bf16.mxu0 0
    %1052 = vmatpush1.bf16.msra.mxu0 0
    %1053 = vmatprep.subr.bf16.mxu0 0
    %1054 = vmatpush1.bf16.msra.mxu0 0
    %1055 = vmatprep.subr.bf16.mxu0 0
    %1056 = vmatpush1.bf16.msra.mxu0 0
    %1057 = vmatprep.subr.bf16.mxu0 0
    %1058 = vmatpush1.bf16.msra.mxu0 0
    %1059 = vmatprep.subr.bf16.mxu0 %v515
    %1060 = vmatpush1.bf16.msra.mxu0 %v514
    %1061 = vmatprep.subr.bf16.mxu0 %v513
    %1062 = vmatpush1.bf16.msra.mxu0 %v512
    %1063 = vmatprep.subr.bf16.mxu0 %v511
    %1064 = vmatpush1.bf16.msra.mxu0 %v510
    %1065 = vmatprep.subr.bf16.mxu0 %v509
    %1066 = vmatpush1.bf16.msra.mxu0 %v508
    %1067 = vmatprep.subr.bf16.mxu0 0
    %1068 = vmatpush2.bf16.msra.mxu0 0
    %1069 = vmatprep.subr.bf16.mxu0 0
    %1070 = vmatpush2.bf16.msra.mxu0 0
    %1071 = vmatprep.subr.bf16.mxu0 0
    %1072 = vmatpush2.bf16.msra.mxu0 0
    %1073 = vmatprep.subr.bf16.mxu0 0
    %1074 = vmatpush2.bf16.msra.mxu0 0
    %1075 = vmatprep.subr.bf16.mxu0 0
    %1076 = vmatpush2.bf16.msra.mxu0 0
    %1077 = vmatprep.subr.bf16.mxu0 0
    %1078 = vmatpush2.bf16.msra.mxu0 0
    %1079 = vmatprep.subr.bf16.mxu0 0
    %1080 = vmatpush2.bf16.msra.mxu0 0
    %1081 = vmatprep.subr.bf16.mxu0 0
    %1082 = vmatpush2.bf16.msra.mxu0 0
    %1083 = vmatprep.mubr.bf16.mxu0 0
    %1084 = vmatmul.mubr.bf16.gmra.mxu0 %v1049
    %v1085 = vpop.f32.mrf.mxu0
    %v1086 = vadd.f32 %v1043, %v1085
    %v1087 = vpop.f32.mrf.mxu0
    %v1088 = vadd.f32 %v1044, %v1087
    %v1089 = vpop.f32.mrf.mxu0
    %v1090 = vpop.f32.mrf.mxu0
    %1091 = vdwg.mxu0
    %v1092 = vmul.f32 %v1086, %v293
    %v1093 = vmul.f32 %v1088, %v294
    %v1094 = vxor.u32 %v1092, 2147483648
    %v1095 = vxor.u32 %v1093, 2147483648
    %v1096 = vmul.f32 %v1094, 1.442695
    %v1097 = vpow.pop %v1096
    %v1098 = vmul.f32 %v1095, 1.442695
    %v1099 = vpow.pop %v1098
    %v1100 = vadd.f32 %v1097, 1.0
    %v1101 = vadd.f32 %v1099, 1.0
    %v1102 = vrcp.pop %v1100
    %v1103 = vmul.f32 1.0, %v1102
    %v1104 = vrcp.pop %v1101
    %v1105 = vmul.f32 1.0, %v1104
    %v1106 = vmul.f32 %v1103, %v293
    %v1107 = vmul.f32 %v1105, %v294
    %v1108 = vadd.f32 %v1106, %v295
    %v1109 = vadd.f32 %v1107, %v296
    %v1110 = vmul.f32 %v1108, %v1029
    %v1111 = vmul.f32 %v1108, %v1109
    %1113 = vrot.lane.b32.xlu0 %v1111, 64
    %v1114 = vpop.permute.xlu0 %1113
    %v1116 = vadd.f32 %v1110, %v1114
    %v1117 = vtanh.pop %v1116
    %v1118 = vmul.f32 %v1109, %v1117
    %1120 = vrot.lane.b32.xlu0 %v1118, 64
    %v1121 = vpop.permute.xlu0 %1120
    %1123 = vst.msk [vmem:[#allocation4 + $0x30] sm:$0xff] %vm599, %v1121
    %1124 = vst.msk [vmem:[#allocation4 + $0x8] sm:$0xff] %vm601, %v1121
    %v1125 = vpack.c.bf16 %v1118, %v1118
    %v1126 = vld [vmem:[#allocation3 + $0x70] sm:$0xff]
    %v1127 = vld [vmem:[#allocation3 + $0x78] sm:$0xff]
    %v1128 = vld [vmem:[#allocation3] sm:$0xff]
    %v1129 = vld [vmem:[#allocation3 + $0x8] sm:$0xff]
    %v1130 = vsel %vm291, %v1126, %v1128
    %v1131 = vsel %vm292, %v1127, %v1129
    %1133 = vrot.lane.b32.xlu0 %v1125, 64
    %v1134 = vpop.permute.xlu0 %1133
    %v1136 = vsel %vm120, %v1134, 0
    %1138 = vmatprep.subr.bf16.mxu0 0
    %1139 = vmatpush1.bf16.msra.mxu0 0
    %1140 = vmatprep.subr.bf16.mxu0 0
    %1141 = vmatpush1.bf16.msra.mxu0 0
    %1142 = vmatprep.subr.bf16.mxu0 0
    %1143 = vmatpush1.bf16.msra.mxu0 0
    %1144 = vmatprep.subr.bf16.mxu0 0
    %1145 = vmatpush1.bf16.msra.mxu0 0
    %1146 = vmatprep.subr.bf16.mxu0 %v515
    %1147 = vmatpush1.bf16.msra.mxu0 %v514
    %1148 = vmatprep.subr.bf16.mxu0 %v513
    %1149 = vmatpush1.bf16.msra.mxu0 %v512
    %1150 = vmatprep.subr.bf16.mxu0 %v511
    %1151 = vmatpush1.bf16.msra.mxu0 %v510
    %1152 = vmatprep.subr.bf16.mxu0 %v509
    %1153 = vmatpush1.bf16.msra.mxu0 %v508
    %1154 = vmatprep.subr.bf16.mxu0 0
    %1155 = vmatpush2.bf16.msra.mxu0 0
    %1156 = vmatprep.subr.bf16.mxu0 0
    %1157 = vmatpush2.bf16.msra.mxu0 0
    %1158 = vmatprep.subr.bf16.mxu0 0
    %1159 = vmatpush2.bf16.msra.mxu0 0
    %1160 = vmatprep.subr.bf16.mxu0 0
    %1161 = vmatpush2.bf16.msra.mxu0 0
    %1162 = vmatprep.subr.bf16.mxu0 0
    %1163 = vmatpush2.bf16.msra.mxu0 0
    %1164 = vmatprep.subr.bf16.mxu0 0
    %1165 = vmatpush2.bf16.msra.mxu0 0
    %1166 = vmatprep.subr.bf16.mxu0 0
    %1167 = vmatpush2.bf16.msra.mxu0 0
    %1168 = vmatprep.subr.bf16.mxu0 0
    %1169 = vmatpush2.bf16.msra.mxu0 0
    %1170 = vmatprep.mubr.bf16.mxu0 0
    %1171 = vmatmul.mubr.bf16.gmra.mxu0 %v1136
    %v1172 = vpop.f32.mrf.mxu0
    %v1173 = vadd.f32 %v1130, %v1172
    %v1174 = vpop.f32.mrf.mxu0
    %v1175 = vadd.f32 %v1131, %v1174
    %v1176 = vpop.f32.mrf.mxu0
    %v1177 = vpop.f32.mrf.mxu0
    %1178 = vdwg.mxu0
    %v1179 = vmul.f32 %v1173, %v293
    %v1180 = vmul.f32 %v1175, %v294
    %v1181 = vxor.u32 %v1179, 2147483648
    %v1182 = vxor.u32 %v1180, 2147483648
    %v1183 = vmul.f32 %v1181, 1.442695
    %v1184 = vpow.pop %v1183
    %v1185 = vmul.f32 %v1182, 1.442695
    %v1186 = vpow.pop %v1185
    %v1187 = vadd.f32 %v1184, 1.0
    %v1188 = vadd.f32 %v1186, 1.0
    %v1189 = vrcp.pop %v1187
    %v1190 = vmul.f32 1.0, %v1189
    %v1191 = vrcp.pop %v1188
    %v1192 = vmul.f32 1.0, %v1191
    %v1193 = vmul.f32 %v1190, %v293
    %v1194 = vmul.f32 %v1192, %v294
    %v1195 = vadd.f32 %v1193, %v295
    %v1196 = vadd.f32 %v1194, %v296
    %v1197 = vmul.f32 %v1195, %v1116
    %v1198 = vmul.f32 %v1195, %v1196
    %1200 = vrot.lane.b32.xlu0 %v1198, 64
    %v1201 = vpop.permute.xlu0 %1200
    %v1203 = vadd.f32 %v1197, %v1201
    %v1204 = vtanh.pop %v1203
    %v1205 = vmul.f32 %v1196, %v1204
    %1207 = vrot.lane.b32.xlu0 %v1205, 64
    %v1208 = vpop.permute.xlu0 %1207
    %1210 = vst.msk [vmem:[#allocation4 + $0x38] sm:$0xff] %vm599, %v1208
    %1211 = vst.msk [vmem:[#allocation4] sm:$0xff] %vm601, %v1208
    %1212 = vst.msk [vmem:[#allocation5] sm:$0xff] %vm599, %v1208
    %1213 = vrot.lane.b32.xlu0 %v1205, 32
    %v1214 = vpop.permute.xlu0 %1213
    %1216 = vst.msk [vmem:[#allocation5 + $0x8] sm:$0xff] %vm599, %v1214
    %v1217 = vld [vmem:[#allocation4] sm:$0xff]
    %v1218 = vld [vmem:[#allocation4 + $0x8] sm:$0xff]
    %v1219 = vld [vmem:[#allocation4 + $0x10] sm:$0xff]
    %v1220 = vld [vmem:[#allocation4 + $0x18] sm:$0xff]
    %v1221 = vld [vmem:[#allocation4 + $0x20] sm:$0xff]
    %v1222 = vld [vmem:[#allocation4 + $0x28] sm:$0xff]
    %v1223 = vld [vmem:[#allocation4 + $0x30] sm:$0xff]
    %v1224 = vld [vmem:[#allocation4 + $0x38] sm:$0xff]
    %v1225 = vpack.c.bf16 %v1218, %v1217
    %v1226 = vpack.c.bf16 %v1220, %v1219
    %v1227 = vpack.c.bf16 %v1222, %v1221
    %v1228 = vpack.c.bf16 %v1224, %v1223
    %v1229 = vld [vmem:[#allocation12] sm:$0xff]
    %v1230 = vld [vmem:[#allocation12 + $0x8] sm:$0xff]
    %v1231 = vld [vmem:[#allocation12 + $0x10] sm:$0xff]
    %v1232 = vld [vmem:[#allocation12 + $0x18] sm:$0xff]
    %v1233 = vld [vmem:[#allocation12 + $0x20] sm:$0xff]
    %v1234 = vld [vmem:[#allocation12 + $0x28] sm:$0xff]
    %v1235 = vld [vmem:[#allocation12 + $0x30] sm:$0xff]
    %v1236 = vld [vmem:[#allocation12 + $0x38] sm:$0xff]
    %v1237 = vld [vmem:[%s7] sm:$0x3]
    %v1239 = vlaneseq
    %v1240 = vshrl.u32 %v1239, 7
    %v1241 = vsub.s32 0, %v1240
    %v1242 = vrot.slane %v1237, %v1241
    %v1243 = vlaneseq
    %v1244 = vshrl.u32 %v1243, 7
    %v1245 = vsub.s32 1, %v1244
    %v1246 = vrot.slane %v1237, %v1245
    %v1257 = vunpack.c.l.b16 %v1229
    %v1258 = vunpack.c.h.b16 %v1229
    %v1259 = vunpack.c.l.b16 %v1230
    %v1260 = vunpack.c.h.b16 %v1230
    %v1261 = vunpack.c.l.b16 %v1231
    %v1262 = vunpack.c.h.b16 %v1231
    %v1263 = vunpack.c.l.b16 %v1232
    %v1264 = vunpack.c.h.b16 %v1232
    %v1265 = vunpack.c.l.b16 %v1233
    %v1266 = vunpack.c.h.b16 %v1233
    %v1267 = vunpack.c.l.b16 %v1234
    %v1268 = vunpack.c.h.b16 %v1234
    %v1269 = vunpack.c.l.b16 %v1235
    %v1270 = vunpack.c.h.b16 %v1235
    %v1271 = vunpack.c.l.b16 %v1236
    %v1272 = vunpack.c.h.b16 %v1236
    %v1273 = vpack.c.b16 %v1259, %v1257
    %v1274 = vpack.c.b16 %v1260, %v1258
    %v1275 = vpack.c.b16 %v1263, %v1261
    %v1276 = vpack.c.b16 %v1264, %v1262
    %v1277 = vpack.c.b16 %v1267, %v1265
    %v1278 = vpack.c.b16 %v1268, %v1266
    %v1279 = vpack.c.b16 %v1271, %v1269
    %v1280 = vpack.c.b16 %v1272, %v1270
    %v1290 = vsel %vm120, %v1225, 0
    %v1293 = vsel %vm120, %v1226, 0
    %v1296 = vsel %vm120, %v1227, 0
    %v1299 = vsel %vm120, %v1228, 0
    %1301 = vmatprep.subr.bf16.mxu0 0
    %1302 = vmatpush1.bf16.msra.mxu0 0
    %1303 = vmatprep.subr.bf16.mxu0 0
    %1304 = vmatpush1.bf16.msra.mxu0 0
    %1305 = vmatprep.subr.bf16.mxu0 0
    %1306 = vmatpush1.bf16.msra.mxu0 0
    %1307 = vmatprep.subr.bf16.mxu0 0
    %1308 = vmatpush1.bf16.msra.mxu0 0
    %1309 = vmatprep.subr.bf16.mxu0 %v1280
    %1310 = vmatpush1.bf16.msra.mxu0 %v1279
    %1311 = vmatprep.subr.bf16.mxu0 %v1278
    %1312 = vmatpush1.bf16.msra.mxu0 %v1277
    %1313 = vmatprep.subr.bf16.mxu0 %v1276
    %1314 = vmatpush1.bf16.msra.mxu0 %v1275
    %1315 = vmatprep.subr.bf16.mxu0 %v1274
    %1316 = vmatpush1.bf16.msra.mxu0 %v1273
    %1317 = vmatprep.subr.bf16.mxu0 0
    %1318 = vmatpush2.bf16.msra.mxu0 0
    %1319 = vmatprep.subr.bf16.mxu0 0
    %1320 = vmatpush2.bf16.msra.mxu0 0
    %1321 = vmatprep.subr.bf16.mxu0 0
    %1322 = vmatpush2.bf16.msra.mxu0 0
    %1323 = vmatprep.subr.bf16.mxu0 0
    %1324 = vmatpush2.bf16.msra.mxu0 0
    %1325 = vmatprep.subr.bf16.mxu0 0
    %1326 = vmatpush2.bf16.msra.mxu0 0
    %1327 = vmatprep.subr.bf16.mxu0 0
    %1328 = vmatpush2.bf16.msra.mxu0 0
    %1329 = vmatprep.subr.bf16.mxu0 0
    %1330 = vmatpush2.bf16.msra.mxu0 0
    %1331 = vmatprep.subr.bf16.mxu0 0
    %1332 = vmatpush2.bf16.msra.mxu0 0
    %1333 = vmatprep.mubr.bf16.mxu0 0
    %1334 = vmatmul.mubr.bf16.gmra.mxu0 %v1290
    %v1335 = vpop.f32.mrf.mxu0
    %v1336 = vadd.f32 %v1242, %v1335
    %v1337 = vpop.f32.mrf.mxu0
    %v1338 = vadd.f32 %v1246, %v1337
    %v1339 = vpop.f32.mrf.mxu0
    %v1340 = vadd.f32 %v1242, %v1339
    %v1341 = vpop.f32.mrf.mxu0
    %v1342 = vadd.f32 %v1246, %v1341
    %1343 = vmatprep.mubr.bf16.mxu0 0
    %1344 = vmatmul.mubr.bf16.gmra.mxu0 %v1293
    %v1345 = vpop.f32.mrf.mxu0
    %v1346 = vadd.f32 %v1242, %v1345
    %v1347 = vpop.f32.mrf.mxu0
    %v1348 = vadd.f32 %v1246, %v1347
    %v1349 = vpop.f32.mrf.mxu0
    %v1350 = vadd.f32 %v1242, %v1349
    %v1351 = vpop.f32.mrf.mxu0
    %v1352 = vadd.f32 %v1246, %v1351
    %1353 = vmatprep.mubr.bf16.mxu0 0
    %1354 = vmatmul.mubr.bf16.gmra.mxu0 %v1296
    %v1355 = vpop.f32.mrf.mxu0
    %v1356 = vadd.f32 %v1242, %v1355
    %v1357 = vpop.f32.mrf.mxu0
    %v1358 = vadd.f32 %v1246, %v1357
    %v1359 = vpop.f32.mrf.mxu0
    %v1360 = vadd.f32 %v1242, %v1359
    %v1361 = vpop.f32.mrf.mxu0
    %v1362 = vadd.f32 %v1246, %v1361
    %1363 = vmatprep.mubr.bf16.mxu0 0
    %1364 = vmatmul.mubr.bf16.gmra.mxu0 %v1299
    %v1365 = vpop.f32.mrf.mxu0
    %v1366 = vadd.f32 %v1242, %v1365
    %v1367 = vpop.f32.mrf.mxu0
    %v1368 = vadd.f32 %v1246, %v1367
    %v1369 = vpop.f32.mrf.mxu0
    %v1370 = vadd.f32 %v1242, %v1369
    %v1371 = vpop.f32.mrf.mxu0
    %v1372 = vadd.f32 %v1246, %v1371
    %1373 = vdwg.mxu0
    %1374 = vst [vmem:[#allocation3] sm:$0xff] %v1336
    %1375 = vst [vmem:[#allocation3 + $0x8] sm:$0xff] %v1338
    %1376 = vst [vmem:[#allocation3 + $0x10] sm:$0xff] %v1340
    %1377 = vst [vmem:[#allocation3 + $0x18] sm:$0xff] %v1342
    %1378 = vst [vmem:[#allocation3 + $0x20] sm:$0xff] %v1346
    %1379 = vst [vmem:[#allocation3 + $0x28] sm:$0xff] %v1348
    %1380 = vst [vmem:[#allocation3 + $0x30] sm:$0xff] %v1350
    %1381 = vst [vmem:[#allocation3 + $0x38] sm:$0xff] %v1352
    %1382 = vst [vmem:[#allocation3 + $0x40] sm:$0xff] %v1356
    %1383 = vst [vmem:[#allocation3 + $0x48] sm:$0xff] %v1358
    %1384 = vst [vmem:[#allocation3 + $0x50] sm:$0xff] %v1360
    %1385 = vst [vmem:[#allocation3 + $0x58] sm:$0xff] %v1362
    %1386 = vst [vmem:[#allocation3 + $0x60] sm:$0xff] %v1366
    %1387 = vst [vmem:[#allocation3 + $0x68] sm:$0xff] %v1368
    %1388 = vst [vmem:[#allocation3 + $0x70] sm:$0xff] %v1370
    %1389 = vst [vmem:[#allocation3 + $0x78] sm:$0xff] %v1372
    %v1390 = vld [vmem:[#allocation15] sm:$0xff]
    %v1391 = vld [vmem:[#allocation15 + $0x8] sm:$0xff]
    %v1392 = vld [vmem:[#allocation15 + $0x10] sm:$0xff]
    %v1393 = vld [vmem:[#allocation15 + $0x18] sm:$0xff]
    %v1394 = vld [vmem:[#allocation15 + $0x20] sm:$0xff]
    %v1395 = vld [vmem:[#allocation15 + $0x28] sm:$0xff]
    %v1396 = vld [vmem:[#allocation15 + $0x30] sm:$0xff]
    %v1397 = vld [vmem:[#allocation15 + $0x38] sm:$0xff]
    %v1398 = vld [vmem:[#allocation3] sm:$0xff]
    %v1399 = vld [vmem:[#allocation3 + $0x8] sm:$0xff]
    %v1400 = vld [vmem:[#allocation3 + $0x70] sm:$0xff]
    %v1401 = vld [vmem:[#allocation3 + $0x78] sm:$0xff]
    %v1402 = vsel %vm291, %v1398, %v1400
    %v1403 = vsel %vm292, %v1399, %v1401
    %v1412 = vunpack.c.l.b16 %v1390
    %v1413 = vunpack.c.h.b16 %v1390
    %v1414 = vunpack.c.l.b16 %v1391
    %v1415 = vunpack.c.h.b16 %v1391
    %v1416 = vunpack.c.l.b16 %v1392
    %v1417 = vunpack.c.h.b16 %v1392
    %v1418 = vunpack.c.l.b16 %v1393
    %v1419 = vunpack.c.h.b16 %v1393
    %v1420 = vunpack.c.l.b16 %v1394
    %v1421 = vunpack.c.h.b16 %v1394
    %v1422 = vunpack.c.l.b16 %v1395
    %v1423 = vunpack.c.h.b16 %v1395
    %v1424 = vunpack.c.l.b16 %v1396
    %v1425 = vunpack.c.h.b16 %v1396
    %v1426 = vunpack.c.l.b16 %v1397
    %v1427 = vunpack.c.h.b16 %v1397
    %v1428 = vpack.c.b16 %v1414, %v1412
    %v1429 = vpack.c.b16 %v1415, %v1413
    %v1430 = vpack.c.b16 %v1418, %v1416
    %v1431 = vpack.c.b16 %v1419, %v1417
    %v1432 = vpack.c.b16 %v1422, %v1420
    %v1433 = vpack.c.b16 %v1423, %v1421
    %v1434 = vpack.c.b16 %v1426, %v1424
    %v1435 = vpack.c.b16 %v1427, %v1425
    %1444 = vmatprep.subr.bf16.mxu0 0
    %1445 = vmatpush1.bf16.msra.mxu0 0
    %1446 = vmatprep.subr.bf16.mxu0 0
    %1447 = vmatpush1.bf16.msra.mxu0 0
    %1448 = vmatprep.subr.bf16.mxu0 0
    %1449 = vmatpush1.bf16.msra.mxu0 0
    %1450 = vmatprep.subr.bf16.mxu0 0
    %1451 = vmatpush1.bf16.msra.mxu0 0
    %1452 = vmatprep.subr.bf16.mxu0 %v1435
    %1453 = vmatpush1.bf16.msra.mxu0 %v1434
    %1454 = vmatprep.subr.bf16.mxu0 %v1433
    %1455 = vmatpush1.bf16.msra.mxu0 %v1432
    %1456 = vmatprep.subr.bf16.mxu0 %v1431
    %1457 = vmatpush1.bf16.msra.mxu0 %v1430
    %1458 = vmatprep.subr.bf16.mxu0 %v1429
    %1459 = vmatpush1.bf16.msra.mxu0 %v1428
    %1460 = vmatprep.subr.bf16.mxu0 0
    %1461 = vmatpush2.bf16.msra.mxu0 0
    %1462 = vmatprep.subr.bf16.mxu0 0
    %1463 = vmatpush2.bf16.msra.mxu0 0
    %1464 = vmatprep.subr.bf16.mxu0 0
    %1465 = vmatpush2.bf16.msra.mxu0 0
    %1466 = vmatprep.subr.bf16.mxu0 0
    %1467 = vmatpush2.bf16.msra.mxu0 0
    %1468 = vmatprep.subr.bf16.mxu0 0
    %1469 = vmatpush2.bf16.msra.mxu0 0
    %1470 = vmatprep.subr.bf16.mxu0 0
    %1471 = vmatpush2.bf16.msra.mxu0 0
    %1472 = vmatprep.subr.bf16.mxu0 0
    %1473 = vmatpush2.bf16.msra.mxu0 0
    %1474 = vmatprep.subr.bf16.mxu0 0
    %1475 = vmatpush2.bf16.msra.mxu0 0
    %1476 = vmatprep.mubr.bf16.mxu0 0
    %1477 = vmatmul.mubr.bf16.gmra.mxu0 %v525
    %v1478 = vpop.f32.mrf.mxu0
    %v1479 = vadd.f32 %v1402, %v1478
    %v1480 = vpop.f32.mrf.mxu0
    %v1481 = vadd.f32 %v1403, %v1480
    %v1482 = vpop.f32.mrf.mxu0
    %v1483 = vpop.f32.mrf.mxu0
    %1484 = vdwg.mxu0
    %v1485 = vmul.f32 %v1479, %v293
    %v1486 = vmul.f32 %v1481, %v294
    %v1487 = vxor.u32 %v1485, 2147483648
    %v1488 = vxor.u32 %v1486, 2147483648
    %v1489 = vmul.f32 %v1487, 1.442695
    %v1490 = vpow.pop %v1489
    %v1491 = vmul.f32 %v1488, 1.442695
    %v1492 = vpow.pop %v1491
    %v1493 = vadd.f32 %v1490, 1.0
    %v1494 = vadd.f32 %v1492, 1.0
    %v1495 = vrcp.pop %v1493
    %v1496 = vmul.f32 1.0, %v1495
    %v1497 = vrcp.pop %v1494
    %v1498 = vmul.f32 1.0, %v1497
    %v1499 = vmul.f32 %v1496, %v293
    %v1500 = vmul.f32 %v1498, %v294
    %v1501 = vadd.f32 %v1499, %v295
    %v1502 = vadd.f32 %v1500, %v296
    %v1503 = vmul.f32 %v1501, 0.0
    %v1504 = vmul.f32 %v1501, %v1502
    %1506 = vrot.lane.b32.xlu0 %v1504, 64
    %v1507 = vpop.permute.xlu0 %1506
    %v1509 = vadd.f32 %v1503, %v1507
    %v1510 = vtanh.pop %v1509
    %v1511 = vmul.f32 %v1502, %v1510
    %v1512 = vpack.c.bf16 %v1511, %v1511
    %v1513 = vld [vmem:[#allocation3 + $0x10] sm:$0xff]
    %v1514 = vld [vmem:[#allocation3 + $0x18] sm:$0xff]
    %v1515 = vld [vmem:[#allocation3 + $0x60] sm:$0xff]
    %v1516 = vld [vmem:[#allocation3 + $0x68] sm:$0xff]
    %v1517 = vsel %vm291, %v1513, %v1515
    %v1518 = vsel %vm292, %v1514, %v1516
    %1520 = vrot.lane.b32.xlu0 %v1512, 64
    %v1521 = vpop.permute.xlu0 %1520
    %v1523 = vsel %vm120, %v1521, 0
    %1525 = vmatprep.subr.bf16.mxu0 0
    %1526 = vmatpush1.bf16.msra.mxu0 0
    %1527 = vmatprep.subr.bf16.mxu0 0
    %1528 = vmatpush1.bf16.msra.mxu0 0
    %1529 = vmatprep.subr.bf16.mxu0 0
    %1530 = vmatpush1.bf16.msra.mxu0 0
    %1531 = vmatprep.subr.bf16.mxu0 0
    %1532 = vmatpush1.bf16.msra.mxu0 0
    %1533 = vmatprep.subr.bf16.mxu0 %v1435
    %1534 = vmatpush1.bf16.msra.mxu0 %v1434
    %1535 = vmatprep.subr.bf16.mxu0 %v1433
    %1536 = vmatpush1.bf16.msra.mxu0 %v1432
    %1537 = vmatprep.subr.bf16.mxu0 %v1431
    %1538 = vmatpush1.bf16.msra.mxu0 %v1430
    %1539 = vmatprep.subr.bf16.mxu0 %v1429
    %1540 = vmatpush1.bf16.msra.mxu0 %v1428
    %1541 = vmatprep.subr.bf16.mxu0 0
    %1542 = vmatpush2.bf16.msra.mxu0 0
    %1543 = vmatprep.subr.bf16.mxu0 0
    %1544 = vmatpush2.bf16.msra.mxu0 0
    %1545 = vmatprep.subr.bf16.mxu0 0
    %1546 = vmatpush2.bf16.msra.mxu0 0
    %1547 = vmatprep.subr.bf16.mxu0 0
    %1548 = vmatpush2.bf16.msra.mxu0 0
    %1549 = vmatprep.subr.bf16.mxu0 0
    %1550 = vmatpush2.bf16.msra.mxu0 0
    %1551 = vmatprep.subr.bf16.mxu0 0
    %1552 = vmatpush2.bf16.msra.mxu0 0
    %1553 = vmatprep.subr.bf16.mxu0 0
    %1554 = vmatpush2.bf16.msra.mxu0 0
    %1555 = vmatprep.subr.bf16.mxu0 0
    %1556 = vmatpush2.bf16.msra.mxu0 0
    %1557 = vmatprep.mubr.bf16.mxu0 0
    %1558 = vmatmul.mubr.bf16.gmra.mxu0 %v1523
    %v1559 = vpop.f32.mrf.mxu0
    %v1560 = vadd.f32 %v1517, %v1559
    %v1561 = vpop.f32.mrf.mxu0
    %v1562 = vadd.f32 %v1518, %v1561
    %v1563 = vpop.f32.mrf.mxu0
    %v1564 = vpop.f32.mrf.mxu0
    %1565 = vdwg.mxu0
    %v1566 = vmul.f32 %v1560, %v293
    %v1567 = vmul.f32 %v1562, %v294
    %v1568 = vxor.u32 %v1566, 2147483648
    %v1569 = vxor.u32 %v1567, 2147483648
    %v1570 = vmul.f32 %v1568, 1.442695
    %v1571 = vpow.pop %v1570
    %v1572 = vmul.f32 %v1569, 1.442695
    %v1573 = vpow.pop %v1572
    %v1574 = vadd.f32 %v1571, 1.0
    %v1575 = vadd.f32 %v1573, 1.0
    %v1576 = vrcp.pop %v1574
    %v1577 = vmul.f32 1.0, %v1576
    %v1578 = vrcp.pop %v1575
    %v1579 = vmul.f32 1.0, %v1578
    %v1580 = vmul.f32 %v1577, %v293
    %v1581 = vmul.f32 %v1579, %v294
    %v1582 = vadd.f32 %v1580, %v295
    %v1583 = vadd.f32 %v1581, %v296
    %v1584 = vmul.f32 %v1582, %v1509
    %v1585 = vmul.f32 %v1582, %v1583
    %1587 = vrot.lane.b32.xlu0 %v1585, 64
    %v1588 = vpop.permute.xlu0 %1587
    %v1590 = vadd.f32 %v1584, %v1588
    %v1591 = vtanh.pop %v1590
    %v1592 = vmul.f32 %v1583, %v1591
    %v1593 = vpack.c.bf16 %v1592, %v1592
    %v1594 = vld [vmem:[#allocation3 + $0x20] sm:$0xff]
    %v1595 = vld [vmem:[#allocation3 + $0x28] sm:$0xff]
    %v1596 = vld [vmem:[#allocation3 + $0x50] sm:$0xff]
    %v1597 = vld [vmem:[#allocation3 + $0x58] sm:$0xff]
    %v1598 = vsel %vm291, %v1594, %v1596
    %v1599 = vsel %vm292, %v1595, %v1597
    %1601 = vrot.lane.b32.xlu0 %v1593, 64
    %v1602 = vpop.permute.xlu0 %1601
    %v1604 = vsel %vm120, %v1602, 0
    %1606 = vmatprep.subr.bf16.mxu0 0
    %1607 = vmatpush1.bf16.msra.mxu0 0
    %1608 = vmatprep.subr.bf16.mxu0 0
    %1609 = vmatpush1.bf16.msra.mxu0 0
    %1610 = vmatprep.subr.bf16.mxu0 0
    %1611 = vmatpush1.bf16.msra.mxu0 0
    %1612 = vmatprep.subr.bf16.mxu0 0
    %1613 = vmatpush1.bf16.msra.mxu0 0
    %1614 = vmatprep.subr.bf16.mxu0 %v1435
    %1615 = vmatpush1.bf16.msra.mxu0 %v1434
    %1616 = vmatprep.subr.bf16.mxu0 %v1433
    %1617 = vmatpush1.bf16.msra.mxu0 %v1432
    %1618 = vmatprep.subr.bf16.mxu0 %v1431
    %1619 = vmatpush1.bf16.msra.mxu0 %v1430
    %1620 = vmatprep.subr.bf16.mxu0 %v1429
    %1621 = vmatpush1.bf16.msra.mxu0 %v1428
    %1622 = vmatprep.subr.bf16.mxu0 0
    %1623 = vmatpush2.bf16.msra.mxu0 0
    %1624 = vmatprep.subr.bf16.mxu0 0
    %1625 = vmatpush2.bf16.msra.mxu0 0
    %1626 = vmatprep.subr.bf16.mxu0 0
    %1627 = vmatpush2.bf16.msra.mxu0 0
    %1628 = vmatprep.subr.bf16.mxu0 0
    %1629 = vmatpush2.bf16.msra.mxu0 0
    %1630 = vmatprep.subr.bf16.mxu0 0
    %1631 = vmatpush2.bf16.msra.mxu0 0
    %1632 = vmatprep.subr.bf16.mxu0 0
    %1633 = vmatpush2.bf16.msra.mxu0 0
    %1634 = vmatprep.subr.bf16.mxu0 0
    %1635 = vmatpush2.bf16.msra.mxu0 0
    %1636 = vmatprep.subr.bf16.mxu0 0
    %1637 = vmatpush2.bf16.msra.mxu0 0
    %1638 = vmatprep.mubr.bf16.mxu0 0
    %1639 = vmatmul.mubr.bf16.gmra.mxu0 %v1604
    %v1640 = vpop.f32.mrf.mxu0
    %v1641 = vadd.f32 %v1598, %v1640
    %v1642 = vpop.f32.mrf.mxu0
    %v1643 = vadd.f32 %v1599, %v1642
    %v1644 = vpop.f32.mrf.mxu0
    %v1645 = vpop.f32.mrf.mxu0
    %1646 = vdwg.mxu0
    %v1647 = vmul.f32 %v1641, %v293
    %v1648 = vmul.f32 %v1643, %v294
    %v1649 = vxor.u32 %v1647, 2147483648
    %v1650 = vxor.u32 %v1648, 2147483648
    %v1651 = vmul.f32 %v1649, 1.442695
    %v1652 = vpow.pop %v1651
    %v1653 = vmul.f32 %v1650, 1.442695
    %v1654 = vpow.pop %v1653
    %v1655 = vadd.f32 %v1652, 1.0
    %v1656 = vadd.f32 %v1654, 1.0
    %v1657 = vrcp.pop %v1655
    %v1658 = vmul.f32 1.0, %v1657
    %v1659 = vrcp.pop %v1656
    %v1660 = vmul.f32 1.0, %v1659
    %v1661 = vmul.f32 %v1658, %v293
    %v1662 = vmul.f32 %v1660, %v294
    %v1663 = vadd.f32 %v1661, %v295
    %v1664 = vadd.f32 %v1662, %v296
    %v1665 = vmul.f32 %v1663, %v1590
    %v1666 = vmul.f32 %v1663, %v1664
    %1668 = vrot.lane.b32.xlu0 %v1666, 64
    %v1669 = vpop.permute.xlu0 %1668
    %v1671 = vadd.f32 %v1665, %v1669
    %v1672 = vtanh.pop %v1671
    %v1673 = vmul.f32 %v1664, %v1672
    %v1674 = vpack.c.bf16 %v1673, %v1673
    %v1675 = vld [vmem:[#allocation3 + $0x30] sm:$0xff]
    %v1676 = vld [vmem:[#allocation3 + $0x38] sm:$0xff]
    %v1677 = vld [vmem:[#allocation3 + $0x40] sm:$0xff]
    %v1678 = vld [vmem:[#allocation3 + $0x48] sm:$0xff]
    %v1679 = vsel %vm291, %v1675, %v1677
    %v1680 = vsel %vm292, %v1676, %v1678
    %1682 = vrot.lane.b32.xlu0 %v1674, 64
    %v1683 = vpop.permute.xlu0 %1682
    %v1685 = vsel %vm120, %v1683, 0
    %1687 = vmatprep.subr.bf16.mxu0 0
    %1688 = vmatpush1.bf16.msra.mxu0 0
    %1689 = vmatprep.subr.bf16.mxu0 0
    %1690 = vmatpush1.bf16.msra.mxu0 0
    %1691 = vmatprep.subr.bf16.mxu0 0
    %1692 = vmatpush1.bf16.msra.mxu0 0
    %1693 = vmatprep.subr.bf16.mxu0 0
    %1694 = vmatpush1.bf16.msra.mxu0 0
    %1695 = vmatprep.subr.bf16.mxu0 %v1435
    %1696 = vmatpush1.bf16.msra.mxu0 %v1434
    %1697 = vmatprep.subr.bf16.mxu0 %v1433
    %1698 = vmatpush1.bf16.msra.mxu0 %v1432
    %1699 = vmatprep.subr.bf16.mxu0 %v1431
    %1700 = vmatpush1.bf16.msra.mxu0 %v1430
    %1701 = vmatprep.subr.bf16.mxu0 %v1429
    %1702 = vmatpush1.bf16.msra.mxu0 %v1428
    %1703 = vmatprep.subr.bf16.mxu0 0
    %1704 = vmatpush2.bf16.msra.mxu0 0
    %1705 = vmatprep.subr.bf16.mxu0 0
    %1706 = vmatpush2.bf16.msra.mxu0 0
    %1707 = vmatprep.subr.bf16.mxu0 0
    %1708 = vmatpush2.bf16.msra.mxu0 0
    %1709 = vmatprep.subr.bf16.mxu0 0
    %1710 = vmatpush2.bf16.msra.mxu0 0
    %1711 = vmatprep.subr.bf16.mxu0 0
    %1712 = vmatpush2.bf16.msra.mxu0 0
    %1713 = vmatprep.subr.bf16.mxu0 0
    %1714 = vmatpush2.bf16.msra.mxu0 0
    %1715 = vmatprep.subr.bf16.mxu0 0
    %1716 = vmatpush2.bf16.msra.mxu0 0
    %1717 = vmatprep.subr.bf16.mxu0 0
    %1718 = vmatpush2.bf16.msra.mxu0 0
    %1719 = vmatprep.mubr.bf16.mxu0 0
    %1720 = vmatmul.mubr.bf16.gmra.mxu0 %v1685
    %v1721 = vpop.f32.mrf.mxu0
    %v1722 = vadd.f32 %v1679, %v1721
    %v1723 = vpop.f32.mrf.mxu0
    %v1724 = vadd.f32 %v1680, %v1723
    %v1725 = vpop.f32.mrf.mxu0
    %v1726 = vpop.f32.mrf.mxu0
    %1727 = vdwg.mxu0
    %v1728 = vmul.f32 %v1722, %v293
    %v1729 = vmul.f32 %v1724, %v294
    %v1730 = vxor.u32 %v1728, 2147483648
    %v1731 = vxor.u32 %v1729, 2147483648
    %v1732 = vmul.f32 %v1730, 1.442695
    %v1733 = vpow.pop %v1732
    %v1734 = vmul.f32 %v1731, 1.442695
    %v1735 = vpow.pop %v1734
    %v1736 = vadd.f32 %v1733, 1.0
    %v1737 = vadd.f32 %v1735, 1.0
    %v1738 = vrcp.pop %v1736
    %v1739 = vmul.f32 1.0, %v1738
    %v1740 = vrcp.pop %v1737
    %v1741 = vmul.f32 1.0, %v1740
    %v1742 = vmul.f32 %v1739, %v293
    %v1743 = vmul.f32 %v1741, %v294
    %v1744 = vadd.f32 %v1742, %v295
    %v1745 = vadd.f32 %v1743, %v296
    %v1746 = vmul.f32 %v1744, %v1671
    %v1747 = vmul.f32 %v1744, %v1745
    %1749 = vrot.lane.b32.xlu0 %v1747, 64
    %v1750 = vpop.permute.xlu0 %1749
    %v1752 = vadd.f32 %v1746, %v1750
    %v1753 = vtanh.pop %v1752
    %v1754 = vmul.f32 %v1745, %v1753
    %v1755 = vpack.c.bf16 %v1754, %v1754
    %v1756 = vsel %vm291, %v1677, %v1675
    %v1757 = vsel %vm292, %v1678, %v1676
    %1759 = vrot.lane.b32.xlu0 %v1755, 64
    %v1760 = vpop.permute.xlu0 %1759
    %v1762 = vsel %vm120, %v1760, 0
    %1764 = vmatprep.subr.bf16.mxu0 0
    %1765 = vmatpush1.bf16.msra.mxu0 0
    %1766 = vmatprep.subr.bf16.mxu0 0
    %1767 = vmatpush1.bf16.msra.mxu0 0
    %1768 = vmatprep.subr.bf16.mxu0 0
    %1769 = vmatpush1.bf16.msra.mxu0 0
    %1770 = vmatprep.subr.bf16.mxu0 0
    %1771 = vmatpush1.bf16.msra.mxu0 0
    %1772 = vmatprep.subr.bf16.mxu0 %v1435
    %1773 = vmatpush1.bf16.msra.mxu0 %v1434
    %1774 = vmatprep.subr.bf16.mxu0 %v1433
    %1775 = vmatpush1.bf16.msra.mxu0 %v1432
    %1776 = vmatprep.subr.bf16.mxu0 %v1431
    %1777 = vmatpush1.bf16.msra.mxu0 %v1430
    %1778 = vmatprep.subr.bf16.mxu0 %v1429
    %1779 = vmatpush1.bf16.msra.mxu0 %v1428
    %1780 = vmatprep.subr.bf16.mxu0 0
    %1781 = vmatpush2.bf16.msra.mxu0 0
    %1782 = vmatprep.subr.bf16.mxu0 0
    %1783 = vmatpush2.bf16.msra.mxu0 0
    %1784 = vmatprep.subr.bf16.mxu0 0
    %1785 = vmatpush2.bf16.msra.mxu0 0
    %1786 = vmatprep.subr.bf16.mxu0 0
    %1787 = vmatpush2.bf16.msra.mxu0 0
    %1788 = vmatprep.subr.bf16.mxu0 0
    %1789 = vmatpush2.bf16.msra.mxu0 0
    %1790 = vmatprep.subr.bf16.mxu0 0
    %1791 = vmatpush2.bf16.msra.mxu0 0
    %1792 = vmatprep.subr.bf16.mxu0 0
    %1793 = vmatpush2.bf16.msra.mxu0 0
    %1794 = vmatprep.subr.bf16.mxu0 0
    %1795 = vmatpush2.bf16.msra.mxu0 0
    %1796 = vmatprep.mubr.bf16.mxu0 0
    %1797 = vmatmul.mubr.bf16.gmra.mxu0 %v1762
    %v1798 = vpop.f32.mrf.mxu0
    %v1799 = vadd.f32 %v1756, %v1798
    %v1800 = vpop.f32.mrf.mxu0
    %v1801 = vadd.f32 %v1757, %v1800
    %v1802 = vpop.f32.mrf.mxu0
    %v1803 = vpop.f32.mrf.mxu0
    %1804 = vdwg.mxu0
    %v1805 = vmul.f32 %v1799, %v293
    %v1806 = vmul.f32 %v1801, %v294
    %v1807 = vxor.u32 %v1805, 2147483648
    %v1808 = vxor.u32 %v1806, 2147483648
    %v1809 = vmul.f32 %v1807, 1.442695
    %v1810 = vpow.pop %v1809
    %v1811 = vmul.f32 %v1808, 1.442695
    %v1812 = vpow.pop %v1811
    %v1813 = vadd.f32 %v1810, 1.0
    %v1814 = vadd.f32 %v1812, 1.0
    %v1815 = vrcp.pop %v1813
    %v1816 = vmul.f32 1.0, %v1815
    %v1817 = vrcp.pop %v1814
    %v1818 = vmul.f32 1.0, %v1817
    %v1819 = vmul.f32 %v1816, %v293
    %v1820 = vmul.f32 %v1818, %v294
    %v1821 = vadd.f32 %v1819, %v295
    %v1822 = vadd.f32 %v1820, %v296
    %v1823 = vmul.f32 %v1821, %v1752
    %v1824 = vmul.f32 %v1821, %v1822
    %1826 = vrot.lane.b32.xlu0 %v1824, 64
    %v1827 = vpop.permute.xlu0 %1826
    %v1829 = vadd.f32 %v1823, %v1827
    %v1830 = vtanh.pop %v1829
    %v1831 = vmul.f32 %v1822, %v1830
    %v1832 = vpack.c.bf16 %v1831, %v1831
    %v1833 = vsel %vm291, %v1596, %v1594
    %v1834 = vsel %vm292, %v1597, %v1595
    %1836 = vrot.lane.b32.xlu0 %v1832, 64
    %v1837 = vpop.permute.xlu0 %1836
    %v1839 = vsel %vm120, %v1837, 0
    %1841 = vmatprep.subr.bf16.mxu0 0
    %1842 = vmatpush1.bf16.msra.mxu0 0
    %1843 = vmatprep.subr.bf16.mxu0 0
    %1844 = vmatpush1.bf16.msra.mxu0 0
    %1845 = vmatprep.subr.bf16.mxu0 0
    %1846 = vmatpush1.bf16.msra.mxu0 0
    %1847 = vmatprep.subr.bf16.mxu0 0
    %1848 = vmatpush1.bf16.msra.mxu0 0
    %1849 = vmatprep.subr.bf16.mxu0 %v1435
    %1850 = vmatpush1.bf16.msra.mxu0 %v1434
    %1851 = vmatprep.subr.bf16.mxu0 %v1433
    %1852 = vmatpush1.bf16.msra.mxu0 %v1432
    %1853 = vmatprep.subr.bf16.mxu0 %v1431
    %1854 = vmatpush1.bf16.msra.mxu0 %v1430
    %1855 = vmatprep.subr.bf16.mxu0 %v1429
    %1856 = vmatpush1.bf16.msra.mxu0 %v1428
    %1857 = vmatprep.subr.bf16.mxu0 0
    %1858 = vmatpush2.bf16.msra.mxu0 0
    %1859 = vmatprep.subr.bf16.mxu0 0
    %1860 = vmatpush2.bf16.msra.mxu0 0
    %1861 = vmatprep.subr.bf16.mxu0 0
    %1862 = vmatpush2.bf16.msra.mxu0 0
    %1863 = vmatprep.subr.bf16.mxu0 0
    %1864 = vmatpush2.bf16.msra.mxu0 0
    %1865 = vmatprep.subr.bf16.mxu0 0
    %1866 = vmatpush2.bf16.msra.mxu0 0
    %1867 = vmatprep.subr.bf16.mxu0 0
    %1868 = vmatpush2.bf16.msra.mxu0 0
    %1869 = vmatprep.subr.bf16.mxu0 0
    %1870 = vmatpush2.bf16.msra.mxu0 0
    %1871 = vmatprep.subr.bf16.mxu0 0
    %1872 = vmatpush2.bf16.msra.mxu0 0
    %1873 = vmatprep.mubr.bf16.mxu0 0
    %1874 = vmatmul.mubr.bf16.gmra.mxu0 %v1839
    %v1875 = vpop.f32.mrf.mxu0
    %v1876 = vadd.f32 %v1833, %v1875
    %v1877 = vpop.f32.mrf.mxu0
    %v1878 = vadd.f32 %v1834, %v1877
    %v1879 = vpop.f32.mrf.mxu0
    %v1880 = vpop.f32.mrf.mxu0
    %1881 = vdwg.mxu0
    %v1882 = vmul.f32 %v1876, %v293
    %v1883 = vmul.f32 %v1878, %v294
    %v1884 = vxor.u32 %v1882, 2147483648
    %v1885 = vxor.u32 %v1883, 2147483648
    %v1886 = vmul.f32 %v1884, 1.442695
    %v1887 = vpow.pop %v1886
    %v1888 = vmul.f32 %v1885, 1.442695
    %v1889 = vpow.pop %v1888
    %v1890 = vadd.f32 %v1887, 1.0
    %v1891 = vadd.f32 %v1889, 1.0
    %v1892 = vrcp.pop %v1890
    %v1893 = vmul.f32 1.0, %v1892
    %v1894 = vrcp.pop %v1891
    %v1895 = vmul.f32 1.0, %v1894
    %v1896 = vmul.f32 %v1893, %v293
    %v1897 = vmul.f32 %v1895, %v294
    %v1898 = vadd.f32 %v1896, %v295
    %v1899 = vadd.f32 %v1897, %v296
    %v1900 = vmul.f32 %v1898, %v1829
    %v1901 = vmul.f32 %v1898, %v1899
    %1903 = vrot.lane.b32.xlu0 %v1901, 64
    %v1904 = vpop.permute.xlu0 %1903
    %v1906 = vadd.f32 %v1900, %v1904
    %v1907 = vtanh.pop %v1906
    %v1908 = vmul.f32 %v1899, %v1907
    %v1909 = vpack.c.bf16 %v1908, %v1908
    %v1910 = vsel %vm291, %v1515, %v1513
    %v1911 = vsel %vm292, %v1516, %v1514
    %1913 = vrot.lane.b32.xlu0 %v1909, 64
    %v1914 = vpop.permute.xlu0 %1913
    %v1916 = vsel %vm120, %v1914, 0
    %1918 = vmatprep.subr.bf16.mxu0 0
    %1919 = vmatpush1.bf16.msra.mxu0 0
    %1920 = vmatprep.subr.bf16.mxu0 0
    %1921 = vmatpush1.bf16.msra.mxu0 0
    %1922 = vmatprep.subr.bf16.mxu0 0
    %1923 = vmatpush1.bf16.msra.mxu0 0
    %1924 = vmatprep.subr.bf16.mxu0 0
    %1925 = vmatpush1.bf16.msra.mxu0 0
    %1926 = vmatprep.subr.bf16.mxu0 %v1435
    %1927 = vmatpush1.bf16.msra.mxu0 %v1434
    %1928 = vmatprep.subr.bf16.mxu0 %v1433
    %1929 = vmatpush1.bf16.msra.mxu0 %v1432
    %1930 = vmatprep.subr.bf16.mxu0 %v1431
    %1931 = vmatpush1.bf16.msra.mxu0 %v1430
    %1932 = vmatprep.subr.bf16.mxu0 %v1429
    %1933 = vmatpush1.bf16.msra.mxu0 %v1428
    %1934 = vmatprep.subr.bf16.mxu0 0
    %1935 = vmatpush2.bf16.msra.mxu0 0
    %1936 = vmatprep.subr.bf16.mxu0 0
    %1937 = vmatpush2.bf16.msra.mxu0 0
    %1938 = vmatprep.subr.bf16.mxu0 0
    %1939 = vmatpush2.bf16.msra.mxu0 0
    %1940 = vmatprep.subr.bf16.mxu0 0
    %1941 = vmatpush2.bf16.msra.mxu0 0
    %1942 = vmatprep.subr.bf16.mxu0 0
    %1943 = vmatpush2.bf16.msra.mxu0 0
    %1944 = vmatprep.subr.bf16.mxu0 0
    %1945 = vmatpush2.bf16.msra.mxu0 0
    %1946 = vmatprep.subr.bf16.mxu0 0
    %1947 = vmatpush2.bf16.msra.mxu0 0
    %1948 = vmatprep.subr.bf16.mxu0 0
    %1949 = vmatpush2.bf16.msra.mxu0 0
    %1950 = vmatprep.mubr.bf16.mxu0 0
    %1951 = vmatmul.mubr.bf16.gmra.mxu0 %v1916
    %v1952 = vpop.f32.mrf.mxu0
    %v1953 = vadd.f32 %v1910, %v1952
    %v1954 = vpop.f32.mrf.mxu0
    %v1955 = vadd.f32 %v1911, %v1954
    %v1956 = vpop.f32.mrf.mxu0
    %v1957 = vpop.f32.mrf.mxu0
    %1958 = vdwg.mxu0
    %v1959 = vmul.f32 %v1953, %v293
    %v1960 = vmul.f32 %v1955, %v294
    %v1961 = vxor.u32 %v1959, 2147483648
    %v1962 = vxor.u32 %v1960, 2147483648
    %v1963 = vmul.f32 %v1961, 1.442695
    %v1964 = vpow.pop %v1963
    %v1965 = vmul.f32 %v1962, 1.442695
    %v1966 = vpow.pop %v1965
    %v1967 = vadd.f32 %v1964, 1.0
    %v1968 = vadd.f32 %v1966, 1.0
    %v1969 = vrcp.pop %v1967
    %v1970 = vmul.f32 1.0, %v1969
    %v1971 = vrcp.pop %v1968
    %v1972 = vmul.f32 1.0, %v1971
    %v1973 = vmul.f32 %v1970, %v293
    %v1974 = vmul.f32 %v1972, %v294
    %v1975 = vadd.f32 %v1973, %v295
    %v1976 = vadd.f32 %v1974, %v296
    %v1977 = vmul.f32 %v1975, %v1906
    %v1978 = vmul.f32 %v1975, %v1976
    %1980 = vrot.lane.b32.xlu0 %v1978, 64
    %v1981 = vpop.permute.xlu0 %1980
    %v1983 = vadd.f32 %v1977, %v1981
    %v1984 = vtanh.pop %v1983
    %v1985 = vmul.f32 %v1976, %v1984
    %v1986 = vpack.c.bf16 %v1985, %v1985
    %v1987 = vsel %vm291, %v1400, %v1398
    %v1988 = vsel %vm292, %v1401, %v1399
    %1990 = vrot.lane.b32.xlu0 %v1986, 64
    %v1991 = vpop.permute.xlu0 %1990
    %v1993 = vsel %vm120, %v1991, 0
    %1995 = vmatprep.subr.bf16.mxu0 0
    %1996 = vmatpush1.bf16.msra.mxu0 0
    %1997 = vmatprep.subr.bf16.mxu0 0
    %1998 = vmatpush1.bf16.msra.mxu0 0
    %1999 = vmatprep.subr.bf16.mxu0 0
    %2000 = vmatpush1.bf16.msra.mxu0 0
    %2001 = vmatprep.subr.bf16.mxu0 0
    %2002 = vmatpush1.bf16.msra.mxu0 0
    %2003 = vmatprep.subr.bf16.mxu0 %v1435
    %2004 = vmatpush1.bf16.msra.mxu0 %v1434
    %2005 = vmatprep.subr.bf16.mxu0 %v1433
    %2006 = vmatpush1.bf16.msra.mxu0 %v1432
    %2007 = vmatprep.subr.bf16.mxu0 %v1431
    %2008 = vmatpush1.bf16.msra.mxu0 %v1430
    %2009 = vmatprep.subr.bf16.mxu0 %v1429
    %2010 = vmatpush1.bf16.msra.mxu0 %v1428
    %2011 = vmatprep.subr.bf16.mxu0 0
    %2012 = vmatpush2.bf16.msra.mxu0 0
    %2013 = vmatprep.subr.bf16.mxu0 0
    %2014 = vmatpush2.bf16.msra.mxu0 0
    %2015 = vmatprep.subr.bf16.mxu0 0
    %2016 = vmatpush2.bf16.msra.mxu0 0
    %2017 = vmatprep.subr.bf16.mxu0 0
    %2018 = vmatpush2.bf16.msra.mxu0 0
    %2019 = vmatprep.subr.bf16.mxu0 0
    %2020 = vmatpush2.bf16.msra.mxu0 0
    %2021 = vmatprep.subr.bf16.mxu0 0
    %2022 = vmatpush2.bf16.msra.mxu0 0
    %2023 = vmatprep.subr.bf16.mxu0 0
    %2024 = vmatpush2.bf16.msra.mxu0 0
    %2025 = vmatprep.subr.bf16.mxu0 0
    %2026 = vmatpush2.bf16.msra.mxu0 0
    %2027 = vmatprep.mubr.bf16.mxu0 0
    %2028 = vmatmul.mubr.bf16.gmra.mxu0 %v1993
    %v2029 = vpop.f32.mrf.mxu0
    %v2030 = vadd.f32 %v1987, %v2029
    %v2031 = vpop.f32.mrf.mxu0
    %v2032 = vadd.f32 %v1988, %v2031
    %v2033 = vpop.f32.mrf.mxu0
    %v2034 = vpop.f32.mrf.mxu0
    %2035 = vdwg.mxu0
    %v2036 = vmul.f32 %v2030, %v293
    %v2037 = vmul.f32 %v2032, %v294
    %v2038 = vxor.u32 %v2036, 2147483648
    %v2039 = vxor.u32 %v2037, 2147483648
    %v2040 = vmul.f32 %v2038, 1.442695
    %v2041 = vpow.pop %v2040
    %v2042 = vmul.f32 %v2039, 1.442695
    %v2043 = vpow.pop %v2042
    %v2044 = vadd.f32 %v2041, 1.0
    %v2045 = vadd.f32 %v2043, 1.0
    %v2046 = vrcp.pop %v2044
    %v2047 = vmul.f32 1.0, %v2046
    %v2048 = vrcp.pop %v2045
    %v2049 = vmul.f32 1.0, %v2048
    %v2050 = vmul.f32 %v2047, %v293
    %v2051 = vmul.f32 %v2049, %v294
    %v2052 = vadd.f32 %v2050, %v295
    %v2053 = vadd.f32 %v2051, %v296
    %v2054 = vmul.f32 %v2052, %v1983
    %v2055 = vmul.f32 %v2052, %v2053
    %2057 = vrot.lane.b32.xlu0 %v2055, 64
    %v2058 = vpop.permute.xlu0 %2057
    %v2060 = vadd.f32 %v2054, %v2058
    %v2061 = vtanh.pop %v2060
    %v2062 = vmul.f32 %v2053, %v2061
    %2064 = vrot.lane.b32.xlu0 %v2062, 64
    %v2065 = vpop.permute.xlu0 %2064
    %2067 = vst.msk [vmem:[#allocation5 + $0x10] sm:$0xff] %vm599, %v2065
    %2068 = vrot.lane.b32.xlu0 %v2062, 32
    %v2069 = vpop.permute.xlu0 %2068
    %2071 = vst.msk [vmem:[#allocation5 + $0x18] sm:$0xff] %vm599, %v2069
    %v2072 = vld [vmem:[#allocation5] sm:$0xff]
    %v2073 = vld [vmem:[#allocation5 + $0x8] sm:$0xff]
    %v2074 = vld [vmem:[#allocation5 + $0x10] sm:$0xff]
    %v2075 = vld [vmem:[#allocation5 + $0x18] sm:$0xff]
    %v2076 = vpack.c.bf16 %v2073, %v2072
    %v2077 = vpack.c.bf16 %v2075, %v2074
    %v2078 = vld [vmem:[#allocation16] sm:$0xf]
    %v2079 = vld [vmem:[#allocation16 + $0x4] sm:$0xf]
    %v2080 = vld [vmem:[#allocation16 + $0x8] sm:$0xf]
    %v2081 = vld [vmem:[#allocation16 + $0xc] sm:$0xf]
    %v2082 = vld [vmem:[%s9] sm:$0x1]
    %v2084 = vlaneseq
    %v2085 = vshrl.u32 %v2084, 7
    %v2086 = vsub.s32 0, %v2085
    %v2087 = vrot.slane %v2082, %v2086
    %v2093 = vunpack.c.l.b16 %v2078
    %v2094 = vunpack.c.l.b16 %v2079
    %v2095 = vunpack.c.l.b16 %v2080
    %v2096 = vunpack.c.l.b16 %v2081
    %v2097 = vpack.c.b16 %v2094, %v2093
    %v2098 = vpack.c.b16 %v2096, %v2095
    %v2102 = vsel %vm599, %v2076, 0
    %v2105 = vsel %vm599, %v2077, 0
    %2107 = vmatprep.subr.bf16.mxu0 0
    %2108 = vmatpush1.bf16.msra.mxu0 0
    %2109 = vmatprep.subr.bf16.mxu0 0
    %2110 = vmatpush1.bf16.msra.mxu0 0
    %2111 = vmatprep.subr.bf16.mxu0 0
    %2112 = vmatpush1.bf16.msra.mxu0 0
    %2113 = vmatprep.subr.bf16.mxu0 0
    %2114 = vmatpush1.bf16.msra.mxu0 0
    %2115 = vmatprep.subr.bf16.mxu0 0
    %2116 = vmatpush1.bf16.msra.mxu0 0
    %2117 = vmatprep.subr.bf16.mxu0 0
    %2118 = vmatpush1.bf16.msra.mxu0 0
    %2119 = vmatprep.subr.bf16.mxu0 0
    %2120 = vmatpush1.bf16.msra.mxu0 %v2098
    %2121 = vmatprep.subr.bf16.mxu0 0
    %2122 = vmatpush1.bf16.msra.mxu0 %v2097
    %2123 = vmatprep.subr.bf16.mxu0 0
    %2124 = vmatpush2.bf16.msra.mxu0 0
    %2125 = vmatprep.subr.bf16.mxu0 0
    %2126 = vmatpush2.bf16.msra.mxu0 0
    %2127 = vmatprep.subr.bf16.mxu0 0
    %2128 = vmatpush2.bf16.msra.mxu0 0
    %2129 = vmatprep.subr.bf16.mxu0 0
    %2130 = vmatpush2.bf16.msra.mxu0 0
    %2131 = vmatprep.subr.bf16.mxu0 0
    %2132 = vmatpush2.bf16.msra.mxu0 0
    %2133 = vmatprep.subr.bf16.mxu0 0
    %2134 = vmatpush2.bf16.msra.mxu0 0
    %2135 = vmatprep.subr.bf16.mxu0 0
    %2136 = vmatpush2.bf16.msra.mxu0 0
    %2137 = vmatprep.subr.bf16.mxu0 0
    %2138 = vmatpush2.bf16.msra.mxu0 0
    %2139 = vmatprep.mubr.bf16.mxu0 0
    %2140 = vmatmul.mubr.bf16.gmra.mxu0 %v2102
    %v2141 = vpop.f32.mrf.mxu0
    %v2142 = vadd.f32 %v2087, %v2141
    %v2143 = vpop.f32.mrf.mxu0
    %v2144 = vpop.f32.mrf.mxu0
    %v2145 = vadd.f32 %v2087, %v2144
    %v2146 = vpop.f32.mrf.mxu0
    %2147 = vmatprep.mubr.bf16.mxu0 0
    %2148 = vmatmul.mubr.bf16.gmra.mxu0 %v2105
    %v2149 = vpop.f32.mrf.mxu0
    %v2150 = vadd.f32 %v2087, %v2149
    %v2151 = vpop.f32.mrf.mxu0
    %v2152 = vpop.f32.mrf.mxu0
    %v2153 = vadd.f32 %v2087, %v2152
    %v2154 = vpop.f32.mrf.mxu0
    %2155 = vdwg.mxu0
    %2156 = vst [vmem:[%s10] sm:$0xff] %v2142
    %2157 = vst [vmem:[%s10 + $0x8] sm:$0xff] %v2145
    %2158 = vst [vmem:[%s10 + $0x10] sm:$0xff] %v2150
    %2159 = vst [vmem:[%s10 + $0x18] sm:$0xff] %v2153
    // Predicated region
    $region62: #{lstm_classifier_forward.1} parent=1 // pred_check
      _
    $region63: #{lstm_classifier_forward.1} parent=1 // pred_check_branch
      %2161 = sbr.rel (0) target = $region65
    $region64: #{lstm_classifier_forward.1} parent=1 // pred_region
      _
    $region65: #{lstm_classifier_forward.1} parent=1 // pred_fallthru
      _
    // Predicated region
    $region66: #{lstm_classifier_forward.1} parent=1 // pred_check
      _
    $region67: #{lstm_classifier_forward.1} parent=1 // pred_check_branch
      %2163 = sbr.rel (0) target = $region69
    $region68: #{lstm_classifier_forward.1} parent=1 // pred_region
      _
    $region69: #{lstm_classifier_forward.1} parent=1 // pred_fallthru
      _
    %2164 = vsyncpa [#allocation9], 1
    %2165 = vsyncpa [#allocation11], 1
    %2166 = vsyncpa [#allocation14], 1
    %2167 = vsyncpa [#allocation17], 1

</llo_original>
